<compile_context>
chip_gen: v7x
topology: tpu7x:2x2x1
jax: 0.10.0
libtpu: 0.0.40
codegen_flags: <defaults>
</compile_context>

<pallas_src>
import functools
import math

import jax
import jax.numpy as jnp
from jax import lax
from jax.experimental import pallas as pl
from jax.experimental.pallas import tpu as pltpu


# ---------------------------------------------------------------------------
# Small, self-consistent config (scaled-down GPT-2, lane-dense shapes)
# ---------------------------------------------------------------------------
VOCAB_SIZE = 128     # multiple of 128 -> lane-dense logits.
BLOCK_SIZE = 32
N_LAYER = 2
N_HEAD = 4
N_EMBD = 128         # padded to a full 128-lane vreg width (per perf review)
BATCH = 2
SEQ = 8
LN_EPS = 1e-5
PARAM_DTYPE = jnp.float32   # set to jnp.bfloat16 on v6e/v7x for 2x less DMA


# ---------------------------------------------------------------------------
# In-kernel helpers
# ---------------------------------------------------------------------------
def _layernorm(x, w, b):
    # x: (T, C), w/b: (1, C)
    mu = jnp.mean(x, axis=-1, keepdims=True)
    var = jnp.mean((x - mu) ** 2, axis=-1, keepdims=True)
    return (x - mu) * lax.rsqrt(var + LN_EPS) * w + b


def _gelu_tanh(x):
    # PyTorch nn.GELU(approximate='tanh')
    c = math.sqrt(2.0 / math.pi)
    return 0.5 * x * (1.0 + jnp.tanh(c * (x + 0.044715 * x * x * x)))


# ---------------------------------------------------------------------------
# Fully fused GPT forward kernel (all blocks + final LN + lm_head), per batch elem
# ---------------------------------------------------------------------------
def gpt_kernel(x_ref,
               ln1w_ref, ln1b_ref, wqkv_ref, bqkv_ref, wao_ref, bao_ref,
               ln2w_ref, ln2b_ref, wfc_ref, bfc_ref, wmo_ref, bmo_ref,
               lnfw_ref, lnfb_ref, wteT_ref,
               logits_ref,
               *, n_layer, n_head):
    x = x_ref[0].astype(jnp.float32)          # (T, C)
    T, C = x.shape
    hd = C // n_head
    scale = 1.0 / math.sqrt(hd)

    row = lax.broadcasted_iota(jnp.int32, (T, T), 0)
    col = lax.broadcasted_iota(jnp.int32, (T, T), 1)
    causal = (col <= row)[None, :, :]         # (1, T, T), broadcasts over heads

    # Static, unrolled layer loop; stacked weights are VMEM-resident across it.
    for l in range(n_layer):
        # --- attention branch ---
        h = _layernorm(x, ln1w_ref[l], ln1b_ref[l])
        qkv = (jnp.dot(h, wqkv_ref[l], preferred_element_type=jnp.float32)
               + bqkv_ref[l])                                  # (T, 3C)
        # All heads at once: (T, C) -> (H, T, hd).  Only leading-axis permutes;
        # no lane transposes, no per-head loop, no concatenate.
        q = qkv[:, 0 * C:1 * C].reshape(T, n_head, hd).transpose(1, 0, 2)
        k = qkv[:, 1 * C:2 * C].reshape(T, n_head, hd).transpose(1, 0, 2)
        v = qkv[:, 2 * C:3 * C].reshape(T, n_head, hd).transpose(1, 0, 2)

        s = jnp.einsum('htd,hsd->hts', q, k,
                       preferred_element_type=jnp.float32) * scale   # (H, T, T)
        s = jnp.where(causal, s, jnp.finfo(s.dtype).min)
        m = jnp.max(s, axis=-1, keepdims=True)
        e = jnp.exp(s - m)
        p = e / jnp.sum(e, axis=-1, keepdims=True)
        y = jnp.einsum('hts,hsd->htd', p, v,
                       preferred_element_type=jnp.float32)            # (H, T, hd)
        y = y.transpose(1, 0, 2).reshape(T, C)

        x = x + jnp.dot(y, wao_ref[l],
                        preferred_element_type=jnp.float32) + bao_ref[l]

        # --- MLP branch ---
        h2 = _layernorm(x, ln2w_ref[l], ln2b_ref[l])
        fc = (jnp.dot(h2, wfc_ref[l], preferred_element_type=jnp.float32)
              + bfc_ref[l])
        g = _gelu_tanh(fc)
        x = x + jnp.dot(g, wmo_ref[l],
                        preferred_element_type=jnp.float32) + bmo_ref[l]

    # --- final LayerNorm + weight-tied lm_head (wte pre-transposed to (C, V)) ---
    hf = _layernorm(x, lnfw_ref[...], lnfb_ref[...])
    logits_ref[0] = jnp.dot(hf, wteT_ref[...],
                            preferred_element_type=jnp.float32)


def gpt_pallas(x, params):
    B, T, C = x.shape
    L = N_LAYER
    V = VOCAB_SIZE
    # Pre-transpose the tied embedding table once in the wrapper so the kernel's
    # logits matmul contracts on the last axis and stores lane-dense rows.
    wte_T = jnp.transpose(params["wte"])          # (C, V)

    full = lambda nd: (lambda b: (0,) * nd)       # constant index_map -> single DMA
    kernel = functools.partial(gpt_kernel, n_layer=L, n_head=N_HEAD)
    # TODO(synk): at real GPT-2 scale (C=768, V=50257) the weights/logits would
    # need K-tiling and a V grid axis (and bf16) to fit VMEM; not needed here.
    return pl.pallas_call(
        kernel,
        out_shape=jax.ShapeDtypeStruct((B, T, V), jnp.float32),
        grid_spec=pltpu.PrefetchScalarGridSpec(
            num_scalar_prefetch=0,
            grid=(B,),
            in_specs=[
                pl.BlockSpec((1, T, C), lambda b: (b, 0, 0)),      # x
                pl.BlockSpec((L, 1, C), full(3)),                   # ln1_w
                pl.BlockSpec((L, 1, C), full(3)),                   # ln1_b
                pl.BlockSpec((L, C, 3 * C), full(3)),               # w_qkv
                pl.BlockSpec((L, 1, 3 * C), full(3)),               # b_qkv
                pl.BlockSpec((L, C, C), full(3)),                   # w_attn_out
                pl.BlockSpec((L, 1, C), full(3)),                   # b_attn_out
                pl.BlockSpec((L, 1, C), full(3)),                   # ln2_w
                pl.BlockSpec((L, 1, C), full(3)),                   # ln2_b
                pl.BlockSpec((L, C, 4 * C), full(3)),               # w_fc
                pl.BlockSpec((L, 1, 4 * C), full(3)),               # b_fc
                pl.BlockSpec((L, 4 * C, C), full(3)),               # w_mlp_out
                pl.BlockSpec((L, 1, C), full(3)),                   # b_mlp_out
                pl.BlockSpec((1, C), full(2)),                      # ln_f_w
                pl.BlockSpec((1, C), full(2)),                      # ln_f_b
                pl.BlockSpec((C, V), full(2)),                      # wte^T
            ],
            out_specs=pl.BlockSpec((1, T, V), lambda b: (b, 0, 0)),
        ),
        compiler_params=pltpu.CompilerParams(
            dimension_semantics=("parallel",)),
    )(x,
      params["ln1_w"], params["ln1_b"],
      params["w_qkv"], params["b_qkv"], params["w_ao"], params["b_ao"],
      params["ln2_w"], params["ln2_b"],
      params["w_fc"], params["b_fc"], params["w_mo"], params["b_mo"],
      params["ln_f_w"], params["ln_f_b"], wte_T)


# ---------------------------------------------------------------------------
# Parameter init (deterministic, matches GPT._init_weights distributions),
# per-layer weights stacked along a leading layer axis.
# ---------------------------------------------------------------------------
def init_params(key):
    C, V, L = N_EMBD, VOCAB_SIZE, N_LAYER
    std = 0.02
    proj_std = 0.02 * (2 * L) ** -0.5
    k = jax.random.split(key, 6)
    dt = PARAM_DTYPE
    return {
        "wte": (std * jax.random.normal(k[0], (V, C))).astype(dt),
        "wpe": (std * jax.random.normal(k[1], (BLOCK_SIZE, C))).astype(dt),
        "ln_f_w": jnp.ones((1, C), dt),
        "ln_f_b": jnp.zeros((1, C), dt),
        "ln1_w": jnp.ones((L, 1, C), dt),
        "ln1_b": jnp.zeros((L, 1, C), dt),
        "w_qkv": (std * jax.random.normal(k[2], (L, C, 3 * C))).astype(dt),
        "b_qkv": jnp.zeros((L, 1, 3 * C), dt),
        "w_ao": (proj_std * jax.random.normal(k[3], (L, C, C))).astype(dt),
        "b_ao": jnp.zeros((L, 1, C), dt),
        "ln2_w": jnp.ones((L, 1, C), dt),
        "ln2_b": jnp.zeros((L, 1, C), dt),
        "w_fc": (std * jax.random.normal(k[4], (L, C, 4 * C))).astype(dt),
        "b_fc": jnp.zeros((L, 1, 4 * C), dt),
        "w_mo": (proj_std * jax.random.normal(k[5], (L, 4 * C, C))).astype(dt),
        "b_mo": jnp.zeros((L, 1, C), dt),
    }


# ---------------------------------------------------------------------------
# Full GPT forward (targets=None path: returns logits; loss is None)
# ---------------------------------------------------------------------------
def gpt_forward(idx, params):
    B, T = idx.shape
    assert T <= BLOCK_SIZE
    tok_emb = jnp.take(params["wte"], idx, axis=0)        # (B, T, C) gather glue in JAX
    pos_emb = params["wpe"][:T]                            # (T, C)
    x = (tok_emb + pos_emb[None, :, :]).astype(jnp.float32)
    logits = gpt_pallas(x, params)
    # TODO(synk): cross-entropy loss path (targets is not None) not implemented;
    # reference call uses targets=None so only logits are returned.
    return logits, None


if __name__ == "__main__":
    key = jax.random.PRNGKey(0)
    pkey, ikey = jax.random.split(key)
    params = init_params(pkey)
    idx = jax.random.randint(ikey, (BATCH, SEQ), 0, VOCAB_SIZE, dtype=jnp.int32)

    logits, loss = gpt_forward(idx, params)
    logits = jax.block_until_ready(logits)
    assert logits.shape == (BATCH, SEQ, VOCAB_SIZE)
    assert logits.dtype == jnp.float32
    assert bool(jnp.all(jnp.isfinite(logits)))
    print("KERNEL_OK")
</pallas_src>

<mosaic_0001>
module attributes {stable_mosaic.version = 11 : i64} {
  func.func @gpt_kernel(%arg0: i32, %arg1: memref<1x8x128xf32, #tpu.memory_space<vmem>>, %arg2: memref<2x1x128xf32, #tpu.memory_space<vmem>>, %arg3: memref<2x1x128xf32, #tpu.memory_space<vmem>>, %arg4: memref<2x128x384xf32, #tpu.memory_space<vmem>>, %arg5: memref<2x1x384xf32, #tpu.memory_space<vmem>>, %arg6: memref<2x128x128xf32, #tpu.memory_space<vmem>>, %arg7: memref<2x1x128xf32, #tpu.memory_space<vmem>>, %arg8: memref<2x1x128xf32, #tpu.memory_space<vmem>>, %arg9: memref<2x1x128xf32, #tpu.memory_space<vmem>>, %arg10: memref<2x128x512xf32, #tpu.memory_space<vmem>>, %arg11: memref<2x1x512xf32, #tpu.memory_space<vmem>>, %arg12: memref<2x512x128xf32, #tpu.memory_space<vmem>>, %arg13: memref<2x1x128xf32, #tpu.memory_space<vmem>>, %arg14: memref<1x128xf32, #tpu.memory_space<vmem>>, %arg15: memref<1x128xf32, #tpu.memory_space<vmem>>, %arg16: memref<128x128xf32, #tpu.memory_space<vmem>>, %arg17: memref<1x8x128xf32, #tpu.memory_space<vmem>>) attributes {dimension_semantics = [#tpu.dimension_semantics<parallel>], iteration_bounds = array<i64: 2>, scalar_prefetch = 0 : i64, scratch_operands = 0 : i64, tpu.core_type = #tpu.core_type<tc>, window_params = [{transform_indices = @transform_0, window_bounds = array<i64: 1, 8, 128>}, {pipeline_mode = #tpu.pipeline_mode<synchronous>, transform_indices = @transform_1, window_bounds = array<i64: 2, 1, 128>}, {pipeline_mode = #tpu.pipeline_mode<synchronous>, transform_indices = @transform_2, window_bounds = array<i64: 2, 1, 128>}, {pipeline_mode = #tpu.pipeline_mode<synchronous>, transform_indices = @transform_3, window_bounds = array<i64: 2, 128, 384>}, {pipeline_mode = #tpu.pipeline_mode<synchronous>, transform_indices = @transform_4, window_bounds = array<i64: 2, 1, 384>}, {pipeline_mode = #tpu.pipeline_mode<synchronous>, transform_indices = @transform_5, window_bounds = array<i64: 2, 128, 128>}, {pipeline_mode = #tpu.pipeline_mode<synchronous>, transform_indices = @transform_6, window_bounds = array<i64: 2, 1, 128>}, {pipeline_mode = #tpu.pipeline_mode<synchronous>, transform_indices = @transform_7, window_bounds = array<i64: 2, 1, 128>}, {pipeline_mode = #tpu.pipeline_mode<synchronous>, transform_indices = @transform_8, window_bounds = array<i64: 2, 1, 128>}, {pipeline_mode = #tpu.pipeline_mode<synchronous>, transform_indices = @transform_9, window_bounds = array<i64: 2, 128, 512>}, {pipeline_mode = #tpu.pipeline_mode<synchronous>, transform_indices = @transform_10, window_bounds = array<i64: 2, 1, 512>}, {pipeline_mode = #tpu.pipeline_mode<synchronous>, transform_indices = @transform_11, window_bounds = array<i64: 2, 512, 128>}, {pipeline_mode = #tpu.pipeline_mode<synchronous>, transform_indices = @transform_12, window_bounds = array<i64: 2, 1, 128>}, {pipeline_mode = #tpu.pipeline_mode<synchronous>, transform_indices = @transform_13, window_bounds = array<i64: 1, 128>}, {pipeline_mode = #tpu.pipeline_mode<synchronous>, transform_indices = @transform_14, window_bounds = array<i64: 1, 128>}, {pipeline_mode = #tpu.pipeline_mode<synchronous>, transform_indices = @transform_15, window_bounds = array<i64: 128, 128>}, {transform_indices = @transform_16, window_bounds = array<i64: 1, 8, 128>}]} {
    %c0 = arith.constant 0 : index
    %c0_0 = arith.constant 0 : index
    %c0_1 = arith.constant 0 : index
    %0 = vector.load %arg1[%c0, %c0_0, %c0_1] : memref<1x8x128xf32, #tpu.memory_space<vmem>>, vector<1x8x128xf32>
    %1 = vector.shape_cast %0 : vector<1x8x128xf32> to vector<8x128xf32>
    %2 = tpu.iota {dimensions = array<i32: 0>} : vector<8x8xi32>
    %3 = tpu.iota {dimensions = array<i32: 1>} : vector<8x8xi32>
    %4 = arith.cmpi sle, %3, %2 : vector<8x8xi32>
    %5 = vector.shape_cast %4 : vector<8x8xi1> to vector<1x8x8xi1>
    %c0_2 = arith.constant 0 : index
    %c0_3 = arith.constant 0 : index
    %c0_4 = arith.constant 0 : index
    %6 = vector.load %arg2[%c0_2, %c0_3, %c0_4] : memref<2x1x128xf32, #tpu.memory_space<vmem>>, vector<1x1x128xf32>
    %7 = vector.shape_cast %6 : vector<1x1x128xf32> to vector<1x128xf32>
    %c0_5 = arith.constant 0 : index
    %c0_6 = arith.constant 0 : index
    %c0_7 = arith.constant 0 : index
    %8 = vector.load %arg3[%c0_5, %c0_6, %c0_7] : memref<2x1x128xf32, #tpu.memory_space<vmem>>, vector<1x1x128xf32>
    %9 = vector.shape_cast %8 : vector<1x1x128xf32> to vector<1x128xf32>
    %cst = arith.constant dense<0.000000e+00> : vector<8xf32>
    %10 = vector.multi_reduction <add>, %1, %cst [1] : vector<8x128xf32> to vector<8xf32>
    %11 = vector.shape_cast %10 : vector<8xf32> to vector<8x1xf32>
    %cst_8 = arith.constant 1.280000e+02 : f32
    %12 = vector.broadcast %cst_8 : f32 to vector<8x1xf32>
    %13 = arith.divf %11, %12 : vector<8x1xf32>
    %14 = vector.broadcast %13 : vector<8x1xf32> to vector<8x128xf32>
    %15 = arith.subf %1, %14 : vector<8x128xf32>
    %16 = arith.mulf %15, %15 : vector<8x128xf32>
    %cst_9 = arith.constant dense<0.000000e+00> : vector<8xf32>
    %17 = vector.multi_reduction <add>, %16, %cst_9 [1] : vector<8x128xf32> to vector<8xf32>
    %18 = vector.shape_cast %17 : vector<8xf32> to vector<8x1xf32>
    %cst_10 = arith.constant 1.280000e+02 : f32
    %19 = vector.broadcast %cst_10 : f32 to vector<8x1xf32>
    %20 = arith.divf %18, %19 : vector<8x1xf32>
    %21 = vector.broadcast %13 : vector<8x1xf32> to vector<8x128xf32>
    %22 = arith.subf %1, %21 : vector<8x128xf32>
    %cst_11 = arith.constant 9.99999974E-6 : f32
    %23 = vector.broadcast %cst_11 : f32 to vector<8x1xf32>
    %24 = arith.addf %20, %23 : vector<8x1xf32>
    %25 = math.rsqrt %24 : vector<8x1xf32>
    %26 = vector.broadcast %25 : vector<8x1xf32> to vector<8x128xf32>
    %27 = arith.mulf %22, %26 : vector<8x128xf32>
    %28 = vector.broadcast %7 : vector<1x128xf32> to vector<8x128xf32>
    %29 = arith.mulf %27, %28 : vector<8x128xf32>
    %30 = vector.broadcast %9 : vector<1x128xf32> to vector<8x128xf32>
    %31 = arith.addf %29, %30 : vector<8x128xf32>
    %c0_12 = arith.constant 0 : index
    %c0_13 = arith.constant 0 : index
    %c0_14 = arith.constant 0 : index
    %32 = vector.load %arg4[%c0_12, %c0_13, %c0_14] : memref<2x128x384xf32, #tpu.memory_space<vmem>>, vector<1x128x384xf32>
    %33 = vector.shape_cast %32 : vector<1x128x384xf32> to vector<128x384xf32>
    %cst_15 = arith.constant dense<0.000000e+00> : vector<8x384xf32>
    %34 = tpu.matmul %31, %33, %cst_15 {dimension_numbers = #tpu.dot_dimension_numbers<[1], [0], [0], [1], [0, 0, 1, 1], [], []>} : vector<8x128xf32>, vector<128x384xf32>, vector<8x384xf32> -> vector<8x384xf32>
    %c0_16 = arith.constant 0 : index
    %c0_17 = arith.constant 0 : index
    %c0_18 = arith.constant 0 : index
    %35 = vector.load %arg5[%c0_16, %c0_17, %c0_18] : memref<2x1x384xf32, #tpu.memory_space<vmem>>, vector<1x1x384xf32>
    %36 = vector.shape_cast %35 : vector<1x1x384xf32> to vector<1x384xf32>
    %37 = vector.broadcast %36 : vector<1x384xf32> to vector<8x384xf32>
    %38 = arith.addf %34, %37 : vector<8x384xf32>
    %39 = vector.extract_strided_slice %38 {offsets = [0, 0], sizes = [8, 128], strides = [1, 1]} : vector<8x384xf32> to vector<8x128xf32>
    %40 = vector.shape_cast %39 : vector<8x128xf32> to vector<8x4x32xf32>
    %41 = tpu.transpose %40, [1, 0, 2] : vector<8x4x32xf32> -> vector<4x8x32xf32>
    %42 = vector.extract_strided_slice %38 {offsets = [0, 128], sizes = [8, 128], strides = [1, 1]} : vector<8x384xf32> to vector<8x128xf32>
    %43 = vector.shape_cast %42 : vector<8x128xf32> to vector<8x4x32xf32>
    %44 = tpu.transpose %43, [1, 0, 2] : vector<8x4x32xf32> -> vector<4x8x32xf32>
    %45 = vector.extract_strided_slice %38 {offsets = [0, 256], sizes = [8, 128], strides = [1, 1]} : vector<8x384xf32> to vector<8x128xf32>
    %46 = vector.shape_cast %45 : vector<8x128xf32> to vector<8x4x32xf32>
    %47 = tpu.transpose %46, [1, 0, 2] : vector<8x4x32xf32> -> vector<4x8x32xf32>
    "tpu.trace_start"() <{level = 10 : i32, message = "htd,hsd->hts"}> : () -> ()
    %cst_19 = arith.constant dense<0.000000e+00> : vector<4x8x8xf32>
    %48 = tpu.matmul %41, %44, %cst_19 {dimension_numbers = #tpu.dot_dimension_numbers<[2], [2], [1], [1], [0, 0, 0, 1, 1, 1], [0], [0]>} : vector<4x8x32xf32>, vector<4x8x32xf32>, vector<4x8x8xf32> -> vector<4x8x8xf32>
    "tpu.trace_stop"() : () -> ()
    %cst_20 = arith.constant 0.176776692 : f32
    %49 = vector.broadcast %cst_20 : f32 to vector<4x8x8xf32>
    %50 = arith.mulf %48, %49 : vector<4x8x8xf32>
    %cst_21 = arith.constant -3.40282347E+38 : f32
    %51 = vector.shape_cast %5 : vector<1x8x8xi1> to vector<1x8x8xi1>
    %52 = vector.broadcast %51 : vector<1x8x8xi1> to vector<4x8x8xi1>
    %53 = vector.broadcast %cst_21 : f32 to vector<4x8x8xf32>
    %54 = arith.select %52, %50, %53 : vector<4x8x8xi1>, vector<4x8x8xf32>
    %cst_22 = arith.constant dense<0xFF800000> : vector<4x8xf32>
    %55 = vector.multi_reduction <maximumf>, %54, %cst_22 [2] : vector<4x8x8xf32> to vector<4x8xf32>
    %56 = vector.shape_cast %55 : vector<4x8xf32> to vector<4x8x1xf32>
    %57 = vector.broadcast %56 : vector<4x8x1xf32> to vector<4x8x8xf32>
    %58 = arith.subf %54, %57 : vector<4x8x8xf32>
    %59 = math.exp %58 : vector<4x8x8xf32>
    %cst_23 = arith.constant dense<0.000000e+00> : vector<4x8xf32>
    %60 = vector.multi_reduction <add>, %59, %cst_23 [2] : vector<4x8x8xf32> to vector<4x8xf32>
    %61 = vector.shape_cast %60 : vector<4x8xf32> to vector<4x8x1xf32>
    %62 = vector.broadcast %61 : vector<4x8x1xf32> to vector<4x8x8xf32>
    %63 = arith.divf %59, %62 : vector<4x8x8xf32>
    "tpu.trace_start"() <{level = 10 : i32, message = "hts,hsd->htd"}> : () -> ()
    %cst_24 = arith.constant dense<0.000000e+00> : vector<4x8x32xf32>
    %64 = tpu.matmul %63, %47, %cst_24 {dimension_numbers = #tpu.dot_dimension_numbers<[2], [1], [1], [2], [0, 0, 0, 1, 1, 2], [0], [0]>} : vector<4x8x8xf32>, vector<4x8x32xf32>, vector<4x8x32xf32> -> vector<4x8x32xf32>
    "tpu.trace_stop"() : () -> ()
    %65 = tpu.transpose %64, [1, 0, 2] : vector<4x8x32xf32> -> vector<8x4x32xf32>
    %66 = vector.shape_cast %65 : vector<8x4x32xf32> to vector<8x128xf32>
    %c0_25 = arith.constant 0 : index
    %c0_26 = arith.constant 0 : index
    %c0_27 = arith.constant 0 : index
    %67 = vector.load %arg6[%c0_25, %c0_26, %c0_27] : memref<2x128x128xf32, #tpu.memory_space<vmem>>, vector<1x128x128xf32>
    %68 = vector.shape_cast %67 : vector<1x128x128xf32> to vector<128x128xf32>
    %cst_28 = arith.constant dense<0.000000e+00> : vector<8x128xf32>
    %69 = tpu.matmul %66, %68, %cst_28 {dimension_numbers = #tpu.dot_dimension_numbers<[1], [0], [0], [1], [0, 0, 1, 1], [], []>} : vector<8x128xf32>, vector<128x128xf32>, vector<8x128xf32> -> vector<8x128xf32>
    %70 = arith.addf %1, %69 : vector<8x128xf32>
    %c0_29 = arith.constant 0 : index
    %c0_30 = arith.constant 0 : index
    %c0_31 = arith.constant 0 : index
    %71 = vector.load %arg7[%c0_29, %c0_30, %c0_31] : memref<2x1x128xf32, #tpu.memory_space<vmem>>, vector<1x1x128xf32>
    %72 = vector.shape_cast %71 : vector<1x1x128xf32> to vector<1x128xf32>
    %73 = vector.broadcast %72 : vector<1x128xf32> to vector<8x128xf32>
    %74 = arith.addf %70, %73 : vector<8x128xf32>
    %c0_32 = arith.constant 0 : index
    %c0_33 = arith.constant 0 : index
    %c0_34 = arith.constant 0 : index
    %75 = vector.load %arg8[%c0_32, %c0_33, %c0_34] : memref<2x1x128xf32, #tpu.memory_space<vmem>>, vector<1x1x128xf32>
    %76 = vector.shape_cast %75 : vector<1x1x128xf32> to vector<1x128xf32>
    %c0_35 = arith.constant 0 : index
    %c0_36 = arith.constant 0 : index
    %c0_37 = arith.constant 0 : index
    %77 = vector.load %arg9[%c0_35, %c0_36, %c0_37] : memref<2x1x128xf32, #tpu.memory_space<vmem>>, vector<1x1x128xf32>
    %78 = vector.shape_cast %77 : vector<1x1x128xf32> to vector<1x128xf32>
    %cst_38 = arith.constant dense<0.000000e+00> : vector<8xf32>
    %79 = vector.multi_reduction <add>, %74, %cst_38 [1] : vector<8x128xf32> to vector<8xf32>
    %80 = vector.shape_cast %79 : vector<8xf32> to vector<8x1xf32>
    %cst_39 = arith.constant 1.280000e+02 : f32
    %81 = vector.broadcast %cst_39 : f32 to vector<8x1xf32>
    %82 = arith.divf %80, %81 : vector<8x1xf32>
    %83 = vector.broadcast %82 : vector<8x1xf32> to vector<8x128xf32>
    %84 = arith.subf %74, %83 : vector<8x128xf32>
    %85 = arith.mulf %84, %84 : vector<8x128xf32>
    %cst_40 = arith.constant dense<0.000000e+00> : vector<8xf32>
    %86 = vector.multi_reduction <add>, %85, %cst_40 [1] : vector<8x128xf32> to vector<8xf32>
    %87 = vector.shape_cast %86 : vector<8xf32> to vector<8x1xf32>
    %cst_41 = arith.constant 1.280000e+02 : f32
    %88 = vector.broadcast %cst_41 : f32 to vector<8x1xf32>
    %89 = arith.divf %87, %88 : vector<8x1xf32>
    %90 = vector.broadcast %82 : vector<8x1xf32> to vector<8x128xf32>
    %91 = arith.subf %74, %90 : vector<8x128xf32>
    %cst_42 = arith.constant 9.99999974E-6 : f32
    %92 = vector.broadcast %cst_42 : f32 to vector<8x1xf32>
    %93 = arith.addf %89, %92 : vector<8x1xf32>
    %94 = math.rsqrt %93 : vector<8x1xf32>
    %95 = vector.broadcast %94 : vector<8x1xf32> to vector<8x128xf32>
    %96 = arith.mulf %91, %95 : vector<8x128xf32>
    %97 = vector.broadcast %76 : vector<1x128xf32> to vector<8x128xf32>
    %98 = arith.mulf %96, %97 : vector<8x128xf32>
    %99 = vector.broadcast %78 : vector<1x128xf32> to vector<8x128xf32>
    %100 = arith.addf %98, %99 : vector<8x128xf32>
    %c0_43 = arith.constant 0 : index
    %c0_44 = arith.constant 0 : index
    %c0_45 = arith.constant 0 : index
    %101 = vector.load %arg10[%c0_43, %c0_44, %c0_45] : memref<2x128x512xf32, #tpu.memory_space<vmem>>, vector<1x128x512xf32>
    %102 = vector.shape_cast %101 : vector<1x128x512xf32> to vector<128x512xf32>
    %cst_46 = arith.constant dense<0.000000e+00> : vector<8x512xf32>
    %103 = tpu.matmul %100, %102, %cst_46 {dimension_numbers = #tpu.dot_dimension_numbers<[1], [0], [0], [1], [0, 0, 1, 1], [], []>} : vector<8x128xf32>, vector<128x512xf32>, vector<8x512xf32> -> vector<8x512xf32>
    %c0_47 = arith.constant 0 : index
    %c0_48 = arith.constant 0 : index
    %c0_49 = arith.constant 0 : index
    %104 = vector.load %arg11[%c0_47, %c0_48, %c0_49] : memref<2x1x512xf32, #tpu.memory_space<vmem>>, vector<1x1x512xf32>
    %105 = vector.shape_cast %104 : vector<1x1x512xf32> to vector<1x512xf32>
    %106 = vector.broadcast %105 : vector<1x512xf32> to vector<8x512xf32>
    %107 = arith.addf %103, %106 : vector<8x512xf32>
    %cst_50 = arith.constant 5.000000e-01 : f32
    %108 = vector.broadcast %cst_50 : f32 to vector<8x512xf32>
    %109 = arith.mulf %108, %107 : vector<8x512xf32>
    %cst_51 = arith.constant 4.471500e-02 : f32
    %110 = vector.broadcast %cst_51 : f32 to vector<8x512xf32>
    %111 = arith.mulf %110, %107 : vector<8x512xf32>
    %112 = arith.mulf %111, %107 : vector<8x512xf32>
    %113 = arith.mulf %112, %107 : vector<8x512xf32>
    %114 = arith.addf %107, %113 : vector<8x512xf32>
    %cst_52 = arith.constant 0.797884583 : f32
    %115 = vector.broadcast %cst_52 : f32 to vector<8x512xf32>
    %116 = arith.mulf %115, %114 : vector<8x512xf32>
    %117 = math.tanh %116 : vector<8x512xf32>
    %cst_53 = arith.constant 1.000000e+00 : f32
    %118 = vector.broadcast %cst_53 : f32 to vector<8x512xf32>
    %119 = arith.addf %118, %117 : vector<8x512xf32>
    %120 = arith.mulf %109, %119 : vector<8x512xf32>
    %c0_54 = arith.constant 0 : index
    %c0_55 = arith.constant 0 : index
    %c0_56 = arith.constant 0 : index
    %121 = vector.load %arg12[%c0_54, %c0_55, %c0_56] : memref<2x512x128xf32, #tpu.memory_space<vmem>>, vector<1x512x128xf32>
    %122 = vector.shape_cast %121 : vector<1x512x128xf32> to vector<512x128xf32>
    %cst_57 = arith.constant dense<0.000000e+00> : vector<8x128xf32>
    %123 = tpu.matmul %120, %122, %cst_57 {dimension_numbers = #tpu.dot_dimension_numbers<[1], [0], [0], [1], [0, 0, 1, 1], [], []>} : vector<8x512xf32>, vector<512x128xf32>, vector<8x128xf32> -> vector<8x128xf32>
    %124 = arith.addf %74, %123 : vector<8x128xf32>
    %c0_58 = arith.constant 0 : index
    %c0_59 = arith.constant 0 : index
    %c0_60 = arith.constant 0 : index
    %125 = vector.load %arg13[%c0_58, %c0_59, %c0_60] : memref<2x1x128xf32, #tpu.memory_space<vmem>>, vector<1x1x128xf32>
    %126 = vector.shape_cast %125 : vector<1x1x128xf32> to vector<1x128xf32>
    %127 = vector.broadcast %126 : vector<1x128xf32> to vector<8x128xf32>
    %128 = arith.addf %124, %127 : vector<8x128xf32>
    %c1 = arith.constant 1 : index
    %c0_61 = arith.constant 0 : index
    %c0_62 = arith.constant 0 : index
    %129 = vector.load %arg2[%c1, %c0_61, %c0_62] : memref<2x1x128xf32, #tpu.memory_space<vmem>>, vector<1x1x128xf32>
    %130 = vector.shape_cast %129 : vector<1x1x128xf32> to vector<1x128xf32>
    %c1_63 = arith.constant 1 : index
    %c0_64 = arith.constant 0 : index
    %c0_65 = arith.constant 0 : index
    %131 = vector.load %arg3[%c1_63, %c0_64, %c0_65] : memref<2x1x128xf32, #tpu.memory_space<vmem>>, vector<1x1x128xf32>
    %132 = vector.shape_cast %131 : vector<1x1x128xf32> to vector<1x128xf32>
    %cst_66 = arith.constant dense<0.000000e+00> : vector<8xf32>
    %133 = vector.multi_reduction <add>, %128, %cst_66 [1] : vector<8x128xf32> to vector<8xf32>
    %134 = vector.shape_cast %133 : vector<8xf32> to vector<8x1xf32>
    %cst_67 = arith.constant 1.280000e+02 : f32
    %135 = vector.broadcast %cst_67 : f32 to vector<8x1xf32>
    %136 = arith.divf %134, %135 : vector<8x1xf32>
    %137 = vector.broadcast %136 : vector<8x1xf32> to vector<8x128xf32>
    %138 = arith.subf %128, %137 : vector<8x128xf32>
    %139 = arith.mulf %138, %138 : vector<8x128xf32>
    %cst_68 = arith.constant dense<0.000000e+00> : vector<8xf32>
    %140 = vector.multi_reduction <add>, %139, %cst_68 [1] : vector<8x128xf32> to vector<8xf32>
    %141 = vector.shape_cast %140 : vector<8xf32> to vector<8x1xf32>
    %cst_69 = arith.constant 1.280000e+02 : f32
    %142 = vector.broadcast %cst_69 : f32 to vector<8x1xf32>
    %143 = arith.divf %141, %142 : vector<8x1xf32>
    %144 = vector.broadcast %136 : vector<8x1xf32> to vector<8x128xf32>
    %145 = arith.subf %128, %144 : vector<8x128xf32>
    %cst_70 = arith.constant 9.99999974E-6 : f32
    %146 = vector.broadcast %cst_70 : f32 to vector<8x1xf32>
    %147 = arith.addf %143, %146 : vector<8x1xf32>
    %148 = math.rsqrt %147 : vector<8x1xf32>
    %149 = vector.broadcast %148 : vector<8x1xf32> to vector<8x128xf32>
    %150 = arith.mulf %145, %149 : vector<8x128xf32>
    %151 = vector.broadcast %130 : vector<1x128xf32> to vector<8x128xf32>
    %152 = arith.mulf %150, %151 : vector<8x128xf32>
    %153 = vector.broadcast %132 : vector<1x128xf32> to vector<8x128xf32>
    %154 = arith.addf %152, %153 : vector<8x128xf32>
    %c1_71 = arith.constant 1 : index
    %c0_72 = arith.constant 0 : index
    %c0_73 = arith.constant 0 : index
    %155 = vector.load %arg4[%c1_71, %c0_72, %c0_73] : memref<2x128x384xf32, #tpu.memory_space<vmem>>, vector<1x128x384xf32>
    %156 = vector.shape_cast %155 : vector<1x128x384xf32> to vector<128x384xf32>
    %cst_74 = arith.constant dense<0.000000e+00> : vector<8x384xf32>
    %157 = tpu.matmul %154, %156, %cst_74 {dimension_numbers = #tpu.dot_dimension_numbers<[1], [0], [0], [1], [0, 0, 1, 1], [], []>} : vector<8x128xf32>, vector<128x384xf32>, vector<8x384xf32> -> vector<8x384xf32>
    %c1_75 = arith.constant 1 : index
    %c0_76 = arith.constant 0 : index
    %c0_77 = arith.constant 0 : index
    %158 = vector.load %arg5[%c1_75, %c0_76, %c0_77] : memref<2x1x384xf32, #tpu.memory_space<vmem>>, vector<1x1x384xf32>
    %159 = vector.shape_cast %158 : vector<1x1x384xf32> to vector<1x384xf32>
    %160 = vector.broadcast %159 : vector<1x384xf32> to vector<8x384xf32>
    %161 = arith.addf %157, %160 : vector<8x384xf32>
    %162 = vector.extract_strided_slice %161 {offsets = [0, 0], sizes = [8, 128], strides = [1, 1]} : vector<8x384xf32> to vector<8x128xf32>
    %163 = vector.shape_cast %162 : vector<8x128xf32> to vector<8x4x32xf32>
    %164 = tpu.transpose %163, [1, 0, 2] : vector<8x4x32xf32> -> vector<4x8x32xf32>
    %165 = vector.extract_strided_slice %161 {offsets = [0, 128], sizes = [8, 128], strides = [1, 1]} : vector<8x384xf32> to vector<8x128xf32>
    %166 = vector.shape_cast %165 : vector<8x128xf32> to vector<8x4x32xf32>
    %167 = tpu.transpose %166, [1, 0, 2] : vector<8x4x32xf32> -> vector<4x8x32xf32>
    %168 = vector.extract_strided_slice %161 {offsets = [0, 256], sizes = [8, 128], strides = [1, 1]} : vector<8x384xf32> to vector<8x128xf32>
    %169 = vector.shape_cast %168 : vector<8x128xf32> to vector<8x4x32xf32>
    %170 = tpu.transpose %169, [1, 0, 2] : vector<8x4x32xf32> -> vector<4x8x32xf32>
    "tpu.trace_start"() <{level = 10 : i32, message = "htd,hsd->hts"}> : () -> ()
    %cst_78 = arith.constant dense<0.000000e+00> : vector<4x8x8xf32>
    %171 = tpu.matmul %164, %167, %cst_78 {dimension_numbers = #tpu.dot_dimension_numbers<[2], [2], [1], [1], [0, 0, 0, 1, 1, 1], [0], [0]>} : vector<4x8x32xf32>, vector<4x8x32xf32>, vector<4x8x8xf32> -> vector<4x8x8xf32>
    "tpu.trace_stop"() : () -> ()
    %cst_79 = arith.constant 0.176776692 : f32
    %172 = vector.broadcast %cst_79 : f32 to vector<4x8x8xf32>
    %173 = arith.mulf %171, %172 : vector<4x8x8xf32>
    %cst_80 = arith.constant -3.40282347E+38 : f32
    %174 = vector.shape_cast %5 : vector<1x8x8xi1> to vector<1x8x8xi1>
    %175 = vector.broadcast %174 : vector<1x8x8xi1> to vector<4x8x8xi1>
    %176 = vector.broadcast %cst_80 : f32 to vector<4x8x8xf32>
    %177 = arith.select %175, %173, %176 : vector<4x8x8xi1>, vector<4x8x8xf32>
    %cst_81 = arith.constant dense<0xFF800000> : vector<4x8xf32>
    %178 = vector.multi_reduction <maximumf>, %177, %cst_81 [2] : vector<4x8x8xf32> to vector<4x8xf32>
    %179 = vector.shape_cast %178 : vector<4x8xf32> to vector<4x8x1xf32>
    %180 = vector.broadcast %179 : vector<4x8x1xf32> to vector<4x8x8xf32>
    %181 = arith.subf %177, %180 : vector<4x8x8xf32>
    %182 = math.exp %181 : vector<4x8x8xf32>
    %cst_82 = arith.constant dense<0.000000e+00> : vector<4x8xf32>
    %183 = vector.multi_reduction <add>, %182, %cst_82 [2] : vector<4x8x8xf32> to vector<4x8xf32>
    %184 = vector.shape_cast %183 : vector<4x8xf32> to vector<4x8x1xf32>
    %185 = vector.broadcast %184 : vector<4x8x1xf32> to vector<4x8x8xf32>
    %186 = arith.divf %182, %185 : vector<4x8x8xf32>
    "tpu.trace_start"() <{level = 10 : i32, message = "hts,hsd->htd"}> : () -> ()
    %cst_83 = arith.constant dense<0.000000e+00> : vector<4x8x32xf32>
    %187 = tpu.matmul %186, %170, %cst_83 {dimension_numbers = #tpu.dot_dimension_numbers<[2], [1], [1], [2], [0, 0, 0, 1, 1, 2], [0], [0]>} : vector<4x8x8xf32>, vector<4x8x32xf32>, vector<4x8x32xf32> -> vector<4x8x32xf32>
    "tpu.trace_stop"() : () -> ()
    %188 = tpu.transpose %187, [1, 0, 2] : vector<4x8x32xf32> -> vector<8x4x32xf32>
    %189 = vector.shape_cast %188 : vector<8x4x32xf32> to vector<8x128xf32>
    %c1_84 = arith.constant 1 : index
    %c0_85 = arith.constant 0 : index
    %c0_86 = arith.constant 0 : index
    %190 = vector.load %arg6[%c1_84, %c0_85, %c0_86] : memref<2x128x128xf32, #tpu.memory_space<vmem>>, vector<1x128x128xf32>
    %191 = vector.shape_cast %190 : vector<1x128x128xf32> to vector<128x128xf32>
    %cst_87 = arith.constant dense<0.000000e+00> : vector<8x128xf32>
    %192 = tpu.matmul %189, %191, %cst_87 {dimension_numbers = #tpu.dot_dimension_numbers<[1], [0], [0], [1], [0, 0, 1, 1], [], []>} : vector<8x128xf32>, vector<128x128xf32>, vector<8x128xf32> -> vector<8x128xf32>
    %193 = arith.addf %128, %192 : vector<8x128xf32>
    %c1_88 = arith.constant 1 : index
    %c0_89 = arith.constant 0 : index
    %c0_90 = arith.constant 0 : index
    %194 = vector.load %arg7[%c1_88, %c0_89, %c0_90] : memref<2x1x128xf32, #tpu.memory_space<vmem>>, vector<1x1x128xf32>
    %195 = vector.shape_cast %194 : vector<1x1x128xf32> to vector<1x128xf32>
    %196 = vector.broadcast %195 : vector<1x128xf32> to vector<8x128xf32>
    %197 = arith.addf %193, %196 : vector<8x128xf32>
    %c1_91 = arith.constant 1 : index
    %c0_92 = arith.constant 0 : index
    %c0_93 = arith.constant 0 : index
    %198 = vector.load %arg8[%c1_91, %c0_92, %c0_93] : memref<2x1x128xf32, #tpu.memory_space<vmem>>, vector<1x1x128xf32>
    %199 = vector.shape_cast %198 : vector<1x1x128xf32> to vector<1x128xf32>
    %c1_94 = arith.constant 1 : index
    %c0_95 = arith.constant 0 : index
    %c0_96 = arith.constant 0 : index
    %200 = vector.load %arg9[%c1_94, %c0_95, %c0_96] : memref<2x1x128xf32, #tpu.memory_space<vmem>>, vector<1x1x128xf32>
    %201 = vector.shape_cast %200 : vector<1x1x128xf32> to vector<1x128xf32>
    %cst_97 = arith.constant dense<0.000000e+00> : vector<8xf32>
    %202 = vector.multi_reduction <add>, %197, %cst_97 [1] : vector<8x128xf32> to vector<8xf32>
    %203 = vector.shape_cast %202 : vector<8xf32> to vector<8x1xf32>
    %cst_98 = arith.constant 1.280000e+02 : f32
    %204 = vector.broadcast %cst_98 : f32 to vector<8x1xf32>
    %205 = arith.divf %203, %204 : vector<8x1xf32>
    %206 = vector.broadcast %205 : vector<8x1xf32> to vector<8x128xf32>
    %207 = arith.subf %197, %206 : vector<8x128xf32>
    %208 = arith.mulf %207, %207 : vector<8x128xf32>
    %cst_99 = arith.constant dense<0.000000e+00> : vector<8xf32>
    %209 = vector.multi_reduction <add>, %208, %cst_99 [1] : vector<8x128xf32> to vector<8xf32>
    %210 = vector.shape_cast %209 : vector<8xf32> to vector<8x1xf32>
    %cst_100 = arith.constant 1.280000e+02 : f32
    %211 = vector.broadcast %cst_100 : f32 to vector<8x1xf32>
    %212 = arith.divf %210, %211 : vector<8x1xf32>
    %213 = vector.broadcast %205 : vector<8x1xf32> to vector<8x128xf32>
    %214 = arith.subf %197, %213 : vector<8x128xf32>
    %cst_101 = arith.constant 9.99999974E-6 : f32
    %215 = vector.broadcast %cst_101 : f32 to vector<8x1xf32>
    %216 = arith.addf %212, %215 : vector<8x1xf32>
    %217 = math.rsqrt %216 : vector<8x1xf32>
    %218 = vector.broadcast %217 : vector<8x1xf32> to vector<8x128xf32>
    %219 = arith.mulf %214, %218 : vector<8x128xf32>
    %220 = vector.broadcast %199 : vector<1x128xf32> to vector<8x128xf32>
    %221 = arith.mulf %219, %220 : vector<8x128xf32>
    %222 = vector.broadcast %201 : vector<1x128xf32> to vector<8x128xf32>
    %223 = arith.addf %221, %222 : vector<8x128xf32>
    %c1_102 = arith.constant 1 : index
    %c0_103 = arith.constant 0 : index
    %c0_104 = arith.constant 0 : index
    %224 = vector.load %arg10[%c1_102, %c0_103, %c0_104] : memref<2x128x512xf32, #tpu.memory_space<vmem>>, vector<1x128x512xf32>
    %225 = vector.shape_cast %224 : vector<1x128x512xf32> to vector<128x512xf32>
    %cst_105 = arith.constant dense<0.000000e+00> : vector<8x512xf32>
    %226 = tpu.matmul %223, %225, %cst_105 {dimension_numbers = #tpu.dot_dimension_numbers<[1], [0], [0], [1], [0, 0, 1, 1], [], []>} : vector<8x128xf32>, vector<128x512xf32>, vector<8x512xf32> -> vector<8x512xf32>
    %c1_106 = arith.constant 1 : index
    %c0_107 = arith.constant 0 : index
    %c0_108 = arith.constant 0 : index
    %227 = vector.load %arg11[%c1_106, %c0_107, %c0_108] : memref<2x1x512xf32, #tpu.memory_space<vmem>>, vector<1x1x512xf32>
    %228 = vector.shape_cast %227 : vector<1x1x512xf32> to vector<1x512xf32>
    %229 = vector.broadcast %228 : vector<1x512xf32> to vector<8x512xf32>
    %230 = arith.addf %226, %229 : vector<8x512xf32>
    %cst_109 = arith.constant 5.000000e-01 : f32
    %231 = vector.broadcast %cst_109 : f32 to vector<8x512xf32>
    %232 = arith.mulf %231, %230 : vector<8x512xf32>
    %cst_110 = arith.constant 4.471500e-02 : f32
    %233 = vector.broadcast %cst_110 : f32 to vector<8x512xf32>
    %234 = arith.mulf %233, %230 : vector<8x512xf32>
    %235 = arith.mulf %234, %230 : vector<8x512xf32>
    %236 = arith.mulf %235, %230 : vector<8x512xf32>
    %237 = arith.addf %230, %236 : vector<8x512xf32>
    %cst_111 = arith.constant 0.797884583 : f32
    %238 = vector.broadcast %cst_111 : f32 to vector<8x512xf32>
    %239 = arith.mulf %238, %237 : vector<8x512xf32>
    %240 = math.tanh %239 : vector<8x512xf32>
    %cst_112 = arith.constant 1.000000e+00 : f32
    %241 = vector.broadcast %cst_112 : f32 to vector<8x512xf32>
    %242 = arith.addf %241, %240 : vector<8x512xf32>
    %243 = arith.mulf %232, %242 : vector<8x512xf32>
    %c1_113 = arith.constant 1 : index
    %c0_114 = arith.constant 0 : index
    %c0_115 = arith.constant 0 : index
    %244 = vector.load %arg12[%c1_113, %c0_114, %c0_115] : memref<2x512x128xf32, #tpu.memory_space<vmem>>, vector<1x512x128xf32>
    %245 = vector.shape_cast %244 : vector<1x512x128xf32> to vector<512x128xf32>
    %cst_116 = arith.constant dense<0.000000e+00> : vector<8x128xf32>
    %246 = tpu.matmul %243, %245, %cst_116 {dimension_numbers = #tpu.dot_dimension_numbers<[1], [0], [0], [1], [0, 0, 1, 1], [], []>} : vector<8x512xf32>, vector<512x128xf32>, vector<8x128xf32> -> vector<8x128xf32>
    %247 = arith.addf %197, %246 : vector<8x128xf32>
    %c1_117 = arith.constant 1 : index
    %c0_118 = arith.constant 0 : index
    %c0_119 = arith.constant 0 : index
    %248 = vector.load %arg13[%c1_117, %c0_118, %c0_119] : memref<2x1x128xf32, #tpu.memory_space<vmem>>, vector<1x1x128xf32>
    %249 = vector.shape_cast %248 : vector<1x1x128xf32> to vector<1x128xf32>
    %250 = vector.broadcast %249 : vector<1x128xf32> to vector<8x128xf32>
    %251 = arith.addf %247, %250 : vector<8x128xf32>
    %c0_120 = arith.constant 0 : index
    %c0_121 = arith.constant 0 : index
    %252 = vector.load %arg14[%c0_120, %c0_121] : memref<1x128xf32, #tpu.memory_space<vmem>>, vector<1x128xf32>
    %c0_122 = arith.constant 0 : index
    %c0_123 = arith.constant 0 : index
    %253 = vector.load %arg15[%c0_122, %c0_123] : memref<1x128xf32, #tpu.memory_space<vmem>>, vector<1x128xf32>
    %cst_124 = arith.constant dense<0.000000e+00> : vector<8xf32>
    %254 = vector.multi_reduction <add>, %251, %cst_124 [1] : vector<8x128xf32> to vector<8xf32>
    %255 = vector.shape_cast %254 : vector<8xf32> to vector<8x1xf32>
    %cst_125 = arith.constant 1.280000e+02 : f32
    %256 = vector.broadcast %cst_125 : f32 to vector<8x1xf32>
    %257 = arith.divf %255, %256 : vector<8x1xf32>
    %258 = vector.broadcast %257 : vector<8x1xf32> to vector<8x128xf32>
    %259 = arith.subf %251, %258 : vector<8x128xf32>
    %260 = arith.mulf %259, %259 : vector<8x128xf32>
    %cst_126 = arith.constant dense<0.000000e+00> : vector<8xf32>
    %261 = vector.multi_reduction <add>, %260, %cst_126 [1] : vector<8x128xf32> to vector<8xf32>
    %262 = vector.shape_cast %261 : vector<8xf32> to vector<8x1xf32>
    %cst_127 = arith.constant 1.280000e+02 : f32
    %263 = vector.broadcast %cst_127 : f32 to vector<8x1xf32>
    %264 = arith.divf %262, %263 : vector<8x1xf32>
    %265 = vector.broadcast %257 : vector<8x1xf32> to vector<8x128xf32>
    %266 = arith.subf %251, %265 : vector<8x128xf32>
    %cst_128 = arith.constant 9.99999974E-6 : f32
    %267 = vector.broadcast %cst_128 : f32 to vector<8x1xf32>
    %268 = arith.addf %264, %267 : vector<8x1xf32>
    %269 = math.rsqrt %268 : vector<8x1xf32>
    %270 = vector.broadcast %269 : vector<8x1xf32> to vector<8x128xf32>
    %271 = arith.mulf %266, %270 : vector<8x128xf32>
    %272 = vector.broadcast %252 : vector<1x128xf32> to vector<8x128xf32>
    %273 = arith.mulf %271, %272 : vector<8x128xf32>
    %274 = vector.broadcast %253 : vector<1x128xf32> to vector<8x128xf32>
    %275 = arith.addf %273, %274 : vector<8x128xf32>
    %c0_129 = arith.constant 0 : index
    %c0_130 = arith.constant 0 : index
    %276 = vector.load %arg16[%c0_129, %c0_130] : memref<128x128xf32, #tpu.memory_space<vmem>>, vector<128x128xf32>
    %cst_131 = arith.constant dense<0.000000e+00> : vector<8x128xf32>
    %277 = tpu.matmul %275, %276, %cst_131 {dimension_numbers = #tpu.dot_dimension_numbers<[1], [0], [0], [1], [0, 0, 1, 1], [], []>} : vector<8x128xf32>, vector<128x128xf32>, vector<8x128xf32> -> vector<8x128xf32>
    %c0_132 = arith.constant 0 : index
    %c0_133 = arith.constant 0 : index
    %c0_134 = arith.constant 0 : index
    %278 = vector.load %arg17[%c0_132, %c0_133, %c0_134] : memref<1x8x128xf32, #tpu.memory_space<vmem>>, vector<1x8x128xf32>
    %279 = vector.shape_cast %278 : vector<1x8x128xf32> to vector<8x128xf32>
    %280 = vector.shape_cast %277 : vector<8x128xf32> to vector<1x8x128xf32>
    tpu.vector_store %arg17[%c0_132, %c0_133, %c0_134], %280 {strides = array<i32>} : memref<1x8x128xf32, #tpu.memory_space<vmem>>, vector<1x8x128xf32>,
    return
  }
  func.func @transform_0(%arg0: i32) -> (i32, i32, i32) {
    %c0_i32 = arith.constant 0 : i32
    %c0_i32_0 = arith.constant 0 : i32
    %c0_i32_1 = arith.constant 0 : i32
    return %arg0, %c0_i32, %c0_i32_0 : i32, i32, i32
  }
  func.func @transform_1(%arg0: i32) -> (i32, i32, i32) {
    %c0_i32 = arith.constant 0 : i32
    %c0_i32_0 = arith.constant 0 : i32
    %c0_i32_1 = arith.constant 0 : i32
    %c0_i32_2 = arith.constant 0 : i32
    return %c0_i32, %c0_i32_0, %c0_i32_1 : i32, i32, i32
  }
  func.func @transform_2(%arg0: i32) -> (i32, i32, i32) {
    %c0_i32 = arith.constant 0 : i32
    %c0_i32_0 = arith.constant 0 : i32
    %c0_i32_1 = arith.constant 0 : i32
    %c0_i32_2 = arith.constant 0 : i32
    return %c0_i32, %c0_i32_0, %c0_i32_1 : i32, i32, i32
  }
  func.func @transform_3(%arg0: i32) -> (i32, i32, i32) {
    %c0_i32 = arith.constant 0 : i32
    %c0_i32_0 = arith.constant 0 : i32
    %c0_i32_1 = arith.constant 0 : i32
    %c0_i32_2 = arith.constant 0 : i32
    return %c0_i32, %c0_i32_0, %c0_i32_1 : i32, i32, i32
  }
  func.func @transform_4(%arg0: i32) -> (i32, i32, i32) {
    %c0_i32 = arith.constant 0 : i32
    %c0_i32_0 = arith.constant 0 : i32
    %c0_i32_1 = arith.constant 0 : i32
    %c0_i32_2 = arith.constant 0 : i32
    return %c0_i32, %c0_i32_0, %c0_i32_1 : i32, i32, i32
  }
  func.func @transform_5(%arg0: i32) -> (i32, i32, i32) {
    %c0_i32 = arith.constant 0 : i32
    %c0_i32_0 = arith.constant 0 : i32
    %c0_i32_1 = arith.constant 0 : i32
    %c0_i32_2 = arith.constant 0 : i32
    return %c0_i32, %c0_i32_0, %c0_i32_1 : i32, i32, i32
  }
  func.func @transform_6(%arg0: i32) -> (i32, i32, i32) {
    %c0_i32 = arith.constant 0 : i32
    %c0_i32_0 = arith.constant 0 : i32
    %c0_i32_1 = arith.constant 0 : i32
    %c0_i32_2 = arith.constant 0 : i32
    return %c0_i32, %c0_i32_0, %c0_i32_1 : i32, i32, i32
  }
  func.func @transform_7(%arg0: i32) -> (i32, i32, i32) {
    %c0_i32 = arith.constant 0 : i32
    %c0_i32_0 = arith.constant 0 : i32
    %c0_i32_1 = arith.constant 0 : i32
    %c0_i32_2 = arith.constant 0 : i32
    return %c0_i32, %c0_i32_0, %c0_i32_1 : i32, i32, i32
  }
  func.func @transform_8(%arg0: i32) -> (i32, i32, i32) {
    %c0_i32 = arith.constant 0 : i32
    %c0_i32_0 = arith.constant 0 : i32
    %c0_i32_1 = arith.constant 0 : i32
    %c0_i32_2 = arith.constant 0 : i32
    return %c0_i32, %c0_i32_0, %c0_i32_1 : i32, i32, i32
  }
  func.func @transform_9(%arg0: i32) -> (i32, i32, i32) {
    %c0_i32 = arith.constant 0 : i32
    %c0_i32_0 = arith.constant 0 : i32
    %c0_i32_1 = arith.constant 0 : i32
    %c0_i32_2 = arith.constant 0 : i32
    return %c0_i32, %c0_i32_0, %c0_i32_1 : i32, i32, i32
  }
  func.func @transform_10(%arg0: i32) -> (i32, i32, i32) {
    %c0_i32 = arith.constant 0 : i32
    %c0_i32_0 = arith.constant 0 : i32
    %c0_i32_1 = arith.constant 0 : i32
    %c0_i32_2 = arith.constant 0 : i32
    return %c0_i32, %c0_i32_0, %c0_i32_1 : i32, i32, i32
  }
  func.func @transform_11(%arg0: i32) -> (i32, i32, i32) {
    %c0_i32 = arith.constant 0 : i32
    %c0_i32_0 = arith.constant 0 : i32
    %c0_i32_1 = arith.constant 0 : i32
    %c0_i32_2 = arith.constant 0 : i32
    return %c0_i32, %c0_i32_0, %c0_i32_1 : i32, i32, i32
  }
  func.func @transform_12(%arg0: i32) -> (i32, i32, i32) {
    %c0_i32 = arith.constant 0 : i32
    %c0_i32_0 = arith.constant 0 : i32
    %c0_i32_1 = arith.constant 0 : i32
    %c0_i32_2 = arith.constant 0 : i32
    return %c0_i32, %c0_i32_0, %c0_i32_1 : i32, i32, i32
  }
  func.func @transform_13(%arg0: i32) -> (i32, i32) {
    %c0_i32 = arith.constant 0 : i32
    %c0_i32_0 = arith.constant 0 : i32
    %c0_i32_1 = arith.constant 0 : i32
    return %c0_i32, %c0_i32_0 : i32, i32
  }
  func.func @transform_14(%arg0: i32) -> (i32, i32) {
    %c0_i32 = arith.constant 0 : i32
    %c0_i32_0 = arith.constant 0 : i32
    %c0_i32_1 = arith.constant 0 : i32
    return %c0_i32, %c0_i32_0 : i32, i32
  }
  func.func @transform_15(%arg0: i32) -> (i32, i32) {
    %c0_i32 = arith.constant 0 : i32
    %c0_i32_0 = arith.constant 0 : i32
    %c0_i32_1 = arith.constant 0 : i32
    return %c0_i32, %c0_i32_0 : i32, i32
  }
  func.func @transform_16(%arg0: i32) -> (i32, i32, i32) {
    %c0_i32 = arith.constant 0 : i32
    %c0_i32_0 = arith.constant 0 : i32
    %c0_i32_1 = arith.constant 0 : i32
    return %arg0, %c0_i32, %c0_i32_0 : i32, i32, i32
  }
}

</mosaic_0001>

<llo_original>
// kernel: tpu_custom_call.1
$region0: #{tpu_custom_call.1}
  #allocation0 [shape = 'u32[]', space=smem, size = 0x4, offset = 0x4, fixed_abs, tag = 'smem constant byte address 0x4 - core index']
  #allocation1 [shape = 'u32[144,128]{1,0:T(1,128)}', space=vmem, size = 0x12000, scoped, tag = 'internal scratch']
  %s0 = inlined_call_operand.hbm [shape: f32[2,8,128], index: 0, kind: input, shape index: {}]
  %s1 = inlined_call_operand.hbm [shape: f32[2,1,128], index: 1, kind: input, shape index: {}]
  %s2 = inlined_call_operand.hbm [shape: f32[2,1,128], index: 2, kind: input, shape index: {}]
  %s3 = inlined_call_operand.hbm [shape: f32[2,128,384], index: 3, kind: input, shape index: {}]
  %s4 = inlined_call_operand.vmem [shape: f32[2,1,384], index: 4, kind: input, shape index: {}]
  %s5 = inlined_call_operand.hbm [shape: f32[2,128,128], index: 5, kind: input, shape index: {}]
  %s6 = inlined_call_operand.vmem [shape: f32[2,1,128], index: 6, kind: input, shape index: {}]
  %s7 = inlined_call_operand.vmem [shape: f32[2,1,128], index: 7, kind: input, shape index: {}]
  %s8 = inlined_call_operand.vmem [shape: f32[2,1,128], index: 8, kind: input, shape index: {}]
  %s9 = inlined_call_operand.hbm [shape: f32[2,128,512], index: 9, kind: input, shape index: {}]
  %s10 = inlined_call_operand.vmem [shape: f32[2,1,512], index: 10, kind: input, shape index: {}]
  %s11 = inlined_call_operand.hbm [shape: f32[2,512,128], index: 11, kind: input, shape index: {}]
  %s12 = inlined_call_operand.vmem [shape: f32[2,1,128], index: 12, kind: input, shape index: {}]
  %s13 = inlined_call_operand.vmem [shape: f32[1,128], index: 13, kind: input, shape index: {}]
  %s14 = inlined_call_operand.vmem [shape: f32[1,128], index: 14, kind: input, shape index: {}]
  %s15 = inlined_call_operand.hbm [shape: f32[128,128], index: 15, kind: input, shape index: {}]
  %s16 = inlined_call_operand.hbm [shape: f32[2,8,128], index: 16, kind: output, shape index: {}]
  %s17 = sld [smem:[#allocation0]]
  $region129: #{tpu_custom_call.1} parent=0
    _
  %s19 = ssub.s32 1, %s17
  %s20 = scalar_select 0, %s19, %s17
  $region1: #{tpu_custom_call.1} parent=0
    #allocation2 [shape = 'u8[8192]{0}', space=vmem, size = 0x2000, scoped, tag = 'input window, operand 0']
    #allocation3 [shape = 's32[2]{0}', space=sflag, size = 0x8, scoped, tag = 'scoped memory for tpu_custom_call.1']
    #allocation4 [shape = 's32[2]{0}', space=sflag, size = 0x8, scoped, tag = 'scoped memory for tpu_custom_call.1']
    #allocation5 [shape = 'u8[1024]{0}', space=vmem, size = 0x400, scoped, tag = 'input window, operand 1, single buffered']
    #allocation6 [shape = 's32[1]{0}', space=sflag, size = 0x4, scoped, tag = 'scoped memory for tpu_custom_call.1']
    #allocation7 [shape = 'u8[1024]{0}', space=vmem, size = 0x400, scoped, tag = 'input window, operand 2, single buffered']
    #allocation8 [shape = 'u8[393216]{0}', space=vmem, size = 0x60000, scoped, tag = 'input window, operand 3, single buffered']
    #allocation9 [shape = 's32[1]{0}', space=sflag, size = 0x4, scoped, tag = 'scoped memory for tpu_custom_call.1']
    #allocation10 [shape = 'u8[131072]{0}', space=vmem, size = 0x20000, scoped, tag = 'input window, operand 5, single buffered']
    #allocation11 [shape = 'u8[524288]{0}', space=vmem, size = 0x80000, scoped, tag = 'input window, operand 9, single buffered']
    #allocation12 [shape = 's32[1]{0}', space=sflag, size = 0x4, scoped, tag = 'scoped memory for tpu_custom_call.1']
    #allocation13 [shape = 'u8[524288]{0}', space=vmem, size = 0x80000, scoped, tag = 'input window, operand 11, single buffered']
    #allocation14 [shape = 'u8[65536]{0}', space=vmem, size = 0x10000, scoped, tag = 'input window, operand 15, single buffered']
    #allocation15 [shape = 's32[1]{0}', space=sflag, size = 0x4, scoped, tag = 'scoped memory for tpu_custom_call.1']
    #allocation16 [shape = 'u8[8192]{0}', space=vmem, size = 0x2000, scoped, tag = 'output window, operand 0']
    %21 = vsyncpa [#allocation3], 0
    %s22 = scalar_lea.sflag [#allocation3], 1
    %23 = vsyncpa %s22, 0
    %24 = vsyncpa [#allocation6], 0
    %25 = vsyncpa [#allocation9], 0
    %26 = vsyncpa [#allocation12], 0
    %27 = vsyncpa [#allocation15], 0
    %28 = vsyncpa [#allocation4], 0
    %s29 = scalar_lea.sflag [#allocation4], 1
    %30 = vsyncpa %s29, 0
    loop: start=0, step=1, limit=4
    $region2: #{tpu_custom_call.1} parent=1 // loop_pre_header
      _
    $region3: #{tpu_custom_call.1} parent=1 // loop_header
      %s32 = sphi 0, %s36
      %p33 = scmp.ge.s32.totalorder %s32, 4
      %s42 = sphi 0, %s44
      %s45 = sphi 0, %s42
      %s46 = sphi 0, %s45
      %s62 = sphi 0, %s46
      %s66 = sphi 0, %s66
      %s68 = sphi 0, %s66
      %s69 = sphi 0, %s68
      %s83 = sphi 0, %s69
      %s87 = sphi 0, %s87
      %s89 = sphi 0, %s87
      %s90 = sphi 0, %s89
      %s104 = sphi 0, %s90
      %s108 = sphi 0, %s108
      %s110 = sphi 0, %s108
      %s111 = sphi 0, %s110
      %s125 = sphi 0, %s111
      %s129 = sphi 0, %s129
      %s131 = sphi 0, %s129
      %s132 = sphi 0, %s131
      %s146 = sphi 0, %s132
      %s150 = sphi 0, %s150
      %s152 = sphi 0, %s150
      %s153 = sphi 0, %s152
      %s167 = sphi 0, %s153
      %s171 = sphi 0, %s171
      %s173 = sphi 0, %s171
      %s174 = sphi 0, %s173
      %s188 = sphi 0, %s174
      %s192 = sphi 0, %s192
      %s194 = sphi 0, %s192
      %s195 = sphi 0, %s194
      %s209 = sphi 0, %s195
      %s213 = sphi 0, %s213
      %s215 = sphi 0, %s213
      %s216 = sphi 0, %s215
      %s230 = sphi 0, %s216
      %s234 = sphi 0, %s234
      %s236 = sphi 0, %s234
      %s237 = sphi 0, %s236
      %s251 = sphi 0, %s237
      %s255 = sphi 0, %s255
      %s257 = sphi 0, %s255
      %s258 = sphi 0, %s257
      %s272 = sphi 0, %s258
      %s276 = sphi 0, %s276
      %s278 = sphi 0, %s276
      %s279 = sphi 0, %s278
      %s293 = sphi 0, %s279
      %s297 = sphi 0, %s297
      %s299 = sphi 0, %s297
      %s300 = sphi 0, %s299
      %s314 = sphi 0, %s300
      %s318 = sphi 0, %s318
      %s320 = sphi 0, %s318
      %s321 = sphi 0, %s320
      %s335 = sphi 0, %s321
      %s339 = sphi 0, %s339
      %s341 = sphi 0, %s339
      %s342 = sphi 0, %s341
      %s356 = sphi 0, %s342
      %s360 = sphi 0, %s360
      %s362 = sphi 0, %s360
      %s363 = sphi 0, %s362
      %s377 = sphi 0, %s363
      %s383 = sphi 0, %s385
      %s386 = sphi 0, %s383
      %s387 = sphi 0, %s386
      %s403 = sphi 0, %s387
    $region4: #{tpu_custom_call.1} parent=1 // loop_header_branch
      %35 = sbr.rel (%p33) target = $region8
    $region5: #{tpu_custom_call.1} parent=1 // loop_body
      %s37 = ssub.s32 %s32, 1
      %s38 = ssub.s32 %s32, 2
      %s39 = sadd.s32 %s32, 1
      %s40 = ssub.s32 %s32, %s39
      %p41 = scmp.eq.s32.totalorder %s40, 0
      %s43 = sadd.s32 %s42, 1
      %s44 = scalar_select %p41, %s42, %s43
      %p47 = pneg %p41
      %p48 = scmp.eq.s32.totalorder %s32, 1
      %p49 = por %p47, %p48
      %p50 = scmp.ne.s32.totalorder %s42, %s45
      %p51 = scmp.eq.s32.totalorder %s32, 0
      %p52 = por %p50, %p51
      %p53 = scmp.ne.s32.totalorder %s42, %s45
      %p54 = scmp.eq.s32.totalorder %s37, 1
      %p55 = por %p53, %p54
      %p56 = scmp.ne.s32.totalorder %s45, %s46
      %p57 = scmp.eq.s32.totalorder %s37, 0
      %p58 = por %p56, %p57
      %p59 = scmp.ne.s32.totalorder %s45, %s46
      %p60 = scmp.eq.s32.totalorder %s38, 1
      %p61 = por %p59, %p60
      %p63 = scmp.ne.s32.totalorder %s46, %s62
      %p64 = scmp.eq.s32.totalorder %s38, 0
      %p65 = por %p63, %p64
      %s67 = sadd.s32 %s66, 1
      %p70 = scmp.eq.s32.totalorder %s32, 1
      %p71 = scmp.ne.s32.totalorder %s66, %s68
      %p72 = scmp.eq.s32.totalorder %s32, 0
      %p73 = por %p71, %p72
      %p74 = scmp.ne.s32.totalorder %s66, %s68
      %p75 = scmp.eq.s32.totalorder %s37, 1
      %p76 = por %p74, %p75
      %p77 = scmp.ne.s32.totalorder %s68, %s69
      %p78 = scmp.eq.s32.totalorder %s37, 0
      %p79 = por %p77, %p78
      %p80 = scmp.ne.s32.totalorder %s68, %s69
      %p81 = scmp.eq.s32.totalorder %s38, 1
      %p82 = por %p80, %p81
      %p84 = scmp.ne.s32.totalorder %s69, %s83
      %p85 = scmp.eq.s32.totalorder %s38, 0
      %p86 = por %p84, %p85
      %s88 = sadd.s32 %s87, 1
      %p91 = scmp.eq.s32.totalorder %s32, 1
      %p92 = scmp.ne.s32.totalorder %s87, %s89
      %p93 = scmp.eq.s32.totalorder %s32, 0
      %p94 = por %p92, %p93
      %p95 = scmp.ne.s32.totalorder %s87, %s89
      %p96 = scmp.eq.s32.totalorder %s37, 1
      %p97 = por %p95, %p96
      %p98 = scmp.ne.s32.totalorder %s89, %s90
      %p99 = scmp.eq.s32.totalorder %s37, 0
      %p100 = por %p98, %p99
      %p101 = scmp.ne.s32.totalorder %s89, %s90
      %p102 = scmp.eq.s32.totalorder %s38, 1
      %p103 = por %p101, %p102
      %p105 = scmp.ne.s32.totalorder %s90, %s104
      %p106 = scmp.eq.s32.totalorder %s38, 0
      %p107 = por %p105, %p106
      %s109 = sadd.s32 %s108, 1
      %p112 = scmp.eq.s32.totalorder %s32, 1
      %p113 = scmp.ne.s32.totalorder %s108, %s110
      %p114 = scmp.eq.s32.totalorder %s32, 0
      %p115 = por %p113, %p114
      %p116 = scmp.ne.s32.totalorder %s108, %s110
      %p117 = scmp.eq.s32.totalorder %s37, 1
      %p118 = por %p116, %p117
      %p119 = scmp.ne.s32.totalorder %s110, %s111
      %p120 = scmp.eq.s32.totalorder %s37, 0
      %p121 = por %p119, %p120
      %p122 = scmp.ne.s32.totalorder %s110, %s111
      %p123 = scmp.eq.s32.totalorder %s38, 1
      %p124 = por %p122, %p123
      %p126 = scmp.ne.s32.totalorder %s111, %s125
      %p127 = scmp.eq.s32.totalorder %s38, 0
      %p128 = por %p126, %p127
      %s130 = sadd.s32 %s129, 1
      %p133 = scmp.eq.s32.totalorder %s32, 1
      %p134 = scmp.ne.s32.totalorder %s129, %s131
      %p135 = scmp.eq.s32.totalorder %s32, 0
      %p136 = por %p134, %p135
      %p137 = scmp.ne.s32.totalorder %s129, %s131
      %p138 = scmp.eq.s32.totalorder %s37, 1
      %p139 = por %p137, %p138
      %p140 = scmp.ne.s32.totalorder %s131, %s132
      %p141 = scmp.eq.s32.totalorder %s37, 0
      %p142 = por %p140, %p141
      %p143 = scmp.ne.s32.totalorder %s131, %s132
      %p144 = scmp.eq.s32.totalorder %s38, 1
      %p145 = por %p143, %p144
      %p147 = scmp.ne.s32.totalorder %s132, %s146
      %p148 = scmp.eq.s32.totalorder %s38, 0
      %p149 = por %p147, %p148
      %s151 = sadd.s32 %s150, 1
      %p154 = scmp.eq.s32.totalorder %s32, 1
      %p155 = scmp.ne.s32.totalorder %s150, %s152
      %p156 = scmp.eq.s32.totalorder %s32, 0
      %p157 = por %p155, %p156
      %p158 = scmp.ne.s32.totalorder %s150, %s152
      %p159 = scmp.eq.s32.totalorder %s37, 1
      %p160 = por %p158, %p159
      %p161 = scmp.ne.s32.totalorder %s152, %s153
      %p162 = scmp.eq.s32.totalorder %s37, 0
      %p163 = por %p161, %p162
      %p164 = scmp.ne.s32.totalorder %s152, %s153
      %p165 = scmp.eq.s32.totalorder %s38, 1
      %p166 = por %p164, %p165
      %p168 = scmp.ne.s32.totalorder %s153, %s167
      %p169 = scmp.eq.s32.totalorder %s38, 0
      %p170 = por %p168, %p169
      %s172 = sadd.s32 %s171, 1
      %p175 = scmp.eq.s32.totalorder %s32, 1
      %p176 = scmp.ne.s32.totalorder %s171, %s173
      %p177 = scmp.eq.s32.totalorder %s32, 0
      %p178 = por %p176, %p177
      %p179 = scmp.ne.s32.totalorder %s171, %s173
      %p180 = scmp.eq.s32.totalorder %s37, 1
      %p181 = por %p179, %p180
      %p182 = scmp.ne.s32.totalorder %s173, %s174
      %p183 = scmp.eq.s32.totalorder %s37, 0
      %p184 = por %p182, %p183
      %p185 = scmp.ne.s32.totalorder %s173, %s174
      %p186 = scmp.eq.s32.totalorder %s38, 1
      %p187 = por %p185, %p186
      %p189 = scmp.ne.s32.totalorder %s174, %s188
      %p190 = scmp.eq.s32.totalorder %s38, 0
      %p191 = por %p189, %p190
      %s193 = sadd.s32 %s192, 1
      %p196 = scmp.eq.s32.totalorder %s32, 1
      %p197 = scmp.ne.s32.totalorder %s192, %s194
      %p198 = scmp.eq.s32.totalorder %s32, 0
      %p199 = por %p197, %p198
      %p200 = scmp.ne.s32.totalorder %s192, %s194
      %p201 = scmp.eq.s32.totalorder %s37, 1
      %p202 = por %p200, %p201
      %p203 = scmp.ne.s32.totalorder %s194, %s195
      %p204 = scmp.eq.s32.totalorder %s37, 0
      %p205 = por %p203, %p204
      %p206 = scmp.ne.s32.totalorder %s194, %s195
      %p207 = scmp.eq.s32.totalorder %s38, 1
      %p208 = por %p206, %p207
      %p210 = scmp.ne.s32.totalorder %s195, %s209
      %p211 = scmp.eq.s32.totalorder %s38, 0
      %p212 = por %p210, %p211
      %s214 = sadd.s32 %s213, 1
      %p217 = scmp.eq.s32.totalorder %s32, 1
      %p218 = scmp.ne.s32.totalorder %s213, %s215
      %p219 = scmp.eq.s32.totalorder %s32, 0
      %p220 = por %p218, %p219
      %p221 = scmp.ne.s32.totalorder %s213, %s215
      %p222 = scmp.eq.s32.totalorder %s37, 1
      %p223 = por %p221, %p222
      %p224 = scmp.ne.s32.totalorder %s215, %s216
      %p225 = scmp.eq.s32.totalorder %s37, 0
      %p226 = por %p224, %p225
      %p227 = scmp.ne.s32.totalorder %s215, %s216
      %p228 = scmp.eq.s32.totalorder %s38, 1
      %p229 = por %p227, %p228
      %p231 = scmp.ne.s32.totalorder %s216, %s230
      %p232 = scmp.eq.s32.totalorder %s38, 0
      %p233 = por %p231, %p232
      %s235 = sadd.s32 %s234, 1
      %p238 = scmp.eq.s32.totalorder %s32, 1
      %p239 = scmp.ne.s32.totalorder %s234, %s236
      %p240 = scmp.eq.s32.totalorder %s32, 0
      %p241 = por %p239, %p240
      %p242 = scmp.ne.s32.totalorder %s234, %s236
      %p243 = scmp.eq.s32.totalorder %s37, 1
      %p244 = por %p242, %p243
      %p245 = scmp.ne.s32.totalorder %s236, %s237
      %p246 = scmp.eq.s32.totalorder %s37, 0
      %p247 = por %p245, %p246
      %p248 = scmp.ne.s32.totalorder %s236, %s237
      %p249 = scmp.eq.s32.totalorder %s38, 1
      %p250 = por %p248, %p249
      %p252 = scmp.ne.s32.totalorder %s237, %s251
      %p253 = scmp.eq.s32.totalorder %s38, 0
      %p254 = por %p252, %p253
      %s256 = sadd.s32 %s255, 1
      %p259 = scmp.eq.s32.totalorder %s32, 1
      %p260 = scmp.ne.s32.totalorder %s255, %s257
      %p261 = scmp.eq.s32.totalorder %s32, 0
      %p262 = por %p260, %p261
      %p263 = scmp.ne.s32.totalorder %s255, %s257
      %p264 = scmp.eq.s32.totalorder %s37, 1
      %p265 = por %p263, %p264
      %p266 = scmp.ne.s32.totalorder %s257, %s258
      %p267 = scmp.eq.s32.totalorder %s37, 0
      %p268 = por %p266, %p267
      %p269 = scmp.ne.s32.totalorder %s257, %s258
      %p270 = scmp.eq.s32.totalorder %s38, 1
      %p271 = por %p269, %p270
      %p273 = scmp.ne.s32.totalorder %s258, %s272
      %p274 = scmp.eq.s32.totalorder %s38, 0
      %p275 = por %p273, %p274
      %s277 = sadd.s32 %s276, 1
      %p280 = scmp.eq.s32.totalorder %s32, 1
      %p281 = scmp.ne.s32.totalorder %s276, %s278
      %p282 = scmp.eq.s32.totalorder %s32, 0
      %p283 = por %p281, %p282
      %p284 = scmp.ne.s32.totalorder %s276, %s278
      %p285 = scmp.eq.s32.totalorder %s37, 1
      %p286 = por %p284, %p285
      %p287 = scmp.ne.s32.totalorder %s278, %s279
      %p288 = scmp.eq.s32.totalorder %s37, 0
      %p289 = por %p287, %p288
      %p290 = scmp.ne.s32.totalorder %s278, %s279
      %p291 = scmp.eq.s32.totalorder %s38, 1
      %p292 = por %p290, %p291
      %p294 = scmp.ne.s32.totalorder %s279, %s293
      %p295 = scmp.eq.s32.totalorder %s38, 0
      %p296 = por %p294, %p295
      %s298 = sadd.s32 %s297, 1
      %p301 = scmp.eq.s32.totalorder %s32, 1
      %p302 = scmp.ne.s32.totalorder %s297, %s299
      %p303 = scmp.eq.s32.totalorder %s32, 0
      %p304 = por %p302, %p303
      %p305 = scmp.ne.s32.totalorder %s297, %s299
      %p306 = scmp.eq.s32.totalorder %s37, 1
      %p307 = por %p305, %p306
      %p308 = scmp.ne.s32.totalorder %s299, %s300
      %p309 = scmp.eq.s32.totalorder %s37, 0
      %p310 = por %p308, %p309
      %p311 = scmp.ne.s32.totalorder %s299, %s300
      %p312 = scmp.eq.s32.totalorder %s38, 1
      %p313 = por %p311, %p312
      %p315 = scmp.ne.s32.totalorder %s300, %s314
      %p316 = scmp.eq.s32.totalorder %s38, 0
      %p317 = por %p315, %p316
      %s319 = sadd.s32 %s318, 1
      %p322 = scmp.eq.s32.totalorder %s32, 1
      %p323 = scmp.ne.s32.totalorder %s318, %s320
      %p324 = scmp.eq.s32.totalorder %s32, 0
      %p325 = por %p323, %p324
      %p326 = scmp.ne.s32.totalorder %s318, %s320
      %p327 = scmp.eq.s32.totalorder %s37, 1
      %p328 = por %p326, %p327
      %p329 = scmp.ne.s32.totalorder %s320, %s321
      %p330 = scmp.eq.s32.totalorder %s37, 0
      %p331 = por %p329, %p330
      %p332 = scmp.ne.s32.totalorder %s320, %s321
      %p333 = scmp.eq.s32.totalorder %s38, 1
      %p334 = por %p332, %p333
      %p336 = scmp.ne.s32.totalorder %s321, %s335
      %p337 = scmp.eq.s32.totalorder %s38, 0
      %p338 = por %p336, %p337
      %s340 = sadd.s32 %s339, 1
      %p343 = scmp.eq.s32.totalorder %s32, 1
      %p344 = scmp.ne.s32.totalorder %s339, %s341
      %p345 = scmp.eq.s32.totalorder %s32, 0
      %p346 = por %p344, %p345
      %p347 = scmp.ne.s32.totalorder %s339, %s341
      %p348 = scmp.eq.s32.totalorder %s37, 1
      %p349 = por %p347, %p348
      %p350 = scmp.ne.s32.totalorder %s341, %s342
      %p351 = scmp.eq.s32.totalorder %s37, 0
      %p352 = por %p350, %p351
      %p353 = scmp.ne.s32.totalorder %s341, %s342
      %p354 = scmp.eq.s32.totalorder %s38, 1
      %p355 = por %p353, %p354
      %p357 = scmp.ne.s32.totalorder %s342, %s356
      %p358 = scmp.eq.s32.totalorder %s38, 0
      %p359 = por %p357, %p358
      %s361 = sadd.s32 %s360, 1
      %p364 = scmp.eq.s32.totalorder %s32, 1
      %p365 = scmp.ne.s32.totalorder %s360, %s362
      %p366 = scmp.eq.s32.totalorder %s32, 0
      %p367 = por %p365, %p366
      %p368 = scmp.ne.s32.totalorder %s360, %s362
      %p369 = scmp.eq.s32.totalorder %s37, 1
      %p370 = por %p368, %p369
      %p371 = scmp.ne.s32.totalorder %s362, %s363
      %p372 = scmp.eq.s32.totalorder %s37, 0
      %p373 = por %p371, %p372
      %p374 = scmp.ne.s32.totalorder %s362, %s363
      %p375 = scmp.eq.s32.totalorder %s38, 1
      %p376 = por %p374, %p375
      %p378 = scmp.ne.s32.totalorder %s363, %s377
      %p379 = scmp.eq.s32.totalorder %s38, 0
      %p380 = por %p378, %p379
      %s381 = ssub.s32 %s32, %s39
      %p382 = scmp.eq.s32.totalorder %s381, 0
      %s384 = sadd.s32 %s383, 1
      %s385 = scalar_select %p382, %s383, %s384
      %p388 = pneg %p382
      %p389 = scmp.eq.s32.totalorder %s32, 1
      %p390 = por %p388, %p389
      %p391 = scmp.ne.s32.totalorder %s383, %s386
      %p392 = scmp.eq.s32.totalorder %s32, 0
      %p393 = por %p391, %p392
      %p394 = scmp.ne.s32.totalorder %s383, %s386
      %p395 = scmp.eq.s32.totalorder %s37, 1
      %p396 = por %p394, %p395
      %p397 = scmp.ne.s32.totalorder %s386, %s387
      %p398 = scmp.eq.s32.totalorder %s37, 0
      %p399 = por %p397, %p398
      %p400 = scmp.ne.s32.totalorder %s386, %s387
      %p401 = scmp.eq.s32.totalorder %s38, 1
      %p402 = por %p400, %p401
      %p404 = scmp.ne.s32.totalorder %s387, %s403
      %p405 = scmp.eq.s32.totalorder %s38, 0
      %p406 = por %p404, %p405
      %p407 = scmp.le.s32.totalorder 1, %s32
      %p408 = scmp.lt.s32.totalorder %s32, 3
      %p409 = pnand %p407, %p408
      %p410 = pneg %p409
      // Predicated region
      $region9: #{tpu_custom_call.1} parent=5 // pred_check
        _
      $region10: #{tpu_custom_call.1} parent=5 // pred_check_branch
        %412 = sbr.rel (%p409) target = $region12
      $region11: #{tpu_custom_call.1} parent=5 // pred_region
        %s413 = ssub.s32 %s32, 1
        // Predicated region
        $region13: #{tpu_custom_call.1} parent=11 // pred_check
          %p414 = pneg %p79
        $region14: #{tpu_custom_call.1} parent=11 // pred_check_branch
          %416 = sbr.rel (%p414) target = $region16
        $region15: #{tpu_custom_call.1} parent=11 // pred_region
          %s418 = ssub.s32 32, 32
          %419 = vsyncadd [#allocation6], %s418
          %s420 = sshll.u32 [#allocation5], 4
          %s421 = int_to_ptr.vmem [resolvable:$true] %s420
          %426 = dma.hbm_to_vmem [thread:$0]  %s1, 32, %s421, [#allocation6], 16, 16, 1
        $region16: #{tpu_custom_call.1} parent=11 // pred_fallthru
          _
        // Predicated region
        $region17: #{tpu_custom_call.1} parent=11 // pred_check
          %p427 = pneg %p100
        $region18: #{tpu_custom_call.1} parent=11 // pred_check_branch
          %429 = sbr.rel (%p427) target = $region20
        $region19: #{tpu_custom_call.1} parent=11 // pred_region
          %s431 = ssub.s32 32, 32
          %432 = vsyncadd [#allocation6], %s431
          %s433 = sshll.u32 [#allocation7], 4
          %s434 = int_to_ptr.vmem [resolvable:$true] %s433
          %439 = dma.hbm_to_vmem [thread:$0]  %s2, 32, %s434, [#allocation6], 16, 16, 1
        $region20: #{tpu_custom_call.1} parent=11 // pred_fallthru
          _
        // Predicated region
        $region21: #{tpu_custom_call.1} parent=11 // pred_check
          %p440 = pneg %p121
        $region22: #{tpu_custom_call.1} parent=11 // pred_check_branch
          %442 = sbr.rel (%p440) target = $region24
        $region23: #{tpu_custom_call.1} parent=11 // pred_region
          %s444 = ssub.s32 12288, 12288
          %445 = vsyncadd [#allocation9], %s444
          %s446 = sshll.u32 [#allocation8], 4
          %s447 = int_to_ptr.vmem [resolvable:$true] %s446
          %452 = dma.hbm_to_vmem [thread:$0]  %s3, 12288, %s447, [#allocation9], 384, 384, 24
        $region24: #{tpu_custom_call.1} parent=11 // pred_fallthru
          _
        // Predicated region
        $region25: #{tpu_custom_call.1} parent=11 // pred_check
          %p453 = pneg %p142
        $region26: #{tpu_custom_call.1} parent=11 // pred_check_branch
          %455 = sbr.rel (%p453) target = $region28
        $region27: #{tpu_custom_call.1} parent=11 // pred_region
          _
        $region28: #{tpu_custom_call.1} parent=11 // pred_fallthru
          _
        // Predicated region
        $region29: #{tpu_custom_call.1} parent=11 // pred_check
          %p456 = pneg %p163
        $region30: #{tpu_custom_call.1} parent=11 // pred_check_branch
          %458 = sbr.rel (%p456) target = $region32
        $region31: #{tpu_custom_call.1} parent=11 // pred_region
          %s460 = ssub.s32 4096, 4096
          %461 = vsyncadd [#allocation9], %s460
          %s462 = sshll.u32 [#allocation10], 4
          %s463 = int_to_ptr.vmem [resolvable:$true] %s462
          %468 = dma.hbm_to_vmem [thread:$0]  %s5, 4096, %s463, [#allocation9], 128, 128, 8
        $region32: #{tpu_custom_call.1} parent=11 // pred_fallthru
          _
        // Predicated region
        $region33: #{tpu_custom_call.1} parent=11 // pred_check
          %p469 = pneg %p184
        $region34: #{tpu_custom_call.1} parent=11 // pred_check_branch
          %471 = sbr.rel (%p469) target = $region36
        $region35: #{tpu_custom_call.1} parent=11 // pred_region
          _
        $region36: #{tpu_custom_call.1} parent=11 // pred_fallthru
          _
        // Predicated region
        $region37: #{tpu_custom_call.1} parent=11 // pred_check
          %p472 = pneg %p205
        $region38: #{tpu_custom_call.1} parent=11 // pred_check_branch
          %474 = sbr.rel (%p472) target = $region40
        $region39: #{tpu_custom_call.1} parent=11 // pred_region
          _
        $region40: #{tpu_custom_call.1} parent=11 // pred_fallthru
          _
        // Predicated region
        $region41: #{tpu_custom_call.1} parent=11 // pred_check
          %p475 = pneg %p226
        $region42: #{tpu_custom_call.1} parent=11 // pred_check_branch
          %477 = sbr.rel (%p475) target = $region44
        $region43: #{tpu_custom_call.1} parent=11 // pred_region
          _
        $region44: #{tpu_custom_call.1} parent=11 // pred_fallthru
          _
        // Predicated region
        $region45: #{tpu_custom_call.1} parent=11 // pred_check
          %p478 = pneg %p247
        $region46: #{tpu_custom_call.1} parent=11 // pred_check_branch
          %480 = sbr.rel (%p478) target = $region48
        $region47: #{tpu_custom_call.1} parent=11 // pred_region
          %s482 = ssub.s32 16384, 16384
          %483 = vsyncadd [#allocation12], %s482
          %s484 = sshll.u32 [#allocation11], 4
          %s485 = int_to_ptr.vmem [resolvable:$true] %s484
          %490 = dma.hbm_to_vmem [thread:$0]  %s9, 16384, %s485, [#allocation12], 512, 512, 32
        $region48: #{tpu_custom_call.1} parent=11 // pred_fallthru
          _
        // Predicated region
        $region49: #{tpu_custom_call.1} parent=11 // pred_check
          %p491 = pneg %p268
        $region50: #{tpu_custom_call.1} parent=11 // pred_check_branch
          %493 = sbr.rel (%p491) target = $region52
        $region51: #{tpu_custom_call.1} parent=11 // pred_region
          _
        $region52: #{tpu_custom_call.1} parent=11 // pred_fallthru
          _
        // Predicated region
        $region53: #{tpu_custom_call.1} parent=11 // pred_check
          %p494 = pneg %p289
        $region54: #{tpu_custom_call.1} parent=11 // pred_check_branch
          %496 = sbr.rel (%p494) target = $region56
        $region55: #{tpu_custom_call.1} parent=11 // pred_region
          %s498 = ssub.s32 16384, 16384
          %499 = vsyncadd [#allocation12], %s498
          %s500 = sshll.u32 [#allocation13], 4
          %s501 = int_to_ptr.vmem [resolvable:$true] %s500
          %506 = dma.hbm_to_vmem [thread:$0]  %s11, 16384, %s501, [#allocation12], 128, 128, 8
        $region56: #{tpu_custom_call.1} parent=11 // pred_fallthru
          _
        // Predicated region
        $region57: #{tpu_custom_call.1} parent=11 // pred_check
          %p507 = pneg %p310
        $region58: #{tpu_custom_call.1} parent=11 // pred_check_branch
          %509 = sbr.rel (%p507) target = $region60
        $region59: #{tpu_custom_call.1} parent=11 // pred_region
          _
        $region60: #{tpu_custom_call.1} parent=11 // pred_fallthru
          _
        // Predicated region
        $region61: #{tpu_custom_call.1} parent=11 // pred_check
          %p510 = pneg %p331
        $region62: #{tpu_custom_call.1} parent=11 // pred_check_branch
          %512 = sbr.rel (%p510) target = $region64
        $region63: #{tpu_custom_call.1} parent=11 // pred_region
          _
        $region64: #{tpu_custom_call.1} parent=11 // pred_fallthru
          _
        // Predicated region
        $region65: #{tpu_custom_call.1} parent=11 // pred_check
          %p513 = pneg %p352
        $region66: #{tpu_custom_call.1} parent=11 // pred_check_branch
          %515 = sbr.rel (%p513) target = $region68
        $region67: #{tpu_custom_call.1} parent=11 // pred_region
          _
        $region68: #{tpu_custom_call.1} parent=11 // pred_fallthru
          _
        // Predicated region
        $region69: #{tpu_custom_call.1} parent=11 // pred_check
          %p516 = pneg %p373
        $region70: #{tpu_custom_call.1} parent=11 // pred_check_branch
          %518 = sbr.rel (%p516) target = $region72
        $region71: #{tpu_custom_call.1} parent=11 // pred_region
          %s520 = ssub.s32 2048, 2048
          %521 = vsyncadd [#allocation15], %s520
          %s522 = sshll.u32 [#allocation14], 4
          %s523 = int_to_ptr.vmem [resolvable:$true] %s522
          %528 = dma.hbm_to_vmem [thread:$0]  %s15, 2048, %s523, [#allocation15], 128, 128, 8
        $region72: #{tpu_custom_call.1} parent=11 // pred_fallthru
          _
      $region12: #{tpu_custom_call.1} parent=5 // pred_fallthru
        _
      %p529 = scmp.lt.s32.totalorder %s32, 2
      // Predicated region
      $region73: #{tpu_custom_call.1} parent=5 // pred_check
        %p530 = pneg %p529
      $region74: #{tpu_custom_call.1} parent=5 // pred_check_branch
        %532 = sbr.rel (%p530) target = $region76
      $region75: #{tpu_custom_call.1} parent=5 // pred_region
        // Predicated region
        $region77: #{tpu_custom_call.1} parent=75 // pred_check
          %p533 = pneg %p52
        $region78: #{tpu_custom_call.1} parent=75 // pred_check_branch
          %535 = sbr.rel (%p533) target = $region80
        $region79: #{tpu_custom_call.1} parent=75 // pred_region
          %s536 = sand.u32 %s42, 1
          %s537 = scalar_lea.sflag [#allocation3], %s536
          %s538 = sand.u32 %s42, 1
          %s539 = smul.addr %s538, 8
          %s540 = scalar_lea.vmem [#allocation2], %s539
          %s542 = ssub.s32 128, 128
          %543 = vsyncadd %s537, %s542
          %s544 = smul.addr %s32, 128
          %s545 = scalar_lea.hbm %s0, %s544
          %s547 = sshll.u32 %s540, 4
          %s548 = int_to_ptr.vmem [resolvable:$true] %s547
          %550 = dma.hbm_to_vmem [thread:$0]  %s545, 128, %s548, %s537
        $region80: #{tpu_custom_call.1} parent=75 // pred_fallthru
          _
      $region76: #{tpu_custom_call.1} parent=5 // pred_fallthru
        _
      %p551 = scmp.le.s32.totalorder 1, %s32
      %p552 = scmp.lt.s32.totalorder %s32, 3
      %p553 = pnand %p551, %p552
      %p554 = pneg %p553
      // Predicated region
      $region81: #{tpu_custom_call.1} parent=5 // pred_check
        _
      $region82: #{tpu_custom_call.1} parent=5 // pred_check_branch
        %556 = sbr.rel (%p553) target = $region84
      $region83: #{tpu_custom_call.1} parent=5 // pred_region
        %s557 = ssub.s32 %s32, 1
        %s558 = sand.u32 %s45, 1
        %s559 = scalar_lea.sflag [#allocation3], %s558
        %s560 = sand.u32 %s45, 1
        %s561 = smul.addr %s560, 8
        %s562 = scalar_lea.vmem [#allocation2], %s561
        // Predicated region
        $region85: #{tpu_custom_call.1} parent=83 // pred_check
          %p563 = pneg %p58
        $region86: #{tpu_custom_call.1} parent=83 // pred_check_branch
          %565 = sbr.rel (%p563) target = $region88
        $region87: #{tpu_custom_call.1} parent=83 // pred_region
          %566 = dma.done %s559, 128
        $region88: #{tpu_custom_call.1} parent=83 // pred_fallthru
          _
        // Predicated region
        $region89: #{tpu_custom_call.1} parent=83 // pred_check
          %p567 = pneg %p79
        $region90: #{tpu_custom_call.1} parent=83 // pred_check_branch
          %569 = sbr.rel (%p567) target = $region92
        $region91: #{tpu_custom_call.1} parent=83 // pred_region
          %570 = dma.done [#allocation6], 32
        $region92: #{tpu_custom_call.1} parent=83 // pred_fallthru
          _
        // Predicated region
        $region93: #{tpu_custom_call.1} parent=83 // pred_check
          %p571 = pneg %p100
        $region94: #{tpu_custom_call.1} parent=83 // pred_check_branch
          %573 = sbr.rel (%p571) target = $region96
        $region95: #{tpu_custom_call.1} parent=83 // pred_region
          %574 = dma.done [#allocation6], 32
        $region96: #{tpu_custom_call.1} parent=83 // pred_fallthru
          _
        // Predicated region
        $region97: #{tpu_custom_call.1} parent=83 // pred_check
          %p575 = pneg %p121
        $region98: #{tpu_custom_call.1} parent=83 // pred_check_branch
          %577 = sbr.rel (%p575) target = $region100
        $region99: #{tpu_custom_call.1} parent=83 // pred_region
          %578 = dma.done [#allocation9], 12288
        $region100: #{tpu_custom_call.1} parent=83 // pred_fallthru
          _
        // Predicated region
        $region101: #{tpu_custom_call.1} parent=83 // pred_check
          %p579 = pneg %p163
        $region102: #{tpu_custom_call.1} parent=83 // pred_check_branch
          %581 = sbr.rel (%p579) target = $region104
        $region103: #{tpu_custom_call.1} parent=83 // pred_region
          %582 = dma.done [#allocation9], 4096
        $region104: #{tpu_custom_call.1} parent=83 // pred_fallthru
          _
        // Predicated region
        $region105: #{tpu_custom_call.1} parent=83 // pred_check
          %p583 = pneg %p247
        $region106: #{tpu_custom_call.1} parent=83 // pred_check_branch
          %585 = sbr.rel (%p583) target = $region108
        $region107: #{tpu_custom_call.1} parent=83 // pred_region
          %586 = dma.done [#allocation12], 16384
        $region108: #{tpu_custom_call.1} parent=83 // pred_fallthru
          _
        // Predicated region
        $region109: #{tpu_custom_call.1} parent=83 // pred_check
          %p587 = pneg %p289
        $region110: #{tpu_custom_call.1} parent=83 // pred_check_branch
          %589 = sbr.rel (%p587) target = $region112
        $region111: #{tpu_custom_call.1} parent=83 // pred_region
          %590 = dma.done [#allocation12], 16384
        $region112: #{tpu_custom_call.1} parent=83 // pred_fallthru
          _
        // Predicated region
        $region113: #{tpu_custom_call.1} parent=83 // pred_check
          %p591 = pneg %p373
        $region114: #{tpu_custom_call.1} parent=83 // pred_check_branch
          %593 = sbr.rel (%p591) target = $region116
        $region115: #{tpu_custom_call.1} parent=83 // pred_region
          %594 = dma.done [#allocation15], 2048
        $region116: #{tpu_custom_call.1} parent=83 // pred_fallthru
          _
        %s595 = sand.u32 %s45, 1
        %s596 = scalar_lea.sflag [#allocation3], %s595
        %s597 = sand.u32 %s45, 1
        %s598 = smul.addr %s597, 8
        %s599 = scalar_lea.vmem [#allocation2], %s598
        %p600 = pneg %p58
        %p601 = pneg %p55
        %p602 = pneg %p79
        %p603 = pneg %p76
        %p604 = pneg %p100
        %p605 = pneg %p97
        %p606 = pneg %p121
        %p607 = pneg %p118
        %p608 = pneg %p142
        %p609 = pneg %p139
        %p610 = pneg %p163
        %p611 = pneg %p160
        %p612 = pneg %p184
        %p613 = pneg %p181
        %p614 = pneg %p205
        %p615 = pneg %p202
        %p616 = pneg %p226
        %p617 = pneg %p223
        %p618 = pneg %p247
        %p619 = pneg %p244
        %p620 = pneg %p268
        %p621 = pneg %p265
        %p622 = pneg %p289
        %p623 = pneg %p286
        %p624 = pneg %p310
        %p625 = pneg %p307
        %p626 = pneg %p331
        %p627 = pneg %p328
        %p628 = pneg %p352
        %p629 = pneg %p349
        %p630 = pneg %p373
        %p631 = pneg %p370
        %p632 = pneg %p399
        %p633 = pneg %p396
        %s634 = sand.u32 %s386, 1
        %s635 = scalar_lea.sflag [#allocation4], %s634
        %s636 = sand.u32 %s386, 1
        %s637 = smul.addr %s636, 8
        %s638 = scalar_lea.vmem [#allocation16], %s637
        %v639 = vld [vmem:[%s562] sm:$0xff]
        %v640 = vlaneseq
        %v641 = vshrl.u32 %v640, 7
        %v642 = vlaneseq
        %v643 = vand.u32 %v642, 127
        %vm644 = vcmp.le.s32.totalorder %v643, %v641
        %v645 = vld [vmem:[#allocation5] sm:$0x1]
        %v646 = vld [vmem:[#allocation7] sm:$0x1]
        %647 = vadd.xlane.f32.xlu0 %v639
        %v648 = vpop.xlane.xlu0 %647
        %v649 = vrcp.pop 128.0
        %v650 = vmul.f32 %v648, %v649
        %v651 = vsub.f32 %v639, %v650
        %v652 = vmul.f32 %v651, %v651
        %653 = vadd.xlane.f32.xlu0 %v652
        %v654 = vpop.xlane.xlu0 %653
        %v655 = vmul.f32 %v654, %v649
        %v656 = vadd.f32 %v655, 1e-05
        %v657 = vrsqrt.pop %v656
        %v658 = vmul.f32 %v651, %v657
        %v660 = vlaneseq
        %v661 = vshrl.u32 %v660, 7
        %v662 = vsub.s32 0, %v661
        %v663 = vrot.slane %v645, %v662
        %v665 = vmul.f32 %v658, %v663
        %v667 = vlaneseq
        %v668 = vshrl.u32 %v667, 7
        %v669 = vsub.s32 0, %v668
        %v670 = vrot.slane %v646, %v669
        %v672 = vadd.f32 %v665, %v670
        %v673 = vld [vmem:[#allocation8] sm:$0xff]
        %v674 = vld [vmem:[#allocation8 + $0x8] sm:$0xff]
        %v675 = vld [vmem:[#allocation8 + $0x10] sm:$0xff]
        %v676 = vld [vmem:[#allocation8 + $0x18] sm:$0xff]
        %v677 = vld [vmem:[#allocation8 + $0x20] sm:$0xff]
        %v678 = vld [vmem:[#allocation8 + $0x28] sm:$0xff]
        %v679 = vld [vmem:[#allocation8 + $0x30] sm:$0xff]
        %v680 = vld [vmem:[#allocation8 + $0x38] sm:$0xff]
        %v681 = vld [vmem:[#allocation8 + $0x40] sm:$0xff]
        %v682 = vld [vmem:[#allocation8 + $0x48] sm:$0xff]
        %v683 = vld [vmem:[#allocation8 + $0x50] sm:$0xff]
        %v684 = vld [vmem:[#allocation8 + $0x58] sm:$0xff]
        %v685 = vld [vmem:[#allocation8 + $0x60] sm:$0xff]
        %v686 = vld [vmem:[#allocation8 + $0x68] sm:$0xff]
        %v687 = vld [vmem:[#allocation8 + $0x70] sm:$0xff]
        %v688 = vld [vmem:[#allocation8 + $0x78] sm:$0xff]
        %v689 = vld [vmem:[#allocation8 + $0x80] sm:$0xff]
        %v690 = vld [vmem:[#allocation8 + $0x88] sm:$0xff]
        %v691 = vld [vmem:[#allocation8 + $0x90] sm:$0xff]
        %v692 = vld [vmem:[#allocation8 + $0x98] sm:$0xff]
        %v693 = vld [vmem:[#allocation8 + $0xa0] sm:$0xff]
        %v694 = vld [vmem:[#allocation8 + $0xa8] sm:$0xff]
        %v695 = vld [vmem:[#allocation8 + $0xb0] sm:$0xff]
        %v696 = vld [vmem:[#allocation8 + $0xb8] sm:$0xff]
        %v697 = vld [vmem:[#allocation8 + $0xc0] sm:$0xff]
        %v698 = vld [vmem:[#allocation8 + $0xc8] sm:$0xff]
        %v699 = vld [vmem:[#allocation8 + $0xd0] sm:$0xff]
        %v700 = vld [vmem:[#allocation8 + $0xd8] sm:$0xff]
        %v701 = vld [vmem:[#allocation8 + $0xe0] sm:$0xff]
        %v702 = vld [vmem:[#allocation8 + $0xe8] sm:$0xff]
        %v703 = vld [vmem:[#allocation8 + $0xf0] sm:$0xff]
        %v704 = vld [vmem:[#allocation8 + $0xf8] sm:$0xff]
        %v705 = vld [vmem:[#allocation8 + $0x100] sm:$0xff]
        %v706 = vld [vmem:[#allocation8 + $0x108] sm:$0xff]
        %v707 = vld [vmem:[#allocation8 + $0x110] sm:$0xff]
        %v708 = vld [vmem:[#allocation8 + $0x118] sm:$0xff]
        %v709 = vld [vmem:[#allocation8 + $0x120] sm:$0xff]
        %v710 = vld [vmem:[#allocation8 + $0x128] sm:$0xff]
        %v711 = vld [vmem:[#allocation8 + $0x130] sm:$0xff]
        %v712 = vld [vmem:[#allocation8 + $0x138] sm:$0xff]
        %v713 = vld [vmem:[#allocation8 + $0x140] sm:$0xff]
        %v714 = vld [vmem:[#allocation8 + $0x148] sm:$0xff]
        %v715 = vld [vmem:[#allocation8 + $0x150] sm:$0xff]
        %v716 = vld [vmem:[#allocation8 + $0x158] sm:$0xff]
        %v717 = vld [vmem:[#allocation8 + $0x160] sm:$0xff]
        %v718 = vld [vmem:[#allocation8 + $0x168] sm:$0xff]
        %v719 = vld [vmem:[#allocation8 + $0x170] sm:$0xff]
        %v720 = vld [vmem:[#allocation8 + $0x178] sm:$0xff]
        %v721 = vld [vmem:[%s4] sm:$0x7]
        %v723 = vlaneseq
        %v724 = vshrl.u32 %v723, 7
        %v725 = vsub.s32 0, %v724
        %v726 = vrot.slane %v721, %v725
        %v727 = vlaneseq
        %v728 = vshrl.u32 %v727, 7
        %v729 = vsub.s32 1, %v728
        %v730 = vrot.slane %v721, %v729
        %v731 = vlaneseq
        %v732 = vshrl.u32 %v731, 7
        %v733 = vsub.s32 2, %v732
        %v734 = vrot.slane %v721, %v733
        %738 = vmatprep.subr.mxu0 %v674
        %739 = vmatpush1.msra.mxu0 %v673
        %740 = vmatprep.subr.mxu0 %v677
        %741 = vmatpush1.msra.mxu0 %v676
        %742 = vmatprep.subr.mxu0 %v680
        %743 = vmatpush1.msra.mxu0 %v679
        %744 = vmatprep.subr.mxu0 %v683
        %745 = vmatpush1.msra.mxu0 %v682
        %746 = vmatprep.subr.mxu0 %v686
        %747 = vmatpush1.msra.mxu0 %v685
        %748 = vmatprep.subr.mxu0 %v689
        %749 = vmatpush1.msra.mxu0 %v688
        %750 = vmatprep.subr.mxu0 %v692
        %751 = vmatpush1.msra.mxu0 %v691
        %752 = vmatprep.subr.mxu0 %v695
        %753 = vmatpush1.msra.mxu0 %v694
        %754 = vmatprep.subr.mxu0 %v698
        %755 = vmatpush1.msra.mxu0 %v697
        %756 = vmatprep.subr.mxu0 %v701
        %757 = vmatpush1.msra.mxu0 %v700
        %758 = vmatprep.subr.mxu0 %v704
        %759 = vmatpush1.msra.mxu0 %v703
        %760 = vmatprep.subr.mxu0 %v707
        %761 = vmatpush1.msra.mxu0 %v706
        %762 = vmatprep.subr.mxu0 %v710
        %763 = vmatpush1.msra.mxu0 %v709
        %764 = vmatprep.subr.mxu0 %v713
        %765 = vmatpush1.msra.mxu0 %v712
        %766 = vmatprep.subr.mxu0 %v716
        %767 = vmatpush1.msra.mxu0 %v715
        %768 = vmatprep.subr.mxu0 %v719
        %769 = vmatpush1.msra.mxu0 %v718
        %770 = vmatprep.subr.mxu0 0.0
        %771 = vmatpush1.msra.mxu0 0.0
        %772 = vmatprep.subr.mxu0 0.0
        %773 = vmatpush1.msra.mxu0 0.0
        %774 = vmatprep.subr.mxu0 0.0
        %775 = vmatpush1.msra.mxu0 0.0
        %776 = vmatprep.subr.mxu0 0.0
        %777 = vmatpush1.msra.mxu0 0.0
        %778 = vmatprep.subr.mxu0 0.0
        %779 = vmatpush1.msra.mxu0 0.0
        %780 = vmatprep.subr.mxu0 0.0
        %781 = vmatpush1.msra.mxu0 0.0
        %782 = vmatprep.subr.mxu0 0.0
        %783 = vmatpush1.msra.mxu0 0.0
        %784 = vmatprep.subr.mxu0 0.0
        %785 = vmatpush1.msra.mxu0 0.0
        %786 = vmatprep.subr.mxu0 0.0
        %787 = vmatpush1.msra.mxu0 0.0
        %788 = vmatprep.subr.mxu0 0.0
        %789 = vmatpush1.msra.mxu0 0.0
        %790 = vmatprep.subr.mxu0 0.0
        %791 = vmatpush1.msra.mxu0 0.0
        %792 = vmatprep.subr.mxu0 0.0
        %793 = vmatpush1.msra.mxu0 0.0
        %794 = vmatprep.subr.mxu0 0.0
        %795 = vmatpush1.msra.mxu0 0.0
        %796 = vmatprep.subr.mxu0 0.0
        %797 = vmatpush1.msra.mxu0 0.0
        %798 = vmatprep.subr.mxu0 0.0
        %799 = vmatpush1.msra.mxu0 0.0
        %800 = vmatprep.subr.mxu0 0.0
        %801 = vmatpush1.msra.mxu0 0.0
        %802 = vmatprep.mubr.f32.mxu0 0.0
        %803 = vmatmul.mubr.f32.gmra.mrb[0].mxu0 %v672
        %v804 = vpop.f32.mrb[0].mxu0
        %v805 = vadd.f32 %v726, %v804
        %v806 = vpop.f32.mrb[0].mxu0
        %v807 = vadd.f32 %v730, %v806
        %808 = vdwg.mxu0
        %809 = vmatprep.subr.mxu0 0.0
        %810 = vmatpush1.msra.mxu0 %v675
        %811 = vmatprep.subr.mxu0 0.0
        %812 = vmatpush1.msra.mxu0 %v678
        %813 = vmatprep.subr.mxu0 0.0
        %814 = vmatpush1.msra.mxu0 %v681
        %815 = vmatprep.subr.mxu0 0.0
        %816 = vmatpush1.msra.mxu0 %v684
        %817 = vmatprep.subr.mxu0 0.0
        %818 = vmatpush1.msra.mxu0 %v687
        %819 = vmatprep.subr.mxu0 0.0
        %820 = vmatpush1.msra.mxu0 %v690
        %821 = vmatprep.subr.mxu0 0.0
        %822 = vmatpush1.msra.mxu0 %v693
        %823 = vmatprep.subr.mxu0 0.0
        %824 = vmatpush1.msra.mxu0 %v696
        %825 = vmatprep.subr.mxu0 0.0
        %826 = vmatpush1.msra.mxu0 %v699
        %827 = vmatprep.subr.mxu0 0.0
        %828 = vmatpush1.msra.mxu0 %v702
        %829 = vmatprep.subr.mxu0 0.0
        %830 = vmatpush1.msra.mxu0 %v705
        %831 = vmatprep.subr.mxu0 0.0
        %832 = vmatpush1.msra.mxu0 %v708
        %833 = vmatprep.subr.mxu0 0.0
        %834 = vmatpush1.msra.mxu0 %v711
        %835 = vmatprep.subr.mxu0 0.0
        %836 = vmatpush1.msra.mxu0 %v714
        %837 = vmatprep.subr.mxu0 0.0
        %838 = vmatpush1.msra.mxu0 %v717
        %839 = vmatprep.subr.mxu0 0.0
        %840 = vmatpush1.msra.mxu0 %v720
        %841 = vmatprep.subr.mxu0 0.0
        %842 = vmatpush1.msra.mxu0 0.0
        %843 = vmatprep.subr.mxu0 0.0
        %844 = vmatpush1.msra.mxu0 0.0
        %845 = vmatprep.subr.mxu0 0.0
        %846 = vmatpush1.msra.mxu0 0.0
        %847 = vmatprep.subr.mxu0 0.0
        %848 = vmatpush1.msra.mxu0 0.0
        %849 = vmatprep.subr.mxu0 0.0
        %850 = vmatpush1.msra.mxu0 0.0
        %851 = vmatprep.subr.mxu0 0.0
        %852 = vmatpush1.msra.mxu0 0.0
        %853 = vmatprep.subr.mxu0 0.0
        %854 = vmatpush1.msra.mxu0 0.0
        %855 = vmatprep.subr.mxu0 0.0
        %856 = vmatpush1.msra.mxu0 0.0
        %857 = vmatprep.subr.mxu0 0.0
        %858 = vmatpush1.msra.mxu0 0.0
        %859 = vmatprep.subr.mxu0 0.0
        %860 = vmatpush1.msra.mxu0 0.0
        %861 = vmatprep.subr.mxu0 0.0
        %862 = vmatpush1.msra.mxu0 0.0
        %863 = vmatprep.subr.mxu0 0.0
        %864 = vmatpush1.msra.mxu0 0.0
        %865 = vmatprep.subr.mxu0 0.0
        %866 = vmatpush1.msra.mxu0 0.0
        %867 = vmatprep.subr.mxu0 0.0
        %868 = vmatpush1.msra.mxu0 0.0
        %869 = vmatprep.subr.mxu0 0.0
        %870 = vmatpush1.msra.mxu0 0.0
        %871 = vmatprep.subr.mxu0 0.0
        %872 = vmatpush1.msra.mxu0 0.0
        %873 = vmatprep.mubr.f32.mxu0 0.0
        %874 = vmatmul.mubr.f32.gmra.mrb[0].mxu0 %v672
        %v875 = vpop.f32.mrb[0].mxu0
        %v876 = vadd.f32 %v734, %v875
        %v877 = vpop.f32.mrb[0].mxu0
        %878 = vdwg.mxu0
        %880 = vrot.lane.b32.xlu0 %v805, 96
        %v881 = vpop.permute.xlu0 %880
        %883 = vrot.lane.b32.xlu0 %v805, 64
        %v884 = vpop.permute.xlu0 %883
        %886 = vrot.lane.b32.xlu0 %v805, 32
        %v887 = vpop.permute.xlu0 %886
        %v889 = vcombine.low %v805, %v884
        %v890 = vcombine.high %v805, %v884
        %v892 = vunpack.c.l.s4 1983009808
        %v893 = vunpack.c.0.s8 %v892
        %v894 = vlaneseq
        %v895 = vshrl.u32 %v894, 7
        %v896 = vsub.s32 %v893, %v895
        %v897 = vrot.slane %v889, %v896
        %v899 = vunpack.c.l.s4 1983009808
        %v900 = vunpack.c.0.s8 %v899
        %v901 = vlaneseq
        %v902 = vshrl.u32 %v901, 7
        %v903 = vsub.s32 %v900, %v902
        %v904 = vrot.slane %v890, %v903
        %v905 = vcombine.low %v881, %v887
        %v906 = vcombine.high %v881, %v887
        %v908 = vunpack.c.l.s4 1983009808
        %v909 = vunpack.c.0.s8 %v908
        %v910 = vlaneseq
        %v911 = vshrl.u32 %v910, 7
        %v912 = vsub.s32 %v909, %v911
        %v913 = vrot.slane %v905, %v912
        %v915 = vunpack.c.l.s4 1983009808
        %v916 = vunpack.c.0.s8 %v915
        %v917 = vlaneseq
        %v918 = vshrl.u32 %v917, 7
        %v919 = vsub.s32 %v916, %v918
        %v920 = vrot.slane %v906, %v919
        %v921 = vcombine.low %v897, %v913
        %v922 = vcombine.high %v897, %v913
        %v924 = vunpack.c.l.s4 1934713408
        %v925 = vunpack.c.0.s8 %v924
        %v926 = vlaneseq
        %v927 = vshrl.u32 %v926, 7
        %v928 = vsub.s32 %v925, %v927
        %v929 = vrot.slane %v921, %v928
        %v931 = vunpack.c.l.s4 1934713408
        %v932 = vunpack.c.0.s8 %v931
        %v933 = vlaneseq
        %v934 = vshrl.u32 %v933, 7
        %v935 = vsub.s32 %v932, %v934
        %v936 = vrot.slane %v922, %v935
        %v937 = vcombine.low %v904, %v920
        %v938 = vcombine.high %v904, %v920
        %v940 = vunpack.c.l.s4 1934713408
        %v941 = vunpack.c.0.s8 %v940
        %v942 = vlaneseq
        %v943 = vshrl.u32 %v942, 7
        %v944 = vsub.s32 %v941, %v943
        %v945 = vrot.slane %v937, %v944
        %v947 = vunpack.c.l.s4 1934713408
        %v948 = vunpack.c.0.s8 %v947
        %v949 = vlaneseq
        %v950 = vshrl.u32 %v949, 7
        %v951 = vsub.s32 %v948, %v950
        %v952 = vrot.slane %v938, %v951
        %v953 = vcombine.high %v929, 0.0
        %v954 = vcombine.high %v936, 0.0
        %v955 = vcombine.high %v945, 0.0
        %v956 = vcombine.high %v952, 0.0
        %v957 = vcombine.low %v929, %v936
        %v959 = vunpack.c.l.s4 1983009808
        %v960 = vunpack.c.0.s8 %v959
        %v961 = vlaneseq
        %v962 = vshrl.u32 %v961, 7
        %v963 = vsub.s32 %v960, %v962
        %v964 = vrot.slane %v957, %v963
        %v965 = vcombine.low %v953, %v954
        %v967 = vunpack.c.l.s4 1983009808
        %v968 = vunpack.c.0.s8 %v967
        %v969 = vlaneseq
        %v970 = vshrl.u32 %v969, 7
        %v971 = vsub.s32 %v968, %v970
        %v972 = vrot.slane %v965, %v971
        %v973 = vcombine.low %v945, %v952
        %v975 = vunpack.c.l.s4 1983009808
        %v976 = vunpack.c.0.s8 %v975
        %v977 = vlaneseq
        %v978 = vshrl.u32 %v977, 7
        %v979 = vsub.s32 %v976, %v978
        %v980 = vrot.slane %v973, %v979
        %v981 = vcombine.low %v955, %v956
        %v983 = vunpack.c.l.s4 1983009808
        %v984 = vunpack.c.0.s8 %v983
        %v985 = vlaneseq
        %v986 = vshrl.u32 %v985, 7
        %v987 = vsub.s32 %v984, %v986
        %v988 = vrot.slane %v981, %v987
        %v989 = vcombine.low %v964, %v972
        %v990 = vcombine.high %v964, %v972
        %v992 = vunpack.c.l.s4 1934713408
        %v993 = vunpack.c.0.s8 %v992
        %v994 = vlaneseq
        %v995 = vshrl.u32 %v994, 7
        %v996 = vsub.s32 %v993, %v995
        %v997 = vrot.slane %v989, %v996
        %v999 = vunpack.c.l.s4 1934713408
        %v1000 = vunpack.c.0.s8 %v999
        %v1001 = vlaneseq
        %v1002 = vshrl.u32 %v1001, 7
        %v1003 = vsub.s32 %v1000, %v1002
        %v1004 = vrot.slane %v990, %v1003
        %v1005 = vcombine.low %v980, %v988
        %v1006 = vcombine.high %v980, %v988
        %v1008 = vunpack.c.l.s4 1934713408
        %v1009 = vunpack.c.0.s8 %v1008
        %v1010 = vlaneseq
        %v1011 = vshrl.u32 %v1010, 7
        %v1012 = vsub.s32 %v1009, %v1011
        %v1013 = vrot.slane %v1005, %v1012
        %v1015 = vunpack.c.l.s4 1934713408
        %v1016 = vunpack.c.0.s8 %v1015
        %v1017 = vlaneseq
        %v1018 = vshrl.u32 %v1017, 7
        %v1019 = vsub.s32 %v1016, %v1018
        %v1020 = vrot.slane %v1006, %v1019
        %v1021 = vcombine.low %v997, %v1013
        %v1022 = vcombine.high %v997, %v1013
        %v1023 = vcombine.low %v1004, %v1020
        %v1024 = vcombine.high %v1004, %v1020
        %1026 = vrot.lane.b32.xlu0 %v807, 96
        %v1027 = vpop.permute.xlu0 %1026
        %1029 = vrot.lane.b32.xlu0 %v807, 64
        %v1030 = vpop.permute.xlu0 %1029
        %1032 = vrot.lane.b32.xlu0 %v807, 32
        %v1033 = vpop.permute.xlu0 %1032
        %v1035 = vcombine.low %v807, %v1030
        %v1036 = vcombine.high %v807, %v1030
        %v1038 = vunpack.c.l.s4 1983009808
        %v1039 = vunpack.c.0.s8 %v1038
        %v1040 = vlaneseq
        %v1041 = vshrl.u32 %v1040, 7
        %v1042 = vsub.s32 %v1039, %v1041
        %v1043 = vrot.slane %v1035, %v1042
        %v1045 = vunpack.c.l.s4 1983009808
        %v1046 = vunpack.c.0.s8 %v1045
        %v1047 = vlaneseq
        %v1048 = vshrl.u32 %v1047, 7
        %v1049 = vsub.s32 %v1046, %v1048
        %v1050 = vrot.slane %v1036, %v1049
        %v1051 = vcombine.low %v1027, %v1033
        %v1052 = vcombine.high %v1027, %v1033
        %v1054 = vunpack.c.l.s4 1983009808
        %v1055 = vunpack.c.0.s8 %v1054
        %v1056 = vlaneseq
        %v1057 = vshrl.u32 %v1056, 7
        %v1058 = vsub.s32 %v1055, %v1057
        %v1059 = vrot.slane %v1051, %v1058
        %v1061 = vunpack.c.l.s4 1983009808
        %v1062 = vunpack.c.0.s8 %v1061
        %v1063 = vlaneseq
        %v1064 = vshrl.u32 %v1063, 7
        %v1065 = vsub.s32 %v1062, %v1064
        %v1066 = vrot.slane %v1052, %v1065
        %v1067 = vcombine.low %v1043, %v1059
        %v1068 = vcombine.high %v1043, %v1059
        %v1070 = vunpack.c.l.s4 1934713408
        %v1071 = vunpack.c.0.s8 %v1070
        %v1072 = vlaneseq
        %v1073 = vshrl.u32 %v1072, 7
        %v1074 = vsub.s32 %v1071, %v1073
        %v1075 = vrot.slane %v1067, %v1074
        %v1077 = vunpack.c.l.s4 1934713408
        %v1078 = vunpack.c.0.s8 %v1077
        %v1079 = vlaneseq
        %v1080 = vshrl.u32 %v1079, 7
        %v1081 = vsub.s32 %v1078, %v1080
        %v1082 = vrot.slane %v1068, %v1081
        %v1083 = vcombine.low %v1050, %v1066
        %v1084 = vcombine.high %v1050, %v1066
        %v1086 = vunpack.c.l.s4 1934713408
        %v1087 = vunpack.c.0.s8 %v1086
        %v1088 = vlaneseq
        %v1089 = vshrl.u32 %v1088, 7
        %v1090 = vsub.s32 %v1087, %v1089
        %v1091 = vrot.slane %v1083, %v1090
        %v1093 = vunpack.c.l.s4 1934713408
        %v1094 = vunpack.c.0.s8 %v1093
        %v1095 = vlaneseq
        %v1096 = vshrl.u32 %v1095, 7
        %v1097 = vsub.s32 %v1094, %v1096
        %v1098 = vrot.slane %v1084, %v1097
        %v1099 = vcombine.high %v1075, 0.0
        %v1100 = vcombine.high %v1082, 0.0
        %v1101 = vcombine.high %v1091, 0.0
        %v1102 = vcombine.high %v1098, 0.0
        %v1103 = vcombine.low %v1075, %v1082
        %v1105 = vunpack.c.l.s4 1983009808
        %v1106 = vunpack.c.0.s8 %v1105
        %v1107 = vlaneseq
        %v1108 = vshrl.u32 %v1107, 7
        %v1109 = vsub.s32 %v1106, %v1108
        %v1110 = vrot.slane %v1103, %v1109
        %v1111 = vcombine.low %v1099, %v1100
        %v1113 = vunpack.c.l.s4 1983009808
        %v1114 = vunpack.c.0.s8 %v1113
        %v1115 = vlaneseq
        %v1116 = vshrl.u32 %v1115, 7
        %v1117 = vsub.s32 %v1114, %v1116
        %v1118 = vrot.slane %v1111, %v1117
        %v1119 = vcombine.low %v1091, %v1098
        %v1121 = vunpack.c.l.s4 1983009808
        %v1122 = vunpack.c.0.s8 %v1121
        %v1123 = vlaneseq
        %v1124 = vshrl.u32 %v1123, 7
        %v1125 = vsub.s32 %v1122, %v1124
        %v1126 = vrot.slane %v1119, %v1125
        %v1127 = vcombine.low %v1101, %v1102
        %v1129 = vunpack.c.l.s4 1983009808
        %v1130 = vunpack.c.0.s8 %v1129
        %v1131 = vlaneseq
        %v1132 = vshrl.u32 %v1131, 7
        %v1133 = vsub.s32 %v1130, %v1132
        %v1134 = vrot.slane %v1127, %v1133
        %v1135 = vcombine.low %v1110, %v1118
        %v1136 = vcombine.high %v1110, %v1118
        %v1138 = vunpack.c.l.s4 1934713408
        %v1139 = vunpack.c.0.s8 %v1138
        %v1140 = vlaneseq
        %v1141 = vshrl.u32 %v1140, 7
        %v1142 = vsub.s32 %v1139, %v1141
        %v1143 = vrot.slane %v1135, %v1142
        %v1145 = vunpack.c.l.s4 1934713408
        %v1146 = vunpack.c.0.s8 %v1145
        %v1147 = vlaneseq
        %v1148 = vshrl.u32 %v1147, 7
        %v1149 = vsub.s32 %v1146, %v1148
        %v1150 = vrot.slane %v1136, %v1149
        %v1151 = vcombine.low %v1126, %v1134
        %v1152 = vcombine.high %v1126, %v1134
        %v1154 = vunpack.c.l.s4 1934713408
        %v1155 = vunpack.c.0.s8 %v1154
        %v1156 = vlaneseq
        %v1157 = vshrl.u32 %v1156, 7
        %v1158 = vsub.s32 %v1155, %v1157
        %v1159 = vrot.slane %v1151, %v1158
        %v1161 = vunpack.c.l.s4 1934713408
        %v1162 = vunpack.c.0.s8 %v1161
        %v1163 = vlaneseq
        %v1164 = vshrl.u32 %v1163, 7
        %v1165 = vsub.s32 %v1162, %v1164
        %v1166 = vrot.slane %v1152, %v1165
        %v1167 = vcombine.low %v1143, %v1159
        %v1168 = vcombine.high %v1143, %v1159
        %v1169 = vcombine.low %v1150, %v1166
        %v1170 = vcombine.high %v1150, %v1166
        %1172 = vrot.lane.b32.xlu0 %v876, 96
        %v1173 = vpop.permute.xlu0 %1172
        %1175 = vrot.lane.b32.xlu0 %v876, 64
        %v1176 = vpop.permute.xlu0 %1175
        %1178 = vrot.lane.b32.xlu0 %v876, 32
        %v1179 = vpop.permute.xlu0 %1178
        %v1181 = vcombine.low %v876, %v1176
        %v1182 = vcombine.high %v876, %v1176
        %v1184 = vunpack.c.l.s4 1983009808
        %v1185 = vunpack.c.0.s8 %v1184
        %v1186 = vlaneseq
        %v1187 = vshrl.u32 %v1186, 7
        %v1188 = vsub.s32 %v1185, %v1187
        %v1189 = vrot.slane %v1181, %v1188
        %v1191 = vunpack.c.l.s4 1983009808
        %v1192 = vunpack.c.0.s8 %v1191
        %v1193 = vlaneseq
        %v1194 = vshrl.u32 %v1193, 7
        %v1195 = vsub.s32 %v1192, %v1194
        %v1196 = vrot.slane %v1182, %v1195
        %v1197 = vcombine.low %v1173, %v1179
        %v1198 = vcombine.high %v1173, %v1179
        %v1200 = vunpack.c.l.s4 1983009808
        %v1201 = vunpack.c.0.s8 %v1200
        %v1202 = vlaneseq
        %v1203 = vshrl.u32 %v1202, 7
        %v1204 = vsub.s32 %v1201, %v1203
        %v1205 = vrot.slane %v1197, %v1204
        %v1207 = vunpack.c.l.s4 1983009808
        %v1208 = vunpack.c.0.s8 %v1207
        %v1209 = vlaneseq
        %v1210 = vshrl.u32 %v1209, 7
        %v1211 = vsub.s32 %v1208, %v1210
        %v1212 = vrot.slane %v1198, %v1211
        %v1213 = vcombine.low %v1189, %v1205
        %v1214 = vcombine.high %v1189, %v1205
        %v1216 = vunpack.c.l.s4 1934713408
        %v1217 = vunpack.c.0.s8 %v1216
        %v1218 = vlaneseq
        %v1219 = vshrl.u32 %v1218, 7
        %v1220 = vsub.s32 %v1217, %v1219
        %v1221 = vrot.slane %v1213, %v1220
        %v1223 = vunpack.c.l.s4 1934713408
        %v1224 = vunpack.c.0.s8 %v1223
        %v1225 = vlaneseq
        %v1226 = vshrl.u32 %v1225, 7
        %v1227 = vsub.s32 %v1224, %v1226
        %v1228 = vrot.slane %v1214, %v1227
        %v1229 = vcombine.low %v1196, %v1212
        %v1230 = vcombine.high %v1196, %v1212
        %v1232 = vunpack.c.l.s4 1934713408
        %v1233 = vunpack.c.0.s8 %v1232
        %v1234 = vlaneseq
        %v1235 = vshrl.u32 %v1234, 7
        %v1236 = vsub.s32 %v1233, %v1235
        %v1237 = vrot.slane %v1229, %v1236
        %v1239 = vunpack.c.l.s4 1934713408
        %v1240 = vunpack.c.0.s8 %v1239
        %v1241 = vlaneseq
        %v1242 = vshrl.u32 %v1241, 7
        %v1243 = vsub.s32 %v1240, %v1242
        %v1244 = vrot.slane %v1230, %v1243
        %v1245 = vcombine.high %v1221, 0.0
        %v1246 = vcombine.high %v1228, 0.0
        %v1247 = vcombine.high %v1237, 0.0
        %v1248 = vcombine.high %v1244, 0.0
        %v1249 = vcombine.low %v1221, %v1228
        %v1251 = vunpack.c.l.s4 1983009808
        %v1252 = vunpack.c.0.s8 %v1251
        %v1253 = vlaneseq
        %v1254 = vshrl.u32 %v1253, 7
        %v1255 = vsub.s32 %v1252, %v1254
        %v1256 = vrot.slane %v1249, %v1255
        %v1257 = vcombine.low %v1245, %v1246
        %v1259 = vunpack.c.l.s4 1983009808
        %v1260 = vunpack.c.0.s8 %v1259
        %v1261 = vlaneseq
        %v1262 = vshrl.u32 %v1261, 7
        %v1263 = vsub.s32 %v1260, %v1262
        %v1264 = vrot.slane %v1257, %v1263
        %v1265 = vcombine.low %v1237, %v1244
        %v1267 = vunpack.c.l.s4 1983009808
        %v1268 = vunpack.c.0.s8 %v1267
        %v1269 = vlaneseq
        %v1270 = vshrl.u32 %v1269, 7
        %v1271 = vsub.s32 %v1268, %v1270
        %v1272 = vrot.slane %v1265, %v1271
        %v1273 = vcombine.low %v1247, %v1248
        %v1275 = vunpack.c.l.s4 1983009808
        %v1276 = vunpack.c.0.s8 %v1275
        %v1277 = vlaneseq
        %v1278 = vshrl.u32 %v1277, 7
        %v1279 = vsub.s32 %v1276, %v1278
        %v1280 = vrot.slane %v1273, %v1279
        %v1281 = vcombine.low %v1256, %v1264
        %v1282 = vcombine.high %v1256, %v1264
        %v1284 = vunpack.c.l.s4 1934713408
        %v1285 = vunpack.c.0.s8 %v1284
        %v1286 = vlaneseq
        %v1287 = vshrl.u32 %v1286, 7
        %v1288 = vsub.s32 %v1285, %v1287
        %v1289 = vrot.slane %v1281, %v1288
        %v1291 = vunpack.c.l.s4 1934713408
        %v1292 = vunpack.c.0.s8 %v1291
        %v1293 = vlaneseq
        %v1294 = vshrl.u32 %v1293, 7
        %v1295 = vsub.s32 %v1292, %v1294
        %v1296 = vrot.slane %v1282, %v1295
        %v1297 = vcombine.low %v1272, %v1280
        %v1298 = vcombine.high %v1272, %v1280
        %v1300 = vunpack.c.l.s4 1934713408
        %v1301 = vunpack.c.0.s8 %v1300
        %v1302 = vlaneseq
        %v1303 = vshrl.u32 %v1302, 7
        %v1304 = vsub.s32 %v1301, %v1303
        %v1305 = vrot.slane %v1297, %v1304
        %v1307 = vunpack.c.l.s4 1934713408
        %v1308 = vunpack.c.0.s8 %v1307
        %v1309 = vlaneseq
        %v1310 = vshrl.u32 %v1309, 7
        %v1311 = vsub.s32 %v1308, %v1310
        %v1312 = vrot.slane %v1298, %v1311
        %v1313 = vcombine.low %v1289, %v1305
        %v1314 = vcombine.high %v1289, %v1305
        %v1315 = vcombine.low %v1296, %v1312
        %v1316 = vcombine.high %v1296, %v1312
        %vm1317 = vcmask 261120
        %v1319 = vsel %vm1317, %v1021, 0
        %v1322 = vsel %vm1317, %v1167, 0
        %1324 = vmatprep.subr.mxu0 0.0
        %1325 = vmatpush1.xpose.msra.mxu0 %v1322
        %1326 = vmatprep.subr.mxu0 0.0
        %1327 = vmatpush1.xpose.msra.mxu0 0.0
        %1328 = vmatprep.subr.mxu0 0.0
        %1329 = vmatpush1.xpose.msra.mxu0 0.0
        %1330 = vmatprep.subr.mxu0 0.0
        %1331 = vmatpush1.xpose.msra.mxu0 0.0
        %1332 = vmatprep.subr.mxu0 0.0
        %1333 = vmatpush1.xpose.msra.mxu0 0.0
        %1334 = vmatprep.subr.mxu0 0.0
        %1335 = vmatpush1.xpose.msra.mxu0 0.0
        %1336 = vmatprep.subr.mxu0 0.0
        %1337 = vmatpush1.xpose.msra.mxu0 0.0
        %1338 = vmatprep.subr.mxu0 0.0
        %1339 = vmatpush1.xpose.msra.mxu0 0.0
        %1340 = vmatprep.subr.mxu0 0.0
        %1341 = vmatpush1.xpose.msra.mxu0 0.0
        %1342 = vmatprep.subr.mxu0 0.0
        %1343 = vmatpush1.xpose.msra.mxu0 0.0
        %1344 = vmatprep.subr.mxu0 0.0
        %1345 = vmatpush1.xpose.msra.mxu0 0.0
        %1346 = vmatprep.subr.mxu0 0.0
        %1347 = vmatpush1.xpose.msra.mxu0 0.0
        %1348 = vmatprep.subr.mxu0 0.0
        %1349 = vmatpush1.xpose.msra.mxu0 0.0
        %1350 = vmatprep.subr.mxu0 0.0
        %1351 = vmatpush1.xpose.msra.mxu0 0.0
        %1352 = vmatprep.subr.mxu0 0.0
        %1353 = vmatpush1.xpose.msra.mxu0 0.0
        %1354 = vmatprep.subr.mxu0 0.0
        %1355 = vmatpush1.xpose.msra.mxu0 0.0
        %1356 = vmatprep.subr.mxu0 0.0
        %1357 = vmatpush1.xpose.msra.mxu0 0.0
        %1358 = vmatprep.subr.mxu0 0.0
        %1359 = vmatpush1.xpose.msra.mxu0 0.0
        %1360 = vmatprep.subr.mxu0 0.0
        %1361 = vmatpush1.xpose.msra.mxu0 0.0
        %1362 = vmatprep.subr.mxu0 0.0
        %1363 = vmatpush1.xpose.msra.mxu0 0.0
        %1364 = vmatprep.subr.mxu0 0.0
        %1365 = vmatpush1.xpose.msra.mxu0 0.0
        %1366 = vmatprep.subr.mxu0 0.0
        %1367 = vmatpush1.xpose.msra.mxu0 0.0
        %1368 = vmatprep.subr.mxu0 0.0
        %1369 = vmatpush1.xpose.msra.mxu0 0.0
        %1370 = vmatprep.subr.mxu0 0.0
        %1371 = vmatpush1.xpose.msra.mxu0 0.0
        %1372 = vmatprep.subr.mxu0 0.0
        %1373 = vmatpush1.xpose.msra.mxu0 0.0
        %1374 = vmatprep.subr.mxu0 0.0
        %1375 = vmatpush1.xpose.msra.mxu0 0.0
        %1376 = vmatprep.subr.mxu0 0.0
        %1377 = vmatpush1.xpose.msra.mxu0 0.0
        %1378 = vmatprep.subr.mxu0 0.0
        %1379 = vmatpush1.xpose.msra.mxu0 0.0
        %1380 = vmatprep.subr.mxu0 0.0
        %1381 = vmatpush1.xpose.msra.mxu0 0.0
        %1382 = vmatprep.subr.mxu0 0.0
        %1383 = vmatpush1.xpose.msra.mxu0 0.0
        %1384 = vmatprep.subr.mxu0 0.0
        %1385 = vmatpush1.xpose.msra.mxu0 0.0
        %1386 = vmatprep.subr.mxu0 0.0
        %1387 = vmatpush1.xpose.msra.mxu0 0.0
        %1388 = vmatprep.mubr.f32.mxu0 0.0
        %1389 = vmatmul.mubr.f32.gmra.mrb[0].mxu0 %v1319
        %v1390 = vpop.f32.mrb[0].mxu0
        %v1391 = vadd.f32 0.0, %v1390
        %v1392 = vpop.f32.mrb[0].mxu0
        %1393 = vdwg.mxu0
        %v1395 = vsel %vm1317, %v1022, 0
        %v1398 = vsel %vm1317, %v1168, 0
        %1400 = vmatprep.subr.mxu0 0.0
        %1401 = vmatpush1.xpose.msra.mxu0 %v1398
        %1402 = vmatprep.subr.mxu0 0.0
        %1403 = vmatpush1.xpose.msra.mxu0 0.0
        %1404 = vmatprep.subr.mxu0 0.0
        %1405 = vmatpush1.xpose.msra.mxu0 0.0
        %1406 = vmatprep.subr.mxu0 0.0
        %1407 = vmatpush1.xpose.msra.mxu0 0.0
        %1408 = vmatprep.subr.mxu0 0.0
        %1409 = vmatpush1.xpose.msra.mxu0 0.0
        %1410 = vmatprep.subr.mxu0 0.0
        %1411 = vmatpush1.xpose.msra.mxu0 0.0
        %1412 = vmatprep.subr.mxu0 0.0
        %1413 = vmatpush1.xpose.msra.mxu0 0.0
        %1414 = vmatprep.subr.mxu0 0.0
        %1415 = vmatpush1.xpose.msra.mxu0 0.0
        %1416 = vmatprep.subr.mxu0 0.0
        %1417 = vmatpush1.xpose.msra.mxu0 0.0
        %1418 = vmatprep.subr.mxu0 0.0
        %1419 = vmatpush1.xpose.msra.mxu0 0.0
        %1420 = vmatprep.subr.mxu0 0.0
        %1421 = vmatpush1.xpose.msra.mxu0 0.0
        %1422 = vmatprep.subr.mxu0 0.0
        %1423 = vmatpush1.xpose.msra.mxu0 0.0
        %1424 = vmatprep.subr.mxu0 0.0
        %1425 = vmatpush1.xpose.msra.mxu0 0.0
        %1426 = vmatprep.subr.mxu0 0.0
        %1427 = vmatpush1.xpose.msra.mxu0 0.0
        %1428 = vmatprep.subr.mxu0 0.0
        %1429 = vmatpush1.xpose.msra.mxu0 0.0
        %1430 = vmatprep.subr.mxu0 0.0
        %1431 = vmatpush1.xpose.msra.mxu0 0.0
        %1432 = vmatprep.subr.mxu0 0.0
        %1433 = vmatpush1.xpose.msra.mxu0 0.0
        %1434 = vmatprep.subr.mxu0 0.0
        %1435 = vmatpush1.xpose.msra.mxu0 0.0
        %1436 = vmatprep.subr.mxu0 0.0
        %1437 = vmatpush1.xpose.msra.mxu0 0.0
        %1438 = vmatprep.subr.mxu0 0.0
        %1439 = vmatpush1.xpose.msra.mxu0 0.0
        %1440 = vmatprep.subr.mxu0 0.0
        %1441 = vmatpush1.xpose.msra.mxu0 0.0
        %1442 = vmatprep.subr.mxu0 0.0
        %1443 = vmatpush1.xpose.msra.mxu0 0.0
        %1444 = vmatprep.subr.mxu0 0.0
        %1445 = vmatpush1.xpose.msra.mxu0 0.0
        %1446 = vmatprep.subr.mxu0 0.0
        %1447 = vmatpush1.xpose.msra.mxu0 0.0
        %1448 = vmatprep.subr.mxu0 0.0
        %1449 = vmatpush1.xpose.msra.mxu0 0.0
        %1450 = vmatprep.subr.mxu0 0.0
        %1451 = vmatpush1.xpose.msra.mxu0 0.0
        %1452 = vmatprep.subr.mxu0 0.0
        %1453 = vmatpush1.xpose.msra.mxu0 0.0
        %1454 = vmatprep.subr.mxu0 0.0
        %1455 = vmatpush1.xpose.msra.mxu0 0.0
        %1456 = vmatprep.subr.mxu0 0.0
        %1457 = vmatpush1.xpose.msra.mxu0 0.0
        %1458 = vmatprep.subr.mxu0 0.0
        %1459 = vmatpush1.xpose.msra.mxu0 0.0
        %1460 = vmatprep.subr.mxu0 0.0
        %1461 = vmatpush1.xpose.msra.mxu0 0.0
        %1462 = vmatprep.subr.mxu0 0.0
        %1463 = vmatpush1.xpose.msra.mxu0 0.0
        %1464 = vmatprep.mubr.f32.mxu0 0.0
        %1465 = vmatmul.mubr.f32.gmra.mrb[0].mxu0 %v1395
        %v1466 = vpop.f32.mrb[0].mxu0
        %v1467 = vadd.f32 0.0, %v1466
        %v1468 = vpop.f32.mrb[0].mxu0
        %1469 = vdwg.mxu0
        %v1471 = vsel %vm1317, %v1023, 0
        %v1474 = vsel %vm1317, %v1169, 0
        %1476 = vmatprep.subr.mxu0 0.0
        %1477 = vmatpush1.xpose.msra.mxu0 %v1474
        %1478 = vmatprep.subr.mxu0 0.0
        %1479 = vmatpush1.xpose.msra.mxu0 0.0
        %1480 = vmatprep.subr.mxu0 0.0
        %1481 = vmatpush1.xpose.msra.mxu0 0.0
        %1482 = vmatprep.subr.mxu0 0.0
        %1483 = vmatpush1.xpose.msra.mxu0 0.0
        %1484 = vmatprep.subr.mxu0 0.0
        %1485 = vmatpush1.xpose.msra.mxu0 0.0
        %1486 = vmatprep.subr.mxu0 0.0
        %1487 = vmatpush1.xpose.msra.mxu0 0.0
        %1488 = vmatprep.subr.mxu0 0.0
        %1489 = vmatpush1.xpose.msra.mxu0 0.0
        %1490 = vmatprep.subr.mxu0 0.0
        %1491 = vmatpush1.xpose.msra.mxu0 0.0
        %1492 = vmatprep.subr.mxu0 0.0
        %1493 = vmatpush1.xpose.msra.mxu0 0.0
        %1494 = vmatprep.subr.mxu0 0.0
        %1495 = vmatpush1.xpose.msra.mxu0 0.0
        %1496 = vmatprep.subr.mxu0 0.0
        %1497 = vmatpush1.xpose.msra.mxu0 0.0
        %1498 = vmatprep.subr.mxu0 0.0
        %1499 = vmatpush1.xpose.msra.mxu0 0.0
        %1500 = vmatprep.subr.mxu0 0.0
        %1501 = vmatpush1.xpose.msra.mxu0 0.0
        %1502 = vmatprep.subr.mxu0 0.0
        %1503 = vmatpush1.xpose.msra.mxu0 0.0
        %1504 = vmatprep.subr.mxu0 0.0
        %1505 = vmatpush1.xpose.msra.mxu0 0.0
        %1506 = vmatprep.subr.mxu0 0.0
        %1507 = vmatpush1.xpose.msra.mxu0 0.0
        %1508 = vmatprep.subr.mxu0 0.0
        %1509 = vmatpush1.xpose.msra.mxu0 0.0
        %1510 = vmatprep.subr.mxu0 0.0
        %1511 = vmatpush1.xpose.msra.mxu0 0.0
        %1512 = vmatprep.subr.mxu0 0.0
        %1513 = vmatpush1.xpose.msra.mxu0 0.0
        %1514 = vmatprep.subr.mxu0 0.0
        %1515 = vmatpush1.xpose.msra.mxu0 0.0
        %1516 = vmatprep.subr.mxu0 0.0
        %1517 = vmatpush1.xpose.msra.mxu0 0.0
        %1518 = vmatprep.subr.mxu0 0.0
        %1519 = vmatpush1.xpose.msra.mxu0 0.0
        %1520 = vmatprep.subr.mxu0 0.0
        %1521 = vmatpush1.xpose.msra.mxu0 0.0
        %1522 = vmatprep.subr.mxu0 0.0
        %1523 = vmatpush1.xpose.msra.mxu0 0.0
        %1524 = vmatprep.subr.mxu0 0.0
        %1525 = vmatpush1.xpose.msra.mxu0 0.0
        %1526 = vmatprep.subr.mxu0 0.0
        %1527 = vmatpush1.xpose.msra.mxu0 0.0
        %1528 = vmatprep.subr.mxu0 0.0
        %1529 = vmatpush1.xpose.msra.mxu0 0.0
        %1530 = vmatprep.subr.mxu0 0.0
        %1531 = vmatpush1.xpose.msra.mxu0 0.0
        %1532 = vmatprep.subr.mxu0 0.0
        %1533 = vmatpush1.xpose.msra.mxu0 0.0
        %1534 = vmatprep.subr.mxu0 0.0
        %1535 = vmatpush1.xpose.msra.mxu0 0.0
        %1536 = vmatprep.subr.mxu0 0.0
        %1537 = vmatpush1.xpose.msra.mxu0 0.0
        %1538 = vmatprep.subr.mxu0 0.0
        %1539 = vmatpush1.xpose.msra.mxu0 0.0
        %1540 = vmatprep.mubr.f32.mxu0 0.0
        %1541 = vmatmul.mubr.f32.gmra.mrb[0].mxu0 %v1471
        %v1542 = vpop.f32.mrb[0].mxu0
        %v1543 = vadd.f32 0.0, %v1542
        %v1544 = vpop.f32.mrb[0].mxu0
        %1545 = vdwg.mxu0
        %v1547 = vsel %vm1317, %v1024, 0
        %v1550 = vsel %vm1317, %v1170, 0
        %1552 = vmatprep.subr.mxu0 0.0
        %1553 = vmatpush1.xpose.msra.mxu0 %v1550
        %1554 = vmatprep.subr.mxu0 0.0
        %1555 = vmatpush1.xpose.msra.mxu0 0.0
        %1556 = vmatprep.subr.mxu0 0.0
        %1557 = vmatpush1.xpose.msra.mxu0 0.0
        %1558 = vmatprep.subr.mxu0 0.0
        %1559 = vmatpush1.xpose.msra.mxu0 0.0
        %1560 = vmatprep.subr.mxu0 0.0
        %1561 = vmatpush1.xpose.msra.mxu0 0.0
        %1562 = vmatprep.subr.mxu0 0.0
        %1563 = vmatpush1.xpose.msra.mxu0 0.0
        %1564 = vmatprep.subr.mxu0 0.0
        %1565 = vmatpush1.xpose.msra.mxu0 0.0
        %1566 = vmatprep.subr.mxu0 0.0
        %1567 = vmatpush1.xpose.msra.mxu0 0.0
        %1568 = vmatprep.subr.mxu0 0.0
        %1569 = vmatpush1.xpose.msra.mxu0 0.0
        %1570 = vmatprep.subr.mxu0 0.0
        %1571 = vmatpush1.xpose.msra.mxu0 0.0
        %1572 = vmatprep.subr.mxu0 0.0
        %1573 = vmatpush1.xpose.msra.mxu0 0.0
        %1574 = vmatprep.subr.mxu0 0.0
        %1575 = vmatpush1.xpose.msra.mxu0 0.0
        %1576 = vmatprep.subr.mxu0 0.0
        %1577 = vmatpush1.xpose.msra.mxu0 0.0
        %1578 = vmatprep.subr.mxu0 0.0
        %1579 = vmatpush1.xpose.msra.mxu0 0.0
        %1580 = vmatprep.subr.mxu0 0.0
        %1581 = vmatpush1.xpose.msra.mxu0 0.0
        %1582 = vmatprep.subr.mxu0 0.0
        %1583 = vmatpush1.xpose.msra.mxu0 0.0
        %1584 = vmatprep.subr.mxu0 0.0
        %1585 = vmatpush1.xpose.msra.mxu0 0.0
        %1586 = vmatprep.subr.mxu0 0.0
        %1587 = vmatpush1.xpose.msra.mxu0 0.0
        %1588 = vmatprep.subr.mxu0 0.0
        %1589 = vmatpush1.xpose.msra.mxu0 0.0
        %1590 = vmatprep.subr.mxu0 0.0
        %1591 = vmatpush1.xpose.msra.mxu0 0.0
        %1592 = vmatprep.subr.mxu0 0.0
        %1593 = vmatpush1.xpose.msra.mxu0 0.0
        %1594 = vmatprep.subr.mxu0 0.0
        %1595 = vmatpush1.xpose.msra.mxu0 0.0
        %1596 = vmatprep.subr.mxu0 0.0
        %1597 = vmatpush1.xpose.msra.mxu0 0.0
        %1598 = vmatprep.subr.mxu0 0.0
        %1599 = vmatpush1.xpose.msra.mxu0 0.0
        %1600 = vmatprep.subr.mxu0 0.0
        %1601 = vmatpush1.xpose.msra.mxu0 0.0
        %1602 = vmatprep.subr.mxu0 0.0
        %1603 = vmatpush1.xpose.msra.mxu0 0.0
        %1604 = vmatprep.subr.mxu0 0.0
        %1605 = vmatpush1.xpose.msra.mxu0 0.0
        %1606 = vmatprep.subr.mxu0 0.0
        %1607 = vmatpush1.xpose.msra.mxu0 0.0
        %1608 = vmatprep.subr.mxu0 0.0
        %1609 = vmatpush1.xpose.msra.mxu0 0.0
        %1610 = vmatprep.subr.mxu0 0.0
        %1611 = vmatpush1.xpose.msra.mxu0 0.0
        %1612 = vmatprep.subr.mxu0 0.0
        %1613 = vmatpush1.xpose.msra.mxu0 0.0
        %1614 = vmatprep.subr.mxu0 0.0
        %1615 = vmatpush1.xpose.msra.mxu0 0.0
        %1616 = vmatprep.mubr.f32.mxu0 0.0
        %1617 = vmatmul.mubr.f32.gmra.mrb[0].mxu0 %v1547
        %v1618 = vpop.f32.mrb[0].mxu0
        %v1619 = vadd.f32 0.0, %v1618
        %v1620 = vpop.f32.mrb[0].mxu0
        %1621 = vdwg.mxu0
        %v1622 = vmul.f32 %v1391, 0.17677669
        %v1623 = vmul.f32 %v1467, 0.17677669
        %v1624 = vmul.f32 %v1543, 0.17677669
        %v1625 = vmul.f32 %v1619, 0.17677669
        %v1626 = vsel %vm644, 1, 0
        %vm1627 = vcmp.eq.s32.totalorder %v1626, 1
        %v1628 = vsel %vm1627, %v1622, -3.4028235e+38
        %v1629 = vsel %vm1627, %v1623, -3.4028235e+38
        %v1630 = vsel %vm1627, %v1624, -3.4028235e+38
        %v1631 = vsel %vm1627, %v1625, -3.4028235e+38
        %vm1632 = vcmask 64512
        %v1633 = vsel %vm1632, %v1628, -inf
        %1634 = vmax.xlane.f32.xlu0 %v1633
        %v1635 = vpop.xlane.xlu0 %1634
        %v1636 = vsel %vm1632, %v1629, -inf
        %1637 = vmax.xlane.f32.xlu0 %v1636
        %v1638 = vpop.xlane.xlu0 %1637
        %v1639 = vsel %vm1632, %v1630, -inf
        %1640 = vmax.xlane.f32.xlu0 %v1639
        %v1641 = vpop.xlane.xlu0 %1640
        %v1642 = vsel %vm1632, %v1631, -inf
        %1643 = vmax.xlane.f32.xlu0 %v1642
        %v1644 = vpop.xlane.xlu0 %1643
        %v1645 = vsub.f32 %v1628, %v1635
        %v1646 = vsub.f32 %v1629, %v1638
        %v1647 = vsub.f32 %v1630, %v1641
        %v1648 = vsub.f32 %v1631, %v1644
        %v1649 = vmul.f32 %v1645, 1.442695
        %v1650 = vpow.pop %v1649
        %v1651 = vmul.f32 %v1646, 1.442695
        %v1652 = vpow.pop %v1651
        %v1653 = vmul.f32 %v1647, 1.442695
        %v1654 = vpow.pop %v1653
        %v1655 = vmul.f32 %v1648, 1.442695
        %v1656 = vpow.pop %v1655
        %v1657 = vsel %vm1632, %v1650, 0.0
        %1658 = vadd.xlane.f32.xlu0 %v1657
        %v1659 = vpop.xlane.xlu0 %1658
        %v1660 = vsel %vm1632, %v1652, 0.0
        %1661 = vadd.xlane.f32.xlu0 %v1660
        %v1662 = vpop.xlane.xlu0 %1661
        %v1663 = vsel %vm1632, %v1654, 0.0
        %1664 = vadd.xlane.f32.xlu0 %v1663
        %v1665 = vpop.xlane.xlu0 %1664
        %v1666 = vsel %vm1632, %v1656, 0.0
        %1667 = vadd.xlane.f32.xlu0 %v1666
        %v1668 = vpop.xlane.xlu0 %1667
        %v1669 = vrcp.pop %v1659
        %v1670 = vmul.f32 %v1650, %v1669
        %v1671 = vrcp.pop %v1662
        %v1672 = vmul.f32 %v1652, %v1671
        %v1673 = vrcp.pop %v1665
        %v1674 = vmul.f32 %v1654, %v1673
        %v1675 = vrcp.pop %v1668
        %v1676 = vmul.f32 %v1656, %v1675
        %v1678 = vsel %vm1632, %v1670, 0
        %1680 = vmatprep.subr.mxu0 0.0
        %1681 = vmatpush1.msra.mxu0 %v1313
        %1682 = vmatprep.subr.mxu0 0.0
        %1683 = vmatpush1.msra.mxu0 0.0
        %1684 = vmatprep.subr.mxu0 0.0
        %1685 = vmatpush1.msra.mxu0 0.0
        %1686 = vmatprep.subr.mxu0 0.0
        %1687 = vmatpush1.msra.mxu0 0.0
        %1688 = vmatprep.subr.mxu0 0.0
        %1689 = vmatpush1.msra.mxu0 0.0
        %1690 = vmatprep.subr.mxu0 0.0
        %1691 = vmatpush1.msra.mxu0 0.0
        %1692 = vmatprep.subr.mxu0 0.0
        %1693 = vmatpush1.msra.mxu0 0.0
        %1694 = vmatprep.subr.mxu0 0.0
        %1695 = vmatpush1.msra.mxu0 0.0
        %1696 = vmatprep.subr.mxu0 0.0
        %1697 = vmatpush1.msra.mxu0 0.0
        %1698 = vmatprep.subr.mxu0 0.0
        %1699 = vmatpush1.msra.mxu0 0.0
        %1700 = vmatprep.subr.mxu0 0.0
        %1701 = vmatpush1.msra.mxu0 0.0
        %1702 = vmatprep.subr.mxu0 0.0
        %1703 = vmatpush1.msra.mxu0 0.0
        %1704 = vmatprep.subr.mxu0 0.0
        %1705 = vmatpush1.msra.mxu0 0.0
        %1706 = vmatprep.subr.mxu0 0.0
        %1707 = vmatpush1.msra.mxu0 0.0
        %1708 = vmatprep.subr.mxu0 0.0
        %1709 = vmatpush1.msra.mxu0 0.0
        %1710 = vmatprep.subr.mxu0 0.0
        %1711 = vmatpush1.msra.mxu0 0.0
        %1712 = vmatprep.subr.mxu0 0.0
        %1713 = vmatpush1.msra.mxu0 0.0
        %1714 = vmatprep.subr.mxu0 0.0
        %1715 = vmatpush1.msra.mxu0 0.0
        %1716 = vmatprep.subr.mxu0 0.0
        %1717 = vmatpush1.msra.mxu0 0.0
        %1718 = vmatprep.subr.mxu0 0.0
        %1719 = vmatpush1.msra.mxu0 0.0
        %1720 = vmatprep.subr.mxu0 0.0
        %1721 = vmatpush1.msra.mxu0 0.0
        %1722 = vmatprep.subr.mxu0 0.0
        %1723 = vmatpush1.msra.mxu0 0.0
        %1724 = vmatprep.subr.mxu0 0.0
        %1725 = vmatpush1.msra.mxu0 0.0
        %1726 = vmatprep.subr.mxu0 0.0
        %1727 = vmatpush1.msra.mxu0 0.0
        %1728 = vmatprep.subr.mxu0 0.0
        %1729 = vmatpush1.msra.mxu0 0.0
        %1730 = vmatprep.subr.mxu0 0.0
        %1731 = vmatpush1.msra.mxu0 0.0
        %1732 = vmatprep.subr.mxu0 0.0
        %1733 = vmatpush1.msra.mxu0 0.0
        %1734 = vmatprep.subr.mxu0 0.0
        %1735 = vmatpush1.msra.mxu0 0.0
        %1736 = vmatprep.subr.mxu0 0.0
        %1737 = vmatpush1.msra.mxu0 0.0
        %1738 = vmatprep.subr.mxu0 0.0
        %1739 = vmatpush1.msra.mxu0 0.0
        %1740 = vmatprep.subr.mxu0 0.0
        %1741 = vmatpush1.msra.mxu0 0.0
        %1742 = vmatprep.subr.mxu0 0.0
        %1743 = vmatpush1.msra.mxu0 0.0
        %1744 = vmatprep.mubr.f32.mxu0 0.0
        %1745 = vmatmul.mubr.f32.gmra.mrb[0].mxu0 %v1678
        %v1746 = vpop.f32.mrb[0].mxu0
        %v1747 = vadd.f32 0.0, %v1746
        %v1748 = vpop.f32.mrb[0].mxu0
        %1749 = vdwg.mxu0
        %v1751 = vsel %vm1632, %v1672, 0
        %1753 = vmatprep.subr.mxu0 0.0
        %1754 = vmatpush1.msra.mxu0 %v1314
        %1755 = vmatprep.subr.mxu0 0.0
        %1756 = vmatpush1.msra.mxu0 0.0
        %1757 = vmatprep.subr.mxu0 0.0
        %1758 = vmatpush1.msra.mxu0 0.0
        %1759 = vmatprep.subr.mxu0 0.0
        %1760 = vmatpush1.msra.mxu0 0.0
        %1761 = vmatprep.subr.mxu0 0.0
        %1762 = vmatpush1.msra.mxu0 0.0
        %1763 = vmatprep.subr.mxu0 0.0
        %1764 = vmatpush1.msra.mxu0 0.0
        %1765 = vmatprep.subr.mxu0 0.0
        %1766 = vmatpush1.msra.mxu0 0.0
        %1767 = vmatprep.subr.mxu0 0.0
        %1768 = vmatpush1.msra.mxu0 0.0
        %1769 = vmatprep.subr.mxu0 0.0
        %1770 = vmatpush1.msra.mxu0 0.0
        %1771 = vmatprep.subr.mxu0 0.0
        %1772 = vmatpush1.msra.mxu0 0.0
        %1773 = vmatprep.subr.mxu0 0.0
        %1774 = vmatpush1.msra.mxu0 0.0
        %1775 = vmatprep.subr.mxu0 0.0
        %1776 = vmatpush1.msra.mxu0 0.0
        %1777 = vmatprep.subr.mxu0 0.0
        %1778 = vmatpush1.msra.mxu0 0.0
        %1779 = vmatprep.subr.mxu0 0.0
        %1780 = vmatpush1.msra.mxu0 0.0
        %1781 = vmatprep.subr.mxu0 0.0
        %1782 = vmatpush1.msra.mxu0 0.0
        %1783 = vmatprep.subr.mxu0 0.0
        %1784 = vmatpush1.msra.mxu0 0.0
        %1785 = vmatprep.subr.mxu0 0.0
        %1786 = vmatpush1.msra.mxu0 0.0
        %1787 = vmatprep.subr.mxu0 0.0
        %1788 = vmatpush1.msra.mxu0 0.0
        %1789 = vmatprep.subr.mxu0 0.0
        %1790 = vmatpush1.msra.mxu0 0.0
        %1791 = vmatprep.subr.mxu0 0.0
        %1792 = vmatpush1.msra.mxu0 0.0
        %1793 = vmatprep.subr.mxu0 0.0
        %1794 = vmatpush1.msra.mxu0 0.0
        %1795 = vmatprep.subr.mxu0 0.0
        %1796 = vmatpush1.msra.mxu0 0.0
        %1797 = vmatprep.subr.mxu0 0.0
        %1798 = vmatpush1.msra.mxu0 0.0
        %1799 = vmatprep.subr.mxu0 0.0
        %1800 = vmatpush1.msra.mxu0 0.0
        %1801 = vmatprep.subr.mxu0 0.0
        %1802 = vmatpush1.msra.mxu0 0.0
        %1803 = vmatprep.subr.mxu0 0.0
        %1804 = vmatpush1.msra.mxu0 0.0
        %1805 = vmatprep.subr.mxu0 0.0
        %1806 = vmatpush1.msra.mxu0 0.0
        %1807 = vmatprep.subr.mxu0 0.0
        %1808 = vmatpush1.msra.mxu0 0.0
        %1809 = vmatprep.subr.mxu0 0.0
        %1810 = vmatpush1.msra.mxu0 0.0
        %1811 = vmatprep.subr.mxu0 0.0
        %1812 = vmatpush1.msra.mxu0 0.0
        %1813 = vmatprep.subr.mxu0 0.0
        %1814 = vmatpush1.msra.mxu0 0.0
        %1815 = vmatprep.subr.mxu0 0.0
        %1816 = vmatpush1.msra.mxu0 0.0
        %1817 = vmatprep.mubr.f32.mxu0 0.0
        %1818 = vmatmul.mubr.f32.gmra.mrb[0].mxu0 %v1751
        %v1819 = vpop.f32.mrb[0].mxu0
        %v1820 = vadd.f32 0.0, %v1819
        %v1821 = vpop.f32.mrb[0].mxu0
        %1822 = vdwg.mxu0
        %v1824 = vsel %vm1632, %v1674, 0
        %1826 = vmatprep.subr.mxu0 0.0
        %1827 = vmatpush1.msra.mxu0 %v1315
        %1828 = vmatprep.subr.mxu0 0.0
        %1829 = vmatpush1.msra.mxu0 0.0
        %1830 = vmatprep.subr.mxu0 0.0
        %1831 = vmatpush1.msra.mxu0 0.0
        %1832 = vmatprep.subr.mxu0 0.0
        %1833 = vmatpush1.msra.mxu0 0.0
        %1834 = vmatprep.subr.mxu0 0.0
        %1835 = vmatpush1.msra.mxu0 0.0
        %1836 = vmatprep.subr.mxu0 0.0
        %1837 = vmatpush1.msra.mxu0 0.0
        %1838 = vmatprep.subr.mxu0 0.0
        %1839 = vmatpush1.msra.mxu0 0.0
        %1840 = vmatprep.subr.mxu0 0.0
        %1841 = vmatpush1.msra.mxu0 0.0
        %1842 = vmatprep.subr.mxu0 0.0
        %1843 = vmatpush1.msra.mxu0 0.0
        %1844 = vmatprep.subr.mxu0 0.0
        %1845 = vmatpush1.msra.mxu0 0.0
        %1846 = vmatprep.subr.mxu0 0.0
        %1847 = vmatpush1.msra.mxu0 0.0
        %1848 = vmatprep.subr.mxu0 0.0
        %1849 = vmatpush1.msra.mxu0 0.0
        %1850 = vmatprep.subr.mxu0 0.0
        %1851 = vmatpush1.msra.mxu0 0.0
        %1852 = vmatprep.subr.mxu0 0.0
        %1853 = vmatpush1.msra.mxu0 0.0
        %1854 = vmatprep.subr.mxu0 0.0
        %1855 = vmatpush1.msra.mxu0 0.0
        %1856 = vmatprep.subr.mxu0 0.0
        %1857 = vmatpush1.msra.mxu0 0.0
        %1858 = vmatprep.subr.mxu0 0.0
        %1859 = vmatpush1.msra.mxu0 0.0
        %1860 = vmatprep.subr.mxu0 0.0
        %1861 = vmatpush1.msra.mxu0 0.0
        %1862 = vmatprep.subr.mxu0 0.0
        %1863 = vmatpush1.msra.mxu0 0.0
        %1864 = vmatprep.subr.mxu0 0.0
        %1865 = vmatpush1.msra.mxu0 0.0
        %1866 = vmatprep.subr.mxu0 0.0
        %1867 = vmatpush1.msra.mxu0 0.0
        %1868 = vmatprep.subr.mxu0 0.0
        %1869 = vmatpush1.msra.mxu0 0.0
        %1870 = vmatprep.subr.mxu0 0.0
        %1871 = vmatpush1.msra.mxu0 0.0
        %1872 = vmatprep.subr.mxu0 0.0
        %1873 = vmatpush1.msra.mxu0 0.0
        %1874 = vmatprep.subr.mxu0 0.0
        %1875 = vmatpush1.msra.mxu0 0.0
        %1876 = vmatprep.subr.mxu0 0.0
        %1877 = vmatpush1.msra.mxu0 0.0
        %1878 = vmatprep.subr.mxu0 0.0
        %1879 = vmatpush1.msra.mxu0 0.0
        %1880 = vmatprep.subr.mxu0 0.0
        %1881 = vmatpush1.msra.mxu0 0.0
        %1882 = vmatprep.subr.mxu0 0.0
        %1883 = vmatpush1.msra.mxu0 0.0
        %1884 = vmatprep.subr.mxu0 0.0
        %1885 = vmatpush1.msra.mxu0 0.0
        %1886 = vmatprep.subr.mxu0 0.0
        %1887 = vmatpush1.msra.mxu0 0.0
        %1888 = vmatprep.subr.mxu0 0.0
        %1889 = vmatpush1.msra.mxu0 0.0
        %1890 = vmatprep.mubr.f32.mxu0 0.0
        %1891 = vmatmul.mubr.f32.gmra.mrb[0].mxu0 %v1824
        %v1892 = vpop.f32.mrb[0].mxu0
        %v1893 = vadd.f32 0.0, %v1892
        %v1894 = vpop.f32.mrb[0].mxu0
        %1895 = vdwg.mxu0
        %v1897 = vsel %vm1632, %v1676, 0
        %1899 = vmatprep.subr.mxu0 0.0
        %1900 = vmatpush1.msra.mxu0 %v1316
        %1901 = vmatprep.subr.mxu0 0.0
        %1902 = vmatpush1.msra.mxu0 0.0
        %1903 = vmatprep.subr.mxu0 0.0
        %1904 = vmatpush1.msra.mxu0 0.0
        %1905 = vmatprep.subr.mxu0 0.0
        %1906 = vmatpush1.msra.mxu0 0.0
        %1907 = vmatprep.subr.mxu0 0.0
        %1908 = vmatpush1.msra.mxu0 0.0
        %1909 = vmatprep.subr.mxu0 0.0
        %1910 = vmatpush1.msra.mxu0 0.0
        %1911 = vmatprep.subr.mxu0 0.0
        %1912 = vmatpush1.msra.mxu0 0.0
        %1913 = vmatprep.subr.mxu0 0.0
        %1914 = vmatpush1.msra.mxu0 0.0
        %1915 = vmatprep.subr.mxu0 0.0
        %1916 = vmatpush1.msra.mxu0 0.0
        %1917 = vmatprep.subr.mxu0 0.0
        %1918 = vmatpush1.msra.mxu0 0.0
        %1919 = vmatprep.subr.mxu0 0.0
        %1920 = vmatpush1.msra.mxu0 0.0
        %1921 = vmatprep.subr.mxu0 0.0
        %1922 = vmatpush1.msra.mxu0 0.0
        %1923 = vmatprep.subr.mxu0 0.0
        %1924 = vmatpush1.msra.mxu0 0.0
        %1925 = vmatprep.subr.mxu0 0.0
        %1926 = vmatpush1.msra.mxu0 0.0
        %1927 = vmatprep.subr.mxu0 0.0
        %1928 = vmatpush1.msra.mxu0 0.0
        %1929 = vmatprep.subr.mxu0 0.0
        %1930 = vmatpush1.msra.mxu0 0.0
        %1931 = vmatprep.subr.mxu0 0.0
        %1932 = vmatpush1.msra.mxu0 0.0
        %1933 = vmatprep.subr.mxu0 0.0
        %1934 = vmatpush1.msra.mxu0 0.0
        %1935 = vmatprep.subr.mxu0 0.0
        %1936 = vmatpush1.msra.mxu0 0.0
        %1937 = vmatprep.subr.mxu0 0.0
        %1938 = vmatpush1.msra.mxu0 0.0
        %1939 = vmatprep.subr.mxu0 0.0
        %1940 = vmatpush1.msra.mxu0 0.0
        %1941 = vmatprep.subr.mxu0 0.0
        %1942 = vmatpush1.msra.mxu0 0.0
        %1943 = vmatprep.subr.mxu0 0.0
        %1944 = vmatpush1.msra.mxu0 0.0
        %1945 = vmatprep.subr.mxu0 0.0
        %1946 = vmatpush1.msra.mxu0 0.0
        %1947 = vmatprep.subr.mxu0 0.0
        %1948 = vmatpush1.msra.mxu0 0.0
        %1949 = vmatprep.subr.mxu0 0.0
        %1950 = vmatpush1.msra.mxu0 0.0
        %1951 = vmatprep.subr.mxu0 0.0
        %1952 = vmatpush1.msra.mxu0 0.0
        %1953 = vmatprep.subr.mxu0 0.0
        %1954 = vmatpush1.msra.mxu0 0.0
        %1955 = vmatprep.subr.mxu0 0.0
        %1956 = vmatpush1.msra.mxu0 0.0
        %1957 = vmatprep.subr.mxu0 0.0
        %1958 = vmatpush1.msra.mxu0 0.0
        %1959 = vmatprep.subr.mxu0 0.0
        %1960 = vmatpush1.msra.mxu0 0.0
        %1961 = vmatprep.subr.mxu0 0.0
        %1962 = vmatpush1.msra.mxu0 0.0
        %1963 = vmatprep.mubr.f32.mxu0 0.0
        %1964 = vmatmul.mubr.f32.gmra.mrb[0].mxu0 %v1897
        %v1965 = vpop.f32.mrb[0].mxu0
        %v1966 = vadd.f32 0.0, %v1965
        %v1967 = vpop.f32.mrb[0].mxu0
        %1968 = vdwg.mxu0
        %v1969 = vcombine.low %v1747, %v1893
        %v1970 = vcombine.high %v1747, %v1893
        %v1972 = vunpack.c.l.s4 1983009808
        %v1973 = vunpack.c.0.s8 %v1972
        %v1974 = vlaneseq
        %v1975 = vshrl.u32 %v1974, 7
        %v1976 = vsub.s32 %v1973, %v1975
        %v1977 = vrot.slane %v1969, %v1976
        %v1979 = vunpack.c.l.s4 1983009808
        %v1980 = vunpack.c.0.s8 %v1979
        %v1981 = vlaneseq
        %v1982 = vshrl.u32 %v1981, 7
        %v1983 = vsub.s32 %v1980, %v1982
        %v1984 = vrot.slane %v1970, %v1983
        %v1985 = vcombine.low %v1820, %v1966
        %v1986 = vcombine.high %v1820, %v1966
        %v1988 = vunpack.c.l.s4 1983009808
        %v1989 = vunpack.c.0.s8 %v1988
        %v1990 = vlaneseq
        %v1991 = vshrl.u32 %v1990, 7
        %v1992 = vsub.s32 %v1989, %v1991
        %v1993 = vrot.slane %v1985, %v1992
        %v1995 = vunpack.c.l.s4 1983009808
        %v1996 = vunpack.c.0.s8 %v1995
        %v1997 = vlaneseq
        %v1998 = vshrl.u32 %v1997, 7
        %v1999 = vsub.s32 %v1996, %v1998
        %v2000 = vrot.slane %v1986, %v1999
        %v2001 = vcombine.low %v1977, %v1993
        %v2002 = vcombine.high %v1977, %v1993
        %v2004 = vunpack.c.l.s4 1934713408
        %v2005 = vunpack.c.0.s8 %v2004
        %v2006 = vlaneseq
        %v2007 = vshrl.u32 %v2006, 7
        %v2008 = vsub.s32 %v2005, %v2007
        %v2009 = vrot.slane %v2001, %v2008
        %v2011 = vunpack.c.l.s4 1934713408
        %v2012 = vunpack.c.0.s8 %v2011
        %v2013 = vlaneseq
        %v2014 = vshrl.u32 %v2013, 7
        %v2015 = vsub.s32 %v2012, %v2014
        %v2016 = vrot.slane %v2002, %v2015
        %v2017 = vcombine.low %v1984, %v2000
        %v2018 = vcombine.high %v1984, %v2000
        %v2020 = vunpack.c.l.s4 1934713408
        %v2021 = vunpack.c.0.s8 %v2020
        %v2022 = vlaneseq
        %v2023 = vshrl.u32 %v2022, 7
        %v2024 = vsub.s32 %v2021, %v2023
        %v2025 = vrot.slane %v2017, %v2024
        %v2027 = vunpack.c.l.s4 1934713408
        %v2028 = vunpack.c.0.s8 %v2027
        %v2029 = vlaneseq
        %v2030 = vshrl.u32 %v2029, 7
        %v2031 = vsub.s32 %v2028, %v2030
        %v2032 = vrot.slane %v2018, %v2031
        %v2033 = vcombine.high %v2009, 0.0
        %v2034 = vcombine.high %v2016, 0.0
        %v2035 = vcombine.high %v2025, 0.0
        %v2036 = vcombine.high %v2032, 0.0
        %v2037 = vcombine.low %v2009, %v2016
        %v2039 = vunpack.c.l.s4 1983009808
        %v2040 = vunpack.c.0.s8 %v2039
        %v2041 = vlaneseq
        %v2042 = vshrl.u32 %v2041, 7
        %v2043 = vsub.s32 %v2040, %v2042
        %v2044 = vrot.slane %v2037, %v2043
        %v2045 = vcombine.low %v2033, %v2034
        %v2047 = vunpack.c.l.s4 1983009808
        %v2048 = vunpack.c.0.s8 %v2047
        %v2049 = vlaneseq
        %v2050 = vshrl.u32 %v2049, 7
        %v2051 = vsub.s32 %v2048, %v2050
        %v2052 = vrot.slane %v2045, %v2051
        %v2053 = vcombine.low %v2025, %v2032
        %v2055 = vunpack.c.l.s4 1983009808
        %v2056 = vunpack.c.0.s8 %v2055
        %v2057 = vlaneseq
        %v2058 = vshrl.u32 %v2057, 7
        %v2059 = vsub.s32 %v2056, %v2058
        %v2060 = vrot.slane %v2053, %v2059
        %v2061 = vcombine.low %v2035, %v2036
        %v2063 = vunpack.c.l.s4 1983009808
        %v2064 = vunpack.c.0.s8 %v2063
        %v2065 = vlaneseq
        %v2066 = vshrl.u32 %v2065, 7
        %v2067 = vsub.s32 %v2064, %v2066
        %v2068 = vrot.slane %v2061, %v2067
        %v2069 = vcombine.low %v2044, %v2052
        %v2070 = vcombine.high %v2044, %v2052
        %v2072 = vunpack.c.l.s4 1934713408
        %v2073 = vunpack.c.0.s8 %v2072
        %v2074 = vlaneseq
        %v2075 = vshrl.u32 %v2074, 7
        %v2076 = vsub.s32 %v2073, %v2075
        %v2077 = vrot.slane %v2069, %v2076
        %v2079 = vunpack.c.l.s4 1934713408
        %v2080 = vunpack.c.0.s8 %v2079
        %v2081 = vlaneseq
        %v2082 = vshrl.u32 %v2081, 7
        %v2083 = vsub.s32 %v2080, %v2082
        %v2084 = vrot.slane %v2070, %v2083
        %v2085 = vcombine.low %v2060, %v2068
        %v2086 = vcombine.high %v2060, %v2068
        %v2088 = vunpack.c.l.s4 1934713408
        %v2089 = vunpack.c.0.s8 %v2088
        %v2090 = vlaneseq
        %v2091 = vshrl.u32 %v2090, 7
        %v2092 = vsub.s32 %v2089, %v2091
        %v2093 = vrot.slane %v2085, %v2092
        %v2095 = vunpack.c.l.s4 1934713408
        %v2096 = vunpack.c.0.s8 %v2095
        %v2097 = vlaneseq
        %v2098 = vshrl.u32 %v2097, 7
        %v2099 = vsub.s32 %v2096, %v2098
        %v2100 = vrot.slane %v2086, %v2099
        %v2101 = vcombine.low %v2077, %v2093
        %v2102 = vcombine.high %v2077, %v2093
        %v2103 = vcombine.low %v2084, %v2100
        %v2104 = vcombine.high %v2084, %v2100
        %2106 = vrot.lane.b32.xlu0 %v2102, 32
        %v2107 = vpop.permute.xlu0 %2106
        %2110 = vrot.lane.b32.xlu0 %v2103, 64
        %v2111 = vpop.permute.xlu0 %2110
        %2114 = vrot.lane.b32.xlu0 %v2104, 96
        %v2115 = vpop.permute.xlu0 %2114
        %v2117 = vsel %vm1317, %v2101, %v2107
        %vm2118 = vcmask 523264
        %v2119 = vsel %vm2118, %v2117, %v2111
        %vm2120 = vcmask 785408
        %v2121 = vsel %vm2120, %v2119, %v2115
        %v2122 = vld [vmem:[#allocation10] sm:$0xff]
        %v2123 = vld [vmem:[#allocation10 + $0x8] sm:$0xff]
        %v2124 = vld [vmem:[#allocation10 + $0x10] sm:$0xff]
        %v2125 = vld [vmem:[#allocation10 + $0x18] sm:$0xff]
        %v2126 = vld [vmem:[#allocation10 + $0x20] sm:$0xff]
        %v2127 = vld [vmem:[#allocation10 + $0x28] sm:$0xff]
        %v2128 = vld [vmem:[#allocation10 + $0x30] sm:$0xff]
        %v2129 = vld [vmem:[#allocation10 + $0x38] sm:$0xff]
        %v2130 = vld [vmem:[#allocation10 + $0x40] sm:$0xff]
        %v2131 = vld [vmem:[#allocation10 + $0x48] sm:$0xff]
        %v2132 = vld [vmem:[#allocation10 + $0x50] sm:$0xff]
        %v2133 = vld [vmem:[#allocation10 + $0x58] sm:$0xff]
        %v2134 = vld [vmem:[#allocation10 + $0x60] sm:$0xff]
        %v2135 = vld [vmem:[#allocation10 + $0x68] sm:$0xff]
        %v2136 = vld [vmem:[#allocation10 + $0x70] sm:$0xff]
        %v2137 = vld [vmem:[#allocation10 + $0x78] sm:$0xff]
        %2138 = vmatprep.subr.mxu0 0.0
        %2139 = vmatpush1.msra.mxu0 %v2122
        %2140 = vmatprep.subr.mxu0 0.0
        %2141 = vmatpush1.msra.mxu0 %v2123
        %2142 = vmatprep.subr.mxu0 0.0
        %2143 = vmatpush1.msra.mxu0 %v2124
        %2144 = vmatprep.subr.mxu0 0.0
        %2145 = vmatpush1.msra.mxu0 %v2125
        %2146 = vmatprep.subr.mxu0 0.0
        %2147 = vmatpush1.msra.mxu0 %v2126
        %2148 = vmatprep.subr.mxu0 0.0
        %2149 = vmatpush1.msra.mxu0 %v2127
        %2150 = vmatprep.subr.mxu0 0.0
        %2151 = vmatpush1.msra.mxu0 %v2128
        %2152 = vmatprep.subr.mxu0 0.0
        %2153 = vmatpush1.msra.mxu0 %v2129
        %2154 = vmatprep.subr.mxu0 0.0
        %2155 = vmatpush1.msra.mxu0 %v2130
        %2156 = vmatprep.subr.mxu0 0.0
        %2157 = vmatpush1.msra.mxu0 %v2131
        %2158 = vmatprep.subr.mxu0 0.0
        %2159 = vmatpush1.msra.mxu0 %v2132
        %2160 = vmatprep.subr.mxu0 0.0
        %2161 = vmatpush1.msra.mxu0 %v2133
        %2162 = vmatprep.subr.mxu0 0.0
        %2163 = vmatpush1.msra.mxu0 %v2134
        %2164 = vmatprep.subr.mxu0 0.0
        %2165 = vmatpush1.msra.mxu0 %v2135
        %2166 = vmatprep.subr.mxu0 0.0
        %2167 = vmatpush1.msra.mxu0 %v2136
        %2168 = vmatprep.subr.mxu0 0.0
        %2169 = vmatpush1.msra.mxu0 %v2137
        %2170 = vmatprep.subr.mxu0 0.0
        %2171 = vmatpush1.msra.mxu0 0.0
        %2172 = vmatprep.subr.mxu0 0.0
        %2173 = vmatpush1.msra.mxu0 0.0
        %2174 = vmatprep.subr.mxu0 0.0
        %2175 = vmatpush1.msra.mxu0 0.0
        %2176 = vmatprep.subr.mxu0 0.0
        %2177 = vmatpush1.msra.mxu0 0.0
        %2178 = vmatprep.subr.mxu0 0.0
        %2179 = vmatpush1.msra.mxu0 0.0
        %2180 = vmatprep.subr.mxu0 0.0
        %2181 = vmatpush1.msra.mxu0 0.0
        %2182 = vmatprep.subr.mxu0 0.0
        %2183 = vmatpush1.msra.mxu0 0.0
        %2184 = vmatprep.subr.mxu0 0.0
        %2185 = vmatpush1.msra.mxu0 0.0
        %2186 = vmatprep.subr.mxu0 0.0
        %2187 = vmatpush1.msra.mxu0 0.0
        %2188 = vmatprep.subr.mxu0 0.0
        %2189 = vmatpush1.msra.mxu0 0.0
        %2190 = vmatprep.subr.mxu0 0.0
        %2191 = vmatpush1.msra.mxu0 0.0
        %2192 = vmatprep.subr.mxu0 0.0
        %2193 = vmatpush1.msra.mxu0 0.0
        %2194 = vmatprep.subr.mxu0 0.0
        %2195 = vmatpush1.msra.mxu0 0.0
        %2196 = vmatprep.subr.mxu0 0.0
        %2197 = vmatpush1.msra.mxu0 0.0
        %2198 = vmatprep.subr.mxu0 0.0
        %2199 = vmatpush1.msra.mxu0 0.0
        %2200 = vmatprep.subr.mxu0 0.0
        %2201 = vmatpush1.msra.mxu0 0.0
        %2202 = vmatprep.mubr.f32.mxu0 0.0
        %2203 = vmatmul.mubr.f32.gmra.mrb[0].mxu0 %v2121
        %v2204 = vpop.f32.mrb[0].mxu0
        %v2205 = vadd.f32 0.0, %v2204
        %v2206 = vpop.f32.mrb[0].mxu0
        %2207 = vdwg.mxu0
        %v2208 = vadd.f32 %v639, %v2205
        %v2209 = vld [vmem:[%s6] sm:$0x1]
        %v2211 = vlaneseq
        %v2212 = vshrl.u32 %v2211, 7
        %v2213 = vsub.s32 0, %v2212
        %v2214 = vrot.slane %v2209, %v2213
        %v2216 = vadd.f32 %v2208, %v2214
        %v2217 = vld [vmem:[%s7] sm:$0x1]
        %v2218 = vld [vmem:[%s8] sm:$0x1]
        %2219 = vadd.xlane.f32.xlu0 %v2216
        %v2220 = vpop.xlane.xlu0 %2219
        %v2221 = vmul.f32 %v2220, %v649
        %v2222 = vsub.f32 %v2216, %v2221
        %v2223 = vmul.f32 %v2222, %v2222
        %2224 = vadd.xlane.f32.xlu0 %v2223
        %v2225 = vpop.xlane.xlu0 %2224
        %v2226 = vmul.f32 %v2225, %v649
        %v2227 = vadd.f32 %v2226, 1e-05
        %v2228 = vrsqrt.pop %v2227
        %v2229 = vmul.f32 %v2222, %v2228
        %v2231 = vlaneseq
        %v2232 = vshrl.u32 %v2231, 7
        %v2233 = vsub.s32 0, %v2232
        %v2234 = vrot.slane %v2217, %v2233
        %v2236 = vmul.f32 %v2229, %v2234
        %v2238 = vlaneseq
        %v2239 = vshrl.u32 %v2238, 7
        %v2240 = vsub.s32 0, %v2239
        %v2241 = vrot.slane %v2218, %v2240
        %v2243 = vadd.f32 %v2236, %v2241
        %v2244 = vld [vmem:[#allocation11] sm:$0xff]
        %v2245 = vld [vmem:[#allocation11 + $0x8] sm:$0xff]
        %v2246 = vld [vmem:[#allocation11 + $0x10] sm:$0xff]
        %v2247 = vld [vmem:[#allocation11 + $0x18] sm:$0xff]
        %v2248 = vld [vmem:[#allocation11 + $0x20] sm:$0xff]
        %v2249 = vld [vmem:[#allocation11 + $0x28] sm:$0xff]
        %v2250 = vld [vmem:[#allocation11 + $0x30] sm:$0xff]
        %v2251 = vld [vmem:[#allocation11 + $0x38] sm:$0xff]
        %v2252 = vld [vmem:[#allocation11 + $0x40] sm:$0xff]
        %v2253 = vld [vmem:[#allocation11 + $0x48] sm:$0xff]
        %v2254 = vld [vmem:[#allocation11 + $0x50] sm:$0xff]
        %v2255 = vld [vmem:[#allocation11 + $0x58] sm:$0xff]
        %v2256 = vld [vmem:[#allocation11 + $0x60] sm:$0xff]
        %v2257 = vld [vmem:[#allocation11 + $0x68] sm:$0xff]
        %v2258 = vld [vmem:[#allocation11 + $0x70] sm:$0xff]
        %v2259 = vld [vmem:[#allocation11 + $0x78] sm:$0xff]
        %v2260 = vld [vmem:[#allocation11 + $0x80] sm:$0xff]
        %v2261 = vld [vmem:[#allocation11 + $0x88] sm:$0xff]
        %v2262 = vld [vmem:[#allocation11 + $0x90] sm:$0xff]
        %v2263 = vld [vmem:[#allocation11 + $0x98] sm:$0xff]
        %v2264 = vld [vmem:[#allocation11 + $0xa0] sm:$0xff]
        %v2265 = vld [vmem:[#allocation11 + $0xa8] sm:$0xff]
        %v2266 = vld [vmem:[#allocation11 + $0xb0] sm:$0xff]
        %v2267 = vld [vmem:[#allocation11 + $0xb8] sm:$0xff]
        %v2268 = vld [vmem:[#allocation11 + $0xc0] sm:$0xff]
        %v2269 = vld [vmem:[#allocation11 + $0xc8] sm:$0xff]
        %v2270 = vld [vmem:[#allocation11 + $0xd0] sm:$0xff]
        %v2271 = vld [vmem:[#allocation11 + $0xd8] sm:$0xff]
        %v2272 = vld [vmem:[#allocation11 + $0xe0] sm:$0xff]
        %v2273 = vld [vmem:[#allocation11 + $0xe8] sm:$0xff]
        %v2274 = vld [vmem:[#allocation11 + $0xf0] sm:$0xff]
        %v2275 = vld [vmem:[#allocation11 + $0xf8] sm:$0xff]
        %v2276 = vld [vmem:[#allocation11 + $0x100] sm:$0xff]
        %v2277 = vld [vmem:[#allocation11 + $0x108] sm:$0xff]
        %v2278 = vld [vmem:[#allocation11 + $0x110] sm:$0xff]
        %v2279 = vld [vmem:[#allocation11 + $0x118] sm:$0xff]
        %v2280 = vld [vmem:[#allocation11 + $0x120] sm:$0xff]
        %v2281 = vld [vmem:[#allocation11 + $0x128] sm:$0xff]
        %v2282 = vld [vmem:[#allocation11 + $0x130] sm:$0xff]
        %v2283 = vld [vmem:[#allocation11 + $0x138] sm:$0xff]
        %v2284 = vld [vmem:[#allocation11 + $0x140] sm:$0xff]
        %v2285 = vld [vmem:[#allocation11 + $0x148] sm:$0xff]
        %v2286 = vld [vmem:[#allocation11 + $0x150] sm:$0xff]
        %v2287 = vld [vmem:[#allocation11 + $0x158] sm:$0xff]
        %v2288 = vld [vmem:[#allocation11 + $0x160] sm:$0xff]
        %v2289 = vld [vmem:[#allocation11 + $0x168] sm:$0xff]
        %v2290 = vld [vmem:[#allocation11 + $0x170] sm:$0xff]
        %v2291 = vld [vmem:[#allocation11 + $0x178] sm:$0xff]
        %v2292 = vld [vmem:[#allocation11 + $0x180] sm:$0xff]
        %v2293 = vld [vmem:[#allocation11 + $0x188] sm:$0xff]
        %v2294 = vld [vmem:[#allocation11 + $0x190] sm:$0xff]
        %v2295 = vld [vmem:[#allocation11 + $0x198] sm:$0xff]
        %v2296 = vld [vmem:[#allocation11 + $0x1a0] sm:$0xff]
        %v2297 = vld [vmem:[#allocation11 + $0x1a8] sm:$0xff]
        %v2298 = vld [vmem:[#allocation11 + $0x1b0] sm:$0xff]
        %v2299 = vld [vmem:[#allocation11 + $0x1b8] sm:$0xff]
        %v2300 = vld [vmem:[#allocation11 + $0x1c0] sm:$0xff]
        %v2301 = vld [vmem:[#allocation11 + $0x1c8] sm:$0xff]
        %v2302 = vld [vmem:[#allocation11 + $0x1d0] sm:$0xff]
        %v2303 = vld [vmem:[#allocation11 + $0x1d8] sm:$0xff]
        %v2304 = vld [vmem:[#allocation11 + $0x1e0] sm:$0xff]
        %v2305 = vld [vmem:[#allocation11 + $0x1e8] sm:$0xff]
        %v2306 = vld [vmem:[#allocation11 + $0x1f0] sm:$0xff]
        %v2307 = vld [vmem:[#allocation11 + $0x1f8] sm:$0xff]
        %v2308 = vld [vmem:[%s10] sm:$0xf]
        %v2310 = vlaneseq
        %v2311 = vshrl.u32 %v2310, 7
        %v2312 = vsub.s32 0, %v2311
        %v2313 = vrot.slane %v2308, %v2312
        %v2314 = vlaneseq
        %v2315 = vshrl.u32 %v2314, 7
        %v2316 = vsub.s32 1, %v2315
        %v2317 = vrot.slane %v2308, %v2316
        %v2318 = vlaneseq
        %v2319 = vshrl.u32 %v2318, 7
        %v2320 = vsub.s32 2, %v2319
        %v2321 = vrot.slane %v2308, %v2320
        %v2322 = vlaneseq
        %v2323 = vshrl.u32 %v2322, 7
        %v2324 = vsub.s32 3, %v2323
        %v2325 = vrot.slane %v2308, %v2324
        %2330 = vmatprep.subr.mxu0 %v2245
        %2331 = vmatpush1.msra.mxu0 %v2244
        %2332 = vmatprep.subr.mxu0 %v2249
        %2333 = vmatpush1.msra.mxu0 %v2248
        %2334 = vmatprep.subr.mxu0 %v2253
        %2335 = vmatpush1.msra.mxu0 %v2252
        %2336 = vmatprep.subr.mxu0 %v2257
        %2337 = vmatpush1.msra.mxu0 %v2256
        %2338 = vmatprep.subr.mxu0 %v2261
        %2339 = vmatpush1.msra.mxu0 %v2260
        %2340 = vmatprep.subr.mxu0 %v2265
        %2341 = vmatpush1.msra.mxu0 %v2264
        %2342 = vmatprep.subr.mxu0 %v2269
        %2343 = vmatpush1.msra.mxu0 %v2268
        %2344 = vmatprep.subr.mxu0 %v2273
        %2345 = vmatpush1.msra.mxu0 %v2272
        %2346 = vmatprep.subr.mxu0 %v2277
        %2347 = vmatpush1.msra.mxu0 %v2276
        %2348 = vmatprep.subr.mxu0 %v2281
        %2349 = vmatpush1.msra.mxu0 %v2280
        %2350 = vmatprep.subr.mxu0 %v2285
        %2351 = vmatpush1.msra.mxu0 %v2284
        %2352 = vmatprep.subr.mxu0 %v2289
        %2353 = vmatpush1.msra.mxu0 %v2288
        %2354 = vmatprep.subr.mxu0 %v2293
        %2355 = vmatpush1.msra.mxu0 %v2292
        %2356 = vmatprep.subr.mxu0 %v2297
        %2357 = vmatpush1.msra.mxu0 %v2296
        %2358 = vmatprep.subr.mxu0 %v2301
        %2359 = vmatpush1.msra.mxu0 %v2300
        %2360 = vmatprep.subr.mxu0 %v2305
        %2361 = vmatpush1.msra.mxu0 %v2304
        %2362 = vmatprep.subr.mxu0 0.0
        %2363 = vmatpush1.msra.mxu0 0.0
        %2364 = vmatprep.subr.mxu0 0.0
        %2365 = vmatpush1.msra.mxu0 0.0
        %2366 = vmatprep.subr.mxu0 0.0
        %2367 = vmatpush1.msra.mxu0 0.0
        %2368 = vmatprep.subr.mxu0 0.0
        %2369 = vmatpush1.msra.mxu0 0.0
        %2370 = vmatprep.subr.mxu0 0.0
        %2371 = vmatpush1.msra.mxu0 0.0
        %2372 = vmatprep.subr.mxu0 0.0
        %2373 = vmatpush1.msra.mxu0 0.0
        %2374 = vmatprep.subr.mxu0 0.0
        %2375 = vmatpush1.msra.mxu0 0.0
        %2376 = vmatprep.subr.mxu0 0.0
        %2377 = vmatpush1.msra.mxu0 0.0
        %2378 = vmatprep.subr.mxu0 0.0
        %2379 = vmatpush1.msra.mxu0 0.0
        %2380 = vmatprep.subr.mxu0 0.0
        %2381 = vmatpush1.msra.mxu0 0.0
        %2382 = vmatprep.subr.mxu0 0.0
        %2383 = vmatpush1.msra.mxu0 0.0
        %2384 = vmatprep.subr.mxu0 0.0
        %2385 = vmatpush1.msra.mxu0 0.0
        %2386 = vmatprep.subr.mxu0 0.0
        %2387 = vmatpush1.msra.mxu0 0.0
        %2388 = vmatprep.subr.mxu0 0.0
        %2389 = vmatpush1.msra.mxu0 0.0
        %2390 = vmatprep.subr.mxu0 0.0
        %2391 = vmatpush1.msra.mxu0 0.0
        %2392 = vmatprep.subr.mxu0 0.0
        %2393 = vmatpush1.msra.mxu0 0.0
        %2394 = vmatprep.mubr.f32.mxu0 0.0
        %2395 = vmatmul.mubr.f32.gmra.mrb[0].mxu0 %v2243
        %v2396 = vpop.f32.mrb[0].mxu0
        %v2397 = vadd.f32 %v2313, %v2396
        %v2398 = vpop.f32.mrb[0].mxu0
        %v2399 = vadd.f32 %v2317, %v2398
        %2400 = vdwg.mxu0
        %2401 = vmatprep.subr.mxu0 %v2247
        %2402 = vmatpush1.msra.mxu0 %v2246
        %2403 = vmatprep.subr.mxu0 %v2251
        %2404 = vmatpush1.msra.mxu0 %v2250
        %2405 = vmatprep.subr.mxu0 %v2255
        %2406 = vmatpush1.msra.mxu0 %v2254
        %2407 = vmatprep.subr.mxu0 %v2259
        %2408 = vmatpush1.msra.mxu0 %v2258
        %2409 = vmatprep.subr.mxu0 %v2263
        %2410 = vmatpush1.msra.mxu0 %v2262
        %2411 = vmatprep.subr.mxu0 %v2267
        %2412 = vmatpush1.msra.mxu0 %v2266
        %2413 = vmatprep.subr.mxu0 %v2271
        %2414 = vmatpush1.msra.mxu0 %v2270
        %2415 = vmatprep.subr.mxu0 %v2275
        %2416 = vmatpush1.msra.mxu0 %v2274
        %2417 = vmatprep.subr.mxu0 %v2279
        %2418 = vmatpush1.msra.mxu0 %v2278
        %2419 = vmatprep.subr.mxu0 %v2283
        %2420 = vmatpush1.msra.mxu0 %v2282
        %2421 = vmatprep.subr.mxu0 %v2287
        %2422 = vmatpush1.msra.mxu0 %v2286
        %2423 = vmatprep.subr.mxu0 %v2291
        %2424 = vmatpush1.msra.mxu0 %v2290
        %2425 = vmatprep.subr.mxu0 %v2295
        %2426 = vmatpush1.msra.mxu0 %v2294
        %2427 = vmatprep.subr.mxu0 %v2299
        %2428 = vmatpush1.msra.mxu0 %v2298
        %2429 = vmatprep.subr.mxu0 %v2303
        %2430 = vmatpush1.msra.mxu0 %v2302
        %2431 = vmatprep.subr.mxu0 %v2307
        %2432 = vmatpush1.msra.mxu0 %v2306
        %2433 = vmatprep.subr.mxu0 0.0
        %2434 = vmatpush1.msra.mxu0 0.0
        %2435 = vmatprep.subr.mxu0 0.0
        %2436 = vmatpush1.msra.mxu0 0.0
        %2437 = vmatprep.subr.mxu0 0.0
        %2438 = vmatpush1.msra.mxu0 0.0
        %2439 = vmatprep.subr.mxu0 0.0
        %2440 = vmatpush1.msra.mxu0 0.0
        %2441 = vmatprep.subr.mxu0 0.0
        %2442 = vmatpush1.msra.mxu0 0.0
        %2443 = vmatprep.subr.mxu0 0.0
        %2444 = vmatpush1.msra.mxu0 0.0
        %2445 = vmatprep.subr.mxu0 0.0
        %2446 = vmatpush1.msra.mxu0 0.0
        %2447 = vmatprep.subr.mxu0 0.0
        %2448 = vmatpush1.msra.mxu0 0.0
        %2449 = vmatprep.subr.mxu0 0.0
        %2450 = vmatpush1.msra.mxu0 0.0
        %2451 = vmatprep.subr.mxu0 0.0
        %2452 = vmatpush1.msra.mxu0 0.0
        %2453 = vmatprep.subr.mxu0 0.0
        %2454 = vmatpush1.msra.mxu0 0.0
        %2455 = vmatprep.subr.mxu0 0.0
        %2456 = vmatpush1.msra.mxu0 0.0
        %2457 = vmatprep.subr.mxu0 0.0
        %2458 = vmatpush1.msra.mxu0 0.0
        %2459 = vmatprep.subr.mxu0 0.0
        %2460 = vmatpush1.msra.mxu0 0.0
        %2461 = vmatprep.subr.mxu0 0.0
        %2462 = vmatpush1.msra.mxu0 0.0
        %2463 = vmatprep.subr.mxu0 0.0
        %2464 = vmatpush1.msra.mxu0 0.0
        %2465 = vmatprep.mubr.f32.mxu0 0.0
        %2466 = vmatmul.mubr.f32.gmra.mrb[0].mxu0 %v2243
        %v2467 = vpop.f32.mrb[0].mxu0
        %v2468 = vadd.f32 %v2321, %v2467
        %v2469 = vpop.f32.mrb[0].mxu0
        %v2470 = vadd.f32 %v2325, %v2469
        %2471 = vdwg.mxu0
        %v2472 = vmul.f32 %v2397, 0.5
        %v2473 = vmul.f32 %v2399, 0.5
        %v2474 = vmul.f32 %v2468, 0.5
        %v2475 = vmul.f32 %v2470, 0.5
        %v2476 = vmul.f32 %v2397, 0.044715
        %v2477 = vmul.f32 %v2399, 0.044715
        %v2478 = vmul.f32 %v2468, 0.044715
        %v2479 = vmul.f32 %v2470, 0.044715
        %v2480 = vmul.f32 %v2476, %v2397
        %v2481 = vmul.f32 %v2477, %v2399
        %v2482 = vmul.f32 %v2478, %v2468
        %v2483 = vmul.f32 %v2479, %v2470
        %v2484 = vmul.f32 %v2480, %v2397
        %v2485 = vmul.f32 %v2481, %v2399
        %v2486 = vmul.f32 %v2482, %v2468
        %v2487 = vmul.f32 %v2483, %v2470
        %v2488 = vadd.f32 %v2397, %v2484
        %v2489 = vadd.f32 %v2399, %v2485
        %v2490 = vadd.f32 %v2468, %v2486
        %v2491 = vadd.f32 %v2470, %v2487
        %v2492 = vmul.f32 %v2488, 0.7978846
        %v2493 = vmul.f32 %v2489, 0.7978846
        %v2494 = vmul.f32 %v2490, 0.7978846
        %v2495 = vmul.f32 %v2491, 0.7978846
        %v2496 = vtanh.pop %v2492
        %v2497 = vtanh.pop %v2493
        %v2498 = vtanh.pop %v2494
        %v2499 = vtanh.pop %v2495
        %v2500 = vadd.f32 %v2496, 1.0
        %v2501 = vadd.f32 %v2497, 1.0
        %v2502 = vadd.f32 %v2498, 1.0
        %v2503 = vadd.f32 %v2499, 1.0
        %v2504 = vmul.f32 %v2472, %v2500
        %v2505 = vmul.f32 %v2473, %v2501
        %v2506 = vmul.f32 %v2474, %v2502
        %v2507 = vmul.f32 %v2475, %v2503
        %v2508 = vld [vmem:[#allocation13] sm:$0xff]
        %v2509 = vld [vmem:[#allocation13 + $0x8] sm:$0xff]
        %v2510 = vld [vmem:[#allocation13 + $0x10] sm:$0xff]
        %v2511 = vld [vmem:[#allocation13 + $0x18] sm:$0xff]
        %v2512 = vld [vmem:[#allocation13 + $0x20] sm:$0xff]
        %v2513 = vld [vmem:[#allocation13 + $0x28] sm:$0xff]
        %v2514 = vld [vmem:[#allocation13 + $0x30] sm:$0xff]
        %v2515 = vld [vmem:[#allocation13 + $0x38] sm:$0xff]
        %v2516 = vld [vmem:[#allocation13 + $0x40] sm:$0xff]
        %v2517 = vld [vmem:[#allocation13 + $0x48] sm:$0xff]
        %v2518 = vld [vmem:[#allocation13 + $0x50] sm:$0xff]
        %v2519 = vld [vmem:[#allocation13 + $0x58] sm:$0xff]
        %v2520 = vld [vmem:[#allocation13 + $0x60] sm:$0xff]
        %v2521 = vld [vmem:[#allocation13 + $0x68] sm:$0xff]
        %v2522 = vld [vmem:[#allocation13 + $0x70] sm:$0xff]
        %v2523 = vld [vmem:[#allocation13 + $0x78] sm:$0xff]
        %v2524 = vld [vmem:[#allocation13 + $0x80] sm:$0xff]
        %v2525 = vld [vmem:[#allocation13 + $0x88] sm:$0xff]
        %v2526 = vld [vmem:[#allocation13 + $0x90] sm:$0xff]
        %v2527 = vld [vmem:[#allocation13 + $0x98] sm:$0xff]
        %v2528 = vld [vmem:[#allocation13 + $0xa0] sm:$0xff]
        %v2529 = vld [vmem:[#allocation13 + $0xa8] sm:$0xff]
        %v2530 = vld [vmem:[#allocation13 + $0xb0] sm:$0xff]
        %v2531 = vld [vmem:[#allocation13 + $0xb8] sm:$0xff]
        %v2532 = vld [vmem:[#allocation13 + $0xc0] sm:$0xff]
        %v2533 = vld [vmem:[#allocation13 + $0xc8] sm:$0xff]
        %v2534 = vld [vmem:[#allocation13 + $0xd0] sm:$0xff]
        %v2535 = vld [vmem:[#allocation13 + $0xd8] sm:$0xff]
        %v2536 = vld [vmem:[#allocation13 + $0xe0] sm:$0xff]
        %v2537 = vld [vmem:[#allocation13 + $0xe8] sm:$0xff]
        %v2538 = vld [vmem:[#allocation13 + $0xf0] sm:$0xff]
        %v2539 = vld [vmem:[#allocation13 + $0xf8] sm:$0xff]
        %v2540 = vld [vmem:[#allocation13 + $0x100] sm:$0xff]
        %v2541 = vld [vmem:[#allocation13 + $0x108] sm:$0xff]
        %v2542 = vld [vmem:[#allocation13 + $0x110] sm:$0xff]
        %v2543 = vld [vmem:[#allocation13 + $0x118] sm:$0xff]
        %v2544 = vld [vmem:[#allocation13 + $0x120] sm:$0xff]
        %v2545 = vld [vmem:[#allocation13 + $0x128] sm:$0xff]
        %v2546 = vld [vmem:[#allocation13 + $0x130] sm:$0xff]
        %v2547 = vld [vmem:[#allocation13 + $0x138] sm:$0xff]
        %v2548 = vld [vmem:[#allocation13 + $0x140] sm:$0xff]
        %v2549 = vld [vmem:[#allocation13 + $0x148] sm:$0xff]
        %v2550 = vld [vmem:[#allocation13 + $0x150] sm:$0xff]
        %v2551 = vld [vmem:[#allocation13 + $0x158] sm:$0xff]
        %v2552 = vld [vmem:[#allocation13 + $0x160] sm:$0xff]
        %v2553 = vld [vmem:[#allocation13 + $0x168] sm:$0xff]
        %v2554 = vld [vmem:[#allocation13 + $0x170] sm:$0xff]
        %v2555 = vld [vmem:[#allocation13 + $0x178] sm:$0xff]
        %v2556 = vld [vmem:[#allocation13 + $0x180] sm:$0xff]
        %v2557 = vld [vmem:[#allocation13 + $0x188] sm:$0xff]
        %v2558 = vld [vmem:[#allocation13 + $0x190] sm:$0xff]
        %v2559 = vld [vmem:[#allocation13 + $0x198] sm:$0xff]
        %v2560 = vld [vmem:[#allocation13 + $0x1a0] sm:$0xff]
        %v2561 = vld [vmem:[#allocation13 + $0x1a8] sm:$0xff]
        %v2562 = vld [vmem:[#allocation13 + $0x1b0] sm:$0xff]
        %v2563 = vld [vmem:[#allocation13 + $0x1b8] sm:$0xff]
        %v2564 = vld [vmem:[#allocation13 + $0x1c0] sm:$0xff]
        %v2565 = vld [vmem:[#allocation13 + $0x1c8] sm:$0xff]
        %v2566 = vld [vmem:[#allocation13 + $0x1d0] sm:$0xff]
        %v2567 = vld [vmem:[#allocation13 + $0x1d8] sm:$0xff]
        %v2568 = vld [vmem:[#allocation13 + $0x1e0] sm:$0xff]
        %v2569 = vld [vmem:[#allocation13 + $0x1e8] sm:$0xff]
        %v2570 = vld [vmem:[#allocation13 + $0x1f0] sm:$0xff]
        %v2571 = vld [vmem:[#allocation13 + $0x1f8] sm:$0xff]
        %2572 = vmatprep.subr.mxu0 0.0
        %2573 = vmatpush1.msra.mxu0 %v2508
        %2574 = vmatprep.subr.mxu0 0.0
        %2575 = vmatpush1.msra.mxu0 %v2509
        %2576 = vmatprep.subr.mxu0 0.0
        %2577 = vmatpush1.msra.mxu0 %v2510
        %2578 = vmatprep.subr.mxu0 0.0
        %2579 = vmatpush1.msra.mxu0 %v2511
        %2580 = vmatprep.subr.mxu0 0.0
        %2581 = vmatpush1.msra.mxu0 %v2512
        %2582 = vmatprep.subr.mxu0 0.0
        %2583 = vmatpush1.msra.mxu0 %v2513
        %2584 = vmatprep.subr.mxu0 0.0
        %2585 = vmatpush1.msra.mxu0 %v2514
        %2586 = vmatprep.subr.mxu0 0.0
        %2587 = vmatpush1.msra.mxu0 %v2515
        %2588 = vmatprep.subr.mxu0 0.0
        %2589 = vmatpush1.msra.mxu0 %v2516
        %2590 = vmatprep.subr.mxu0 0.0
        %2591 = vmatpush1.msra.mxu0 %v2517
        %2592 = vmatprep.subr.mxu0 0.0
        %2593 = vmatpush1.msra.mxu0 %v2518
        %2594 = vmatprep.subr.mxu0 0.0
        %2595 = vmatpush1.msra.mxu0 %v2519
        %2596 = vmatprep.subr.mxu0 0.0
        %2597 = vmatpush1.msra.mxu0 %v2520
        %2598 = vmatprep.subr.mxu0 0.0
        %2599 = vmatpush1.msra.mxu0 %v2521
        %2600 = vmatprep.subr.mxu0 0.0
        %2601 = vmatpush1.msra.mxu0 %v2522
        %2602 = vmatprep.subr.mxu0 0.0
        %2603 = vmatpush1.msra.mxu0 %v2523
        %2604 = vmatprep.subr.mxu0 0.0
        %2605 = vmatpush1.msra.mxu0 %v2524
        %2606 = vmatprep.subr.mxu0 0.0
        %2607 = vmatpush1.msra.mxu0 %v2525
        %2608 = vmatprep.subr.mxu0 0.0
        %2609 = vmatpush1.msra.mxu0 %v2526
        %2610 = vmatprep.subr.mxu0 0.0
        %2611 = vmatpush1.msra.mxu0 %v2527
        %2612 = vmatprep.subr.mxu0 0.0
        %2613 = vmatpush1.msra.mxu0 %v2528
        %2614 = vmatprep.subr.mxu0 0.0
        %2615 = vmatpush1.msra.mxu0 %v2529
        %2616 = vmatprep.subr.mxu0 0.0
        %2617 = vmatpush1.msra.mxu0 %v2530
        %2618 = vmatprep.subr.mxu0 0.0
        %2619 = vmatpush1.msra.mxu0 %v2531
        %2620 = vmatprep.subr.mxu0 0.0
        %2621 = vmatpush1.msra.mxu0 %v2532
        %2622 = vmatprep.subr.mxu0 0.0
        %2623 = vmatpush1.msra.mxu0 %v2533
        %2624 = vmatprep.subr.mxu0 0.0
        %2625 = vmatpush1.msra.mxu0 %v2534
        %2626 = vmatprep.subr.mxu0 0.0
        %2627 = vmatpush1.msra.mxu0 %v2535
        %2628 = vmatprep.subr.mxu0 0.0
        %2629 = vmatpush1.msra.mxu0 %v2536
        %2630 = vmatprep.subr.mxu0 0.0
        %2631 = vmatpush1.msra.mxu0 %v2537
        %2632 = vmatprep.subr.mxu0 0.0
        %2633 = vmatpush1.msra.mxu0 %v2538
        %2634 = vmatprep.subr.mxu0 0.0
        %2635 = vmatpush1.msra.mxu0 %v2539
        %2636 = vmatprep.mubr.f32.mxu0 %v2505
        %2637 = vmatmul.mubr.f32.gmra.mrb[0].mxu0 %v2504
        %v2638 = vpop.f32.mrb[0].mxu0
        %v2639 = vadd.f32 0.0, %v2638
        %v2640 = vpop.f32.mrb[0].mxu0
        %2641 = vdwg.mxu0
        %2642 = vmatprep.subr.mxu0 0.0
        %2643 = vmatpush1.msra.mxu0 %v2540
        %2644 = vmatprep.subr.mxu0 0.0
        %2645 = vmatpush1.msra.mxu0 %v2541
        %2646 = vmatprep.subr.mxu0 0.0
        %2647 = vmatpush1.msra.mxu0 %v2542
        %2648 = vmatprep.subr.mxu0 0.0
        %2649 = vmatpush1.msra.mxu0 %v2543
        %2650 = vmatprep.subr.mxu0 0.0
        %2651 = vmatpush1.msra.mxu0 %v2544
        %2652 = vmatprep.subr.mxu0 0.0
        %2653 = vmatpush1.msra.mxu0 %v2545
        %2654 = vmatprep.subr.mxu0 0.0
        %2655 = vmatpush1.msra.mxu0 %v2546
        %2656 = vmatprep.subr.mxu0 0.0
        %2657 = vmatpush1.msra.mxu0 %v2547
        %2658 = vmatprep.subr.mxu0 0.0
        %2659 = vmatpush1.msra.mxu0 %v2548
        %2660 = vmatprep.subr.mxu0 0.0
        %2661 = vmatpush1.msra.mxu0 %v2549
        %2662 = vmatprep.subr.mxu0 0.0
        %2663 = vmatpush1.msra.mxu0 %v2550
        %2664 = vmatprep.subr.mxu0 0.0
        %2665 = vmatpush1.msra.mxu0 %v2551
        %2666 = vmatprep.subr.mxu0 0.0
        %2667 = vmatpush1.msra.mxu0 %v2552
        %2668 = vmatprep.subr.mxu0 0.0
        %2669 = vmatpush1.msra.mxu0 %v2553
        %2670 = vmatprep.subr.mxu0 0.0
        %2671 = vmatpush1.msra.mxu0 %v2554
        %2672 = vmatprep.subr.mxu0 0.0
        %2673 = vmatpush1.msra.mxu0 %v2555
        %2674 = vmatprep.subr.mxu0 0.0
        %2675 = vmatpush1.msra.mxu0 %v2556
        %2676 = vmatprep.subr.mxu0 0.0
        %2677 = vmatpush1.msra.mxu0 %v2557
        %2678 = vmatprep.subr.mxu0 0.0
        %2679 = vmatpush1.msra.mxu0 %v2558
        %2680 = vmatprep.subr.mxu0 0.0
        %2681 = vmatpush1.msra.mxu0 %v2559
        %2682 = vmatprep.subr.mxu0 0.0
        %2683 = vmatpush1.msra.mxu0 %v2560
        %2684 = vmatprep.subr.mxu0 0.0
        %2685 = vmatpush1.msra.mxu0 %v2561
        %2686 = vmatprep.subr.mxu0 0.0
        %2687 = vmatpush1.msra.mxu0 %v2562
        %2688 = vmatprep.subr.mxu0 0.0
        %2689 = vmatpush1.msra.mxu0 %v2563
        %2690 = vmatprep.subr.mxu0 0.0
        %2691 = vmatpush1.msra.mxu0 %v2564
        %2692 = vmatprep.subr.mxu0 0.0
        %2693 = vmatpush1.msra.mxu0 %v2565
        %2694 = vmatprep.subr.mxu0 0.0
        %2695 = vmatpush1.msra.mxu0 %v2566
        %2696 = vmatprep.subr.mxu0 0.0
        %2697 = vmatpush1.msra.mxu0 %v2567
        %2698 = vmatprep.subr.mxu0 0.0
        %2699 = vmatpush1.msra.mxu0 %v2568
        %2700 = vmatprep.subr.mxu0 0.0
        %2701 = vmatpush1.msra.mxu0 %v2569
        %2702 = vmatprep.subr.mxu0 0.0
        %2703 = vmatpush1.msra.mxu0 %v2570
        %2704 = vmatprep.subr.mxu0 0.0
        %2705 = vmatpush1.msra.mxu0 %v2571
        %2706 = vmatprep.mubr.f32.mxu0 %v2507
        %2707 = vmatmul.mubr.f32.gmra.mrb[0].mxu0 %v2506
        %v2708 = vpop.f32.mrb[0].mxu0
        %v2709 = vadd.f32 %v2639, %v2708
        %v2710 = vpop.f32.mrb[0].mxu0
        %2711 = vdwg.mxu0
        %v2712 = vadd.f32 %v2216, %v2709
        %v2713 = vld [vmem:[%s12] sm:$0x1]
        %v2715 = vlaneseq
        %v2716 = vshrl.u32 %v2715, 7
        %v2717 = vsub.s32 0, %v2716
        %v2718 = vrot.slane %v2713, %v2717
        %v2720 = vadd.f32 %v2712, %v2718
        %s2721 = scalar_lea.vmem [#allocation5], 1
        %v2722 = vld [vmem:[%s2721] sm:$0x1]
        %s2723 = scalar_lea.vmem [#allocation7], 1
        %v2724 = vld [vmem:[%s2723] sm:$0x1]
        %2725 = vadd.xlane.f32.xlu0 %v2720
        %v2726 = vpop.xlane.xlu0 %2725
        %v2727 = vmul.f32 %v2726, %v649
        %v2728 = vsub.f32 %v2720, %v2727
        %v2729 = vmul.f32 %v2728, %v2728
        %2730 = vadd.xlane.f32.xlu0 %v2729
        %v2731 = vpop.xlane.xlu0 %2730
        %v2732 = vmul.f32 %v2731, %v649
        %v2733 = vadd.f32 %v2732, 1e-05
        %v2734 = vrsqrt.pop %v2733
        %v2735 = vmul.f32 %v2728, %v2734
        %v2737 = vlaneseq
        %v2738 = vshrl.u32 %v2737, 7
        %v2739 = vsub.s32 0, %v2738
        %v2740 = vrot.slane %v2722, %v2739
        %v2742 = vmul.f32 %v2735, %v2740
        %v2744 = vlaneseq
        %v2745 = vshrl.u32 %v2744, 7
        %v2746 = vsub.s32 0, %v2745
        %v2747 = vrot.slane %v2724, %v2746
        %v2749 = vadd.f32 %v2742, %v2747
        %s2750 = scalar_lea.vmem [#allocation8], 384
        %v2751 = vld [vmem:[%s2750] sm:$0xff]
        %v2752 = vld [vmem:[%s2750 + $0x8] sm:$0xff]
        %v2753 = vld [vmem:[%s2750 + $0x10] sm:$0xff]
        %v2754 = vld [vmem:[%s2750 + $0x18] sm:$0xff]
        %v2755 = vld [vmem:[%s2750 + $0x20] sm:$0xff]
        %v2756 = vld [vmem:[%s2750 + $0x28] sm:$0xff]
        %v2757 = vld [vmem:[%s2750 + $0x30] sm:$0xff]
        %v2758 = vld [vmem:[%s2750 + $0x38] sm:$0xff]
        %v2759 = vld [vmem:[%s2750 + $0x40] sm:$0xff]
        %v2760 = vld [vmem:[%s2750 + $0x48] sm:$0xff]
        %v2761 = vld [vmem:[%s2750 + $0x50] sm:$0xff]
        %v2762 = vld [vmem:[%s2750 + $0x58] sm:$0xff]
        %v2763 = vld [vmem:[%s2750 + $0x60] sm:$0xff]
        %v2764 = vld [vmem:[%s2750 + $0x68] sm:$0xff]
        %v2765 = vld [vmem:[%s2750 + $0x70] sm:$0xff]
        %v2766 = vld [vmem:[%s2750 + $0x78] sm:$0xff]
        %v2767 = vld [vmem:[%s2750 + $0x80] sm:$0xff]
        %v2768 = vld [vmem:[%s2750 + $0x88] sm:$0xff]
        %v2769 = vld [vmem:[%s2750 + $0x90] sm:$0xff]
        %v2770 = vld [vmem:[%s2750 + $0x98] sm:$0xff]
        %v2771 = vld [vmem:[%s2750 + $0xa0] sm:$0xff]
        %v2772 = vld [vmem:[%s2750 + $0xa8] sm:$0xff]
        %v2773 = vld [vmem:[%s2750 + $0xb0] sm:$0xff]
        %v2774 = vld [vmem:[%s2750 + $0xb8] sm:$0xff]
        %v2775 = vld [vmem:[%s2750 + $0xc0] sm:$0xff]
        %v2776 = vld [vmem:[%s2750 + $0xc8] sm:$0xff]
        %v2777 = vld [vmem:[%s2750 + $0xd0] sm:$0xff]
        %v2778 = vld [vmem:[%s2750 + $0xd8] sm:$0xff]
        %v2779 = vld [vmem:[%s2750 + $0xe0] sm:$0xff]
        %v2780 = vld [vmem:[%s2750 + $0xe8] sm:$0xff]
        %v2781 = vld [vmem:[%s2750 + $0xf0] sm:$0xff]
        %v2782 = vld [vmem:[%s2750 + $0xf8] sm:$0xff]
        %v2783 = vld [vmem:[%s2750 + $0x100] sm:$0xff]
        %v2784 = vld [vmem:[%s2750 + $0x108] sm:$0xff]
        %v2785 = vld [vmem:[%s2750 + $0x110] sm:$0xff]
        %v2786 = vld [vmem:[%s2750 + $0x118] sm:$0xff]
        %v2787 = vld [vmem:[%s2750 + $0x120] sm:$0xff]
        %v2788 = vld [vmem:[%s2750 + $0x128] sm:$0xff]
        %v2789 = vld [vmem:[%s2750 + $0x130] sm:$0xff]
        %v2790 = vld [vmem:[%s2750 + $0x138] sm:$0xff]
        %v2791 = vld [vmem:[%s2750 + $0x140] sm:$0xff]
        %v2792 = vld [vmem:[%s2750 + $0x148] sm:$0xff]
        %v2793 = vld [vmem:[%s2750 + $0x150] sm:$0xff]
        %v2794 = vld [vmem:[%s2750 + $0x158] sm:$0xff]
        %v2795 = vld [vmem:[%s2750 + $0x160] sm:$0xff]
        %v2796 = vld [vmem:[%s2750 + $0x168] sm:$0xff]
        %v2797 = vld [vmem:[%s2750 + $0x170] sm:$0xff]
        %v2798 = vld [vmem:[%s2750 + $0x178] sm:$0xff]
        %s2799 = scalar_lea.vmem %s4, 3
        %v2800 = vld [vmem:[%s2799] sm:$0x7]
        %v2802 = vlaneseq
        %v2803 = vshrl.u32 %v2802, 7
        %v2804 = vsub.s32 0, %v2803
        %v2805 = vrot.slane %v2800, %v2804
        %v2806 = vlaneseq
        %v2807 = vshrl.u32 %v2806, 7
        %v2808 = vsub.s32 1, %v2807
        %v2809 = vrot.slane %v2800, %v2808
        %v2810 = vlaneseq
        %v2811 = vshrl.u32 %v2810, 7
        %v2812 = vsub.s32 2, %v2811
        %v2813 = vrot.slane %v2800, %v2812
        %2817 = vmatprep.subr.mxu0 %v2752
        %2818 = vmatpush1.msra.mxu0 %v2751
        %2819 = vmatprep.subr.mxu0 %v2755
        %2820 = vmatpush1.msra.mxu0 %v2754
        %2821 = vmatprep.subr.mxu0 %v2758
        %2822 = vmatpush1.msra.mxu0 %v2757
        %2823 = vmatprep.subr.mxu0 %v2761
        %2824 = vmatpush1.msra.mxu0 %v2760
        %2825 = vmatprep.subr.mxu0 %v2764
        %2826 = vmatpush1.msra.mxu0 %v2763
        %2827 = vmatprep.subr.mxu0 %v2767
        %2828 = vmatpush1.msra.mxu0 %v2766
        %2829 = vmatprep.subr.mxu0 %v2770
        %2830 = vmatpush1.msra.mxu0 %v2769
        %2831 = vmatprep.subr.mxu0 %v2773
        %2832 = vmatpush1.msra.mxu0 %v2772
        %2833 = vmatprep.subr.mxu0 %v2776
        %2834 = vmatpush1.msra.mxu0 %v2775
        %2835 = vmatprep.subr.mxu0 %v2779
        %2836 = vmatpush1.msra.mxu0 %v2778
        %2837 = vmatprep.subr.mxu0 %v2782
        %2838 = vmatpush1.msra.mxu0 %v2781
        %2839 = vmatprep.subr.mxu0 %v2785
        %2840 = vmatpush1.msra.mxu0 %v2784
        %2841 = vmatprep.subr.mxu0 %v2788
        %2842 = vmatpush1.msra.mxu0 %v2787
        %2843 = vmatprep.subr.mxu0 %v2791
        %2844 = vmatpush1.msra.mxu0 %v2790
        %2845 = vmatprep.subr.mxu0 %v2794
        %2846 = vmatpush1.msra.mxu0 %v2793
        %2847 = vmatprep.subr.mxu0 %v2797
        %2848 = vmatpush1.msra.mxu0 %v2796
        %2849 = vmatprep.subr.mxu0 0.0
        %2850 = vmatpush1.msra.mxu0 0.0
        %2851 = vmatprep.subr.mxu0 0.0
        %2852 = vmatpush1.msra.mxu0 0.0
        %2853 = vmatprep.subr.mxu0 0.0
        %2854 = vmatpush1.msra.mxu0 0.0
        %2855 = vmatprep.subr.mxu0 0.0
        %2856 = vmatpush1.msra.mxu0 0.0
        %2857 = vmatprep.subr.mxu0 0.0
        %2858 = vmatpush1.msra.mxu0 0.0
        %2859 = vmatprep.subr.mxu0 0.0
        %2860 = vmatpush1.msra.mxu0 0.0
        %2861 = vmatprep.subr.mxu0 0.0
        %2862 = vmatpush1.msra.mxu0 0.0
        %2863 = vmatprep.subr.mxu0 0.0
        %2864 = vmatpush1.msra.mxu0 0.0
        %2865 = vmatprep.subr.mxu0 0.0
        %2866 = vmatpush1.msra.mxu0 0.0
        %2867 = vmatprep.subr.mxu0 0.0
        %2868 = vmatpush1.msra.mxu0 0.0
        %2869 = vmatprep.subr.mxu0 0.0
        %2870 = vmatpush1.msra.mxu0 0.0
        %2871 = vmatprep.subr.mxu0 0.0
        %2872 = vmatpush1.msra.mxu0 0.0
        %2873 = vmatprep.subr.mxu0 0.0
        %2874 = vmatpush1.msra.mxu0 0.0
        %2875 = vmatprep.subr.mxu0 0.0
        %2876 = vmatpush1.msra.mxu0 0.0
        %2877 = vmatprep.subr.mxu0 0.0
        %2878 = vmatpush1.msra.mxu0 0.0
        %2879 = vmatprep.subr.mxu0 0.0
        %2880 = vmatpush1.msra.mxu0 0.0
        %2881 = vmatprep.mubr.f32.mxu0 0.0
        %2882 = vmatmul.mubr.f32.gmra.mrb[0].mxu0 %v2749
        %v2883 = vpop.f32.mrb[0].mxu0
        %v2884 = vadd.f32 %v2805, %v2883
        %v2885 = vpop.f32.mrb[0].mxu0
        %v2886 = vadd.f32 %v2809, %v2885
        %2887 = vdwg.mxu0
        %2888 = vmatprep.subr.mxu0 0.0
        %2889 = vmatpush1.msra.mxu0 %v2753
        %2890 = vmatprep.subr.mxu0 0.0
        %2891 = vmatpush1.msra.mxu0 %v2756
        %2892 = vmatprep.subr.mxu0 0.0
        %2893 = vmatpush1.msra.mxu0 %v2759
        %2894 = vmatprep.subr.mxu0 0.0
        %2895 = vmatpush1.msra.mxu0 %v2762
        %2896 = vmatprep.subr.mxu0 0.0
        %2897 = vmatpush1.msra.mxu0 %v2765
        %2898 = vmatprep.subr.mxu0 0.0
        %2899 = vmatpush1.msra.mxu0 %v2768
        %2900 = vmatprep.subr.mxu0 0.0
        %2901 = vmatpush1.msra.mxu0 %v2771
        %2902 = vmatprep.subr.mxu0 0.0
        %2903 = vmatpush1.msra.mxu0 %v2774
        %2904 = vmatprep.subr.mxu0 0.0
        %2905 = vmatpush1.msra.mxu0 %v2777
        %2906 = vmatprep.subr.mxu0 0.0
        %2907 = vmatpush1.msra.mxu0 %v2780
        %2908 = vmatprep.subr.mxu0 0.0
        %2909 = vmatpush1.msra.mxu0 %v2783
        %2910 = vmatprep.subr.mxu0 0.0
        %2911 = vmatpush1.msra.mxu0 %v2786
        %2912 = vmatprep.subr.mxu0 0.0
        %2913 = vmatpush1.msra.mxu0 %v2789
        %2914 = vmatprep.subr.mxu0 0.0
        %2915 = vmatpush1.msra.mxu0 %v2792
        %2916 = vmatprep.subr.mxu0 0.0
        %2917 = vmatpush1.msra.mxu0 %v2795
        %2918 = vmatprep.subr.mxu0 0.0
        %2919 = vmatpush1.msra.mxu0 %v2798
        %2920 = vmatprep.subr.mxu0 0.0
        %2921 = vmatpush1.msra.mxu0 0.0
        %2922 = vmatprep.subr.mxu0 0.0
        %2923 = vmatpush1.msra.mxu0 0.0
        %2924 = vmatprep.subr.mxu0 0.0
        %2925 = vmatpush1.msra.mxu0 0.0
        %2926 = vmatprep.subr.mxu0 0.0
        %2927 = vmatpush1.msra.mxu0 0.0
        %2928 = vmatprep.subr.mxu0 0.0
        %2929 = vmatpush1.msra.mxu0 0.0
        %2930 = vmatprep.subr.mxu0 0.0
        %2931 = vmatpush1.msra.mxu0 0.0
        %2932 = vmatprep.subr.mxu0 0.0
        %2933 = vmatpush1.msra.mxu0 0.0
        %2934 = vmatprep.subr.mxu0 0.0
        %2935 = vmatpush1.msra.mxu0 0.0
        %2936 = vmatprep.subr.mxu0 0.0
        %2937 = vmatpush1.msra.mxu0 0.0
        %2938 = vmatprep.subr.mxu0 0.0
        %2939 = vmatpush1.msra.mxu0 0.0
        %2940 = vmatprep.subr.mxu0 0.0
        %2941 = vmatpush1.msra.mxu0 0.0
        %2942 = vmatprep.subr.mxu0 0.0
        %2943 = vmatpush1.msra.mxu0 0.0
        %2944 = vmatprep.subr.mxu0 0.0
        %2945 = vmatpush1.msra.mxu0 0.0
        %2946 = vmatprep.subr.mxu0 0.0
        %2947 = vmatpush1.msra.mxu0 0.0
        %2948 = vmatprep.subr.mxu0 0.0
        %2949 = vmatpush1.msra.mxu0 0.0
        %2950 = vmatprep.subr.mxu0 0.0
        %2951 = vmatpush1.msra.mxu0 0.0
        %2952 = vmatprep.mubr.f32.mxu0 0.0
        %2953 = vmatmul.mubr.f32.gmra.mrb[0].mxu0 %v2749
        %v2954 = vpop.f32.mrb[0].mxu0
        %v2955 = vadd.f32 %v2813, %v2954
        %v2956 = vpop.f32.mrb[0].mxu0
        %2957 = vdwg.mxu0
        %2959 = vrot.lane.b32.xlu0 %v2884, 96
        %v2960 = vpop.permute.xlu0 %2959
        %2962 = vrot.lane.b32.xlu0 %v2884, 64
        %v2963 = vpop.permute.xlu0 %2962
        %2965 = vrot.lane.b32.xlu0 %v2884, 32
        %v2966 = vpop.permute.xlu0 %2965
        %v2968 = vcombine.low %v2884, %v2963
        %v2969 = vcombine.high %v2884, %v2963
        %v2971 = vunpack.c.l.s4 1983009808
        %v2972 = vunpack.c.0.s8 %v2971
        %v2973 = vlaneseq
        %v2974 = vshrl.u32 %v2973, 7
        %v2975 = vsub.s32 %v2972, %v2974
        %v2976 = vrot.slane %v2968, %v2975
        %v2978 = vunpack.c.l.s4 1983009808
        %v2979 = vunpack.c.0.s8 %v2978
        %v2980 = vlaneseq
        %v2981 = vshrl.u32 %v2980, 7
        %v2982 = vsub.s32 %v2979, %v2981
        %v2983 = vrot.slane %v2969, %v2982
        %v2984 = vcombine.low %v2960, %v2966
        %v2985 = vcombine.high %v2960, %v2966
        %v2987 = vunpack.c.l.s4 1983009808
        %v2988 = vunpack.c.0.s8 %v2987
        %v2989 = vlaneseq
        %v2990 = vshrl.u32 %v2989, 7
        %v2991 = vsub.s32 %v2988, %v2990
        %v2992 = vrot.slane %v2984, %v2991
        %v2994 = vunpack.c.l.s4 1983009808
        %v2995 = vunpack.c.0.s8 %v2994
        %v2996 = vlaneseq
        %v2997 = vshrl.u32 %v2996, 7
        %v2998 = vsub.s32 %v2995, %v2997
        %v2999 = vrot.slane %v2985, %v2998
        %v3000 = vcombine.low %v2976, %v2992
        %v3001 = vcombine.high %v2976, %v2992
        %v3003 = vunpack.c.l.s4 1934713408
        %v3004 = vunpack.c.0.s8 %v3003
        %v3005 = vlaneseq
        %v3006 = vshrl.u32 %v3005, 7
        %v3007 = vsub.s32 %v3004, %v3006
        %v3008 = vrot.slane %v3000, %v3007
        %v3010 = vunpack.c.l.s4 1934713408
        %v3011 = vunpack.c.0.s8 %v3010
        %v3012 = vlaneseq
        %v3013 = vshrl.u32 %v3012, 7
        %v3014 = vsub.s32 %v3011, %v3013
        %v3015 = vrot.slane %v3001, %v3014
        %v3016 = vcombine.low %v2983, %v2999
        %v3017 = vcombine.high %v2983, %v2999
        %v3019 = vunpack.c.l.s4 1934713408
        %v3020 = vunpack.c.0.s8 %v3019
        %v3021 = vlaneseq
        %v3022 = vshrl.u32 %v3021, 7
        %v3023 = vsub.s32 %v3020, %v3022
        %v3024 = vrot.slane %v3016, %v3023
        %v3026 = vunpack.c.l.s4 1934713408
        %v3027 = vunpack.c.0.s8 %v3026
        %v3028 = vlaneseq
        %v3029 = vshrl.u32 %v3028, 7
        %v3030 = vsub.s32 %v3027, %v3029
        %v3031 = vrot.slane %v3017, %v3030
        %v3032 = vcombine.high %v3008, 0.0
        %v3033 = vcombine.high %v3015, 0.0
        %v3034 = vcombine.high %v3024, 0.0
        %v3035 = vcombine.high %v3031, 0.0
        %v3036 = vcombine.low %v3008, %v3015
        %v3038 = vunpack.c.l.s4 1983009808
        %v3039 = vunpack.c.0.s8 %v3038
        %v3040 = vlaneseq
        %v3041 = vshrl.u32 %v3040, 7
        %v3042 = vsub.s32 %v3039, %v3041
        %v3043 = vrot.slane %v3036, %v3042
        %v3044 = vcombine.low %v3032, %v3033
        %v3046 = vunpack.c.l.s4 1983009808
        %v3047 = vunpack.c.0.s8 %v3046
        %v3048 = vlaneseq
        %v3049 = vshrl.u32 %v3048, 7
        %v3050 = vsub.s32 %v3047, %v3049
        %v3051 = vrot.slane %v3044, %v3050
        %v3052 = vcombine.low %v3024, %v3031
        %v3054 = vunpack.c.l.s4 1983009808
        %v3055 = vunpack.c.0.s8 %v3054
        %v3056 = vlaneseq
        %v3057 = vshrl.u32 %v3056, 7
        %v3058 = vsub.s32 %v3055, %v3057
        %v3059 = vrot.slane %v3052, %v3058
        %v3060 = vcombine.low %v3034, %v3035
        %v3062 = vunpack.c.l.s4 1983009808
        %v3063 = vunpack.c.0.s8 %v3062
        %v3064 = vlaneseq
        %v3065 = vshrl.u32 %v3064, 7
        %v3066 = vsub.s32 %v3063, %v3065
        %v3067 = vrot.slane %v3060, %v3066
        %v3068 = vcombine.low %v3043, %v3051
        %v3069 = vcombine.high %v3043, %v3051
        %v3071 = vunpack.c.l.s4 1934713408
        %v3072 = vunpack.c.0.s8 %v3071
        %v3073 = vlaneseq
        %v3074 = vshrl.u32 %v3073, 7
        %v3075 = vsub.s32 %v3072, %v3074
        %v3076 = vrot.slane %v3068, %v3075
        %v3078 = vunpack.c.l.s4 1934713408
        %v3079 = vunpack.c.0.s8 %v3078
        %v3080 = vlaneseq
        %v3081 = vshrl.u32 %v3080, 7
        %v3082 = vsub.s32 %v3079, %v3081
        %v3083 = vrot.slane %v3069, %v3082
        %v3084 = vcombine.low %v3059, %v3067
        %v3085 = vcombine.high %v3059, %v3067
        %v3087 = vunpack.c.l.s4 1934713408
        %v3088 = vunpack.c.0.s8 %v3087
        %v3089 = vlaneseq
        %v3090 = vshrl.u32 %v3089, 7
        %v3091 = vsub.s32 %v3088, %v3090
        %v3092 = vrot.slane %v3084, %v3091
        %v3094 = vunpack.c.l.s4 1934713408
        %v3095 = vunpack.c.0.s8 %v3094
        %v3096 = vlaneseq
        %v3097 = vshrl.u32 %v3096, 7
        %v3098 = vsub.s32 %v3095, %v3097
        %v3099 = vrot.slane %v3085, %v3098
        %v3100 = vcombine.low %v3076, %v3092
        %v3101 = vcombine.high %v3076, %v3092
        %v3102 = vcombine.low %v3083, %v3099
        %v3103 = vcombine.high %v3083, %v3099
        %3105 = vrot.lane.b32.xlu0 %v2886, 96
        %v3106 = vpop.permute.xlu0 %3105
        %3108 = vrot.lane.b32.xlu0 %v2886, 64
        %v3109 = vpop.permute.xlu0 %3108
        %3111 = vrot.lane.b32.xlu0 %v2886, 32
        %v3112 = vpop.permute.xlu0 %3111
        %v3114 = vcombine.low %v2886, %v3109
        %v3115 = vcombine.high %v2886, %v3109
        %v3117 = vunpack.c.l.s4 1983009808
        %v3118 = vunpack.c.0.s8 %v3117
        %v3119 = vlaneseq
        %v3120 = vshrl.u32 %v3119, 7
        %v3121 = vsub.s32 %v3118, %v3120
        %v3122 = vrot.slane %v3114, %v3121
        %v3124 = vunpack.c.l.s4 1983009808
        %v3125 = vunpack.c.0.s8 %v3124
        %v3126 = vlaneseq
        %v3127 = vshrl.u32 %v3126, 7
        %v3128 = vsub.s32 %v3125, %v3127
        %v3129 = vrot.slane %v3115, %v3128
        %v3130 = vcombine.low %v3106, %v3112
        %v3131 = vcombine.high %v3106, %v3112
        %v3133 = vunpack.c.l.s4 1983009808
        %v3134 = vunpack.c.0.s8 %v3133
        %v3135 = vlaneseq
        %v3136 = vshrl.u32 %v3135, 7
        %v3137 = vsub.s32 %v3134, %v3136
        %v3138 = vrot.slane %v3130, %v3137
        %v3140 = vunpack.c.l.s4 1983009808
        %v3141 = vunpack.c.0.s8 %v3140
        %v3142 = vlaneseq
        %v3143 = vshrl.u32 %v3142, 7
        %v3144 = vsub.s32 %v3141, %v3143
        %v3145 = vrot.slane %v3131, %v3144
        %v3146 = vcombine.low %v3122, %v3138
        %v3147 = vcombine.high %v3122, %v3138
        %v3149 = vunpack.c.l.s4 1934713408
        %v3150 = vunpack.c.0.s8 %v3149
        %v3151 = vlaneseq
        %v3152 = vshrl.u32 %v3151, 7
        %v3153 = vsub.s32 %v3150, %v3152
        %v3154 = vrot.slane %v3146, %v3153
        %v3156 = vunpack.c.l.s4 1934713408
        %v3157 = vunpack.c.0.s8 %v3156
        %v3158 = vlaneseq
        %v3159 = vshrl.u32 %v3158, 7
        %v3160 = vsub.s32 %v3157, %v3159
        %v3161 = vrot.slane %v3147, %v3160
        %v3162 = vcombine.low %v3129, %v3145
        %v3163 = vcombine.high %v3129, %v3145
        %v3165 = vunpack.c.l.s4 1934713408
        %v3166 = vunpack.c.0.s8 %v3165
        %v3167 = vlaneseq
        %v3168 = vshrl.u32 %v3167, 7
        %v3169 = vsub.s32 %v3166, %v3168
        %v3170 = vrot.slane %v3162, %v3169
        %v3172 = vunpack.c.l.s4 1934713408
        %v3173 = vunpack.c.0.s8 %v3172
        %v3174 = vlaneseq
        %v3175 = vshrl.u32 %v3174, 7
        %v3176 = vsub.s32 %v3173, %v3175
        %v3177 = vrot.slane %v3163, %v3176
        %v3178 = vcombine.high %v3154, 0.0
        %v3179 = vcombine.high %v3161, 0.0
        %v3180 = vcombine.high %v3170, 0.0
        %v3181 = vcombine.high %v3177, 0.0
        %v3182 = vcombine.low %v3154, %v3161
        %v3184 = vunpack.c.l.s4 1983009808
        %v3185 = vunpack.c.0.s8 %v3184
        %v3186 = vlaneseq
        %v3187 = vshrl.u32 %v3186, 7
        %v3188 = vsub.s32 %v3185, %v3187
        %v3189 = vrot.slane %v3182, %v3188
        %v3190 = vcombine.low %v3178, %v3179
        %v3192 = vunpack.c.l.s4 1983009808
        %v3193 = vunpack.c.0.s8 %v3192
        %v3194 = vlaneseq
        %v3195 = vshrl.u32 %v3194, 7
        %v3196 = vsub.s32 %v3193, %v3195
        %v3197 = vrot.slane %v3190, %v3196
        %v3198 = vcombine.low %v3170, %v3177
        %v3200 = vunpack.c.l.s4 1983009808
        %v3201 = vunpack.c.0.s8 %v3200
        %v3202 = vlaneseq
        %v3203 = vshrl.u32 %v3202, 7
        %v3204 = vsub.s32 %v3201, %v3203
        %v3205 = vrot.slane %v3198, %v3204
        %v3206 = vcombine.low %v3180, %v3181
        %v3208 = vunpack.c.l.s4 1983009808
        %v3209 = vunpack.c.0.s8 %v3208
        %v3210 = vlaneseq
        %v3211 = vshrl.u32 %v3210, 7
        %v3212 = vsub.s32 %v3209, %v3211
        %v3213 = vrot.slane %v3206, %v3212
        %v3214 = vcombine.low %v3189, %v3197
        %v3215 = vcombine.high %v3189, %v3197
        %v3217 = vunpack.c.l.s4 1934713408
        %v3218 = vunpack.c.0.s8 %v3217
        %v3219 = vlaneseq
        %v3220 = vshrl.u32 %v3219, 7
        %v3221 = vsub.s32 %v3218, %v3220
        %v3222 = vrot.slane %v3214, %v3221
        %v3224 = vunpack.c.l.s4 1934713408
        %v3225 = vunpack.c.0.s8 %v3224
        %v3226 = vlaneseq
        %v3227 = vshrl.u32 %v3226, 7
        %v3228 = vsub.s32 %v3225, %v3227
        %v3229 = vrot.slane %v3215, %v3228
        %v3230 = vcombine.low %v3205, %v3213
        %v3231 = vcombine.high %v3205, %v3213
        %v3233 = vunpack.c.l.s4 1934713408
        %v3234 = vunpack.c.0.s8 %v3233
        %v3235 = vlaneseq
        %v3236 = vshrl.u32 %v3235, 7
        %v3237 = vsub.s32 %v3234, %v3236
        %v3238 = vrot.slane %v3230, %v3237
        %v3240 = vunpack.c.l.s4 1934713408
        %v3241 = vunpack.c.0.s8 %v3240
        %v3242 = vlaneseq
        %v3243 = vshrl.u32 %v3242, 7
        %v3244 = vsub.s32 %v3241, %v3243
        %v3245 = vrot.slane %v3231, %v3244
        %v3246 = vcombine.low %v3222, %v3238
        %v3247 = vcombine.high %v3222, %v3238
        %v3248 = vcombine.low %v3229, %v3245
        %v3249 = vcombine.high %v3229, %v3245
        %3251 = vrot.lane.b32.xlu0 %v2955, 96
        %v3252 = vpop.permute.xlu0 %3251
        %3254 = vrot.lane.b32.xlu0 %v2955, 64
        %v3255 = vpop.permute.xlu0 %3254
        %3257 = vrot.lane.b32.xlu0 %v2955, 32
        %v3258 = vpop.permute.xlu0 %3257
        %v3260 = vcombine.low %v2955, %v3255
        %v3261 = vcombine.high %v2955, %v3255
        %v3263 = vunpack.c.l.s4 1983009808
        %v3264 = vunpack.c.0.s8 %v3263
        %v3265 = vlaneseq
        %v3266 = vshrl.u32 %v3265, 7
        %v3267 = vsub.s32 %v3264, %v3266
        %v3268 = vrot.slane %v3260, %v3267
        %v3270 = vunpack.c.l.s4 1983009808
        %v3271 = vunpack.c.0.s8 %v3270
        %v3272 = vlaneseq
        %v3273 = vshrl.u32 %v3272, 7
        %v3274 = vsub.s32 %v3271, %v3273
        %v3275 = vrot.slane %v3261, %v3274
        %v3276 = vcombine.low %v3252, %v3258
        %v3277 = vcombine.high %v3252, %v3258
        %v3279 = vunpack.c.l.s4 1983009808
        %v3280 = vunpack.c.0.s8 %v3279
        %v3281 = vlaneseq
        %v3282 = vshrl.u32 %v3281, 7
        %v3283 = vsub.s32 %v3280, %v3282
        %v3284 = vrot.slane %v3276, %v3283
        %v3286 = vunpack.c.l.s4 1983009808
        %v3287 = vunpack.c.0.s8 %v3286
        %v3288 = vlaneseq
        %v3289 = vshrl.u32 %v3288, 7
        %v3290 = vsub.s32 %v3287, %v3289
        %v3291 = vrot.slane %v3277, %v3290
        %v3292 = vcombine.low %v3268, %v3284
        %v3293 = vcombine.high %v3268, %v3284
        %v3295 = vunpack.c.l.s4 1934713408
        %v3296 = vunpack.c.0.s8 %v3295
        %v3297 = vlaneseq
        %v3298 = vshrl.u32 %v3297, 7
        %v3299 = vsub.s32 %v3296, %v3298
        %v3300 = vrot.slane %v3292, %v3299
        %v3302 = vunpack.c.l.s4 1934713408
        %v3303 = vunpack.c.0.s8 %v3302
        %v3304 = vlaneseq
        %v3305 = vshrl.u32 %v3304, 7
        %v3306 = vsub.s32 %v3303, %v3305
        %v3307 = vrot.slane %v3293, %v3306
        %v3308 = vcombine.low %v3275, %v3291
        %v3309 = vcombine.high %v3275, %v3291
        %v3311 = vunpack.c.l.s4 1934713408
        %v3312 = vunpack.c.0.s8 %v3311
        %v3313 = vlaneseq
        %v3314 = vshrl.u32 %v3313, 7
        %v3315 = vsub.s32 %v3312, %v3314
        %v3316 = vrot.slane %v3308, %v3315
        %v3318 = vunpack.c.l.s4 1934713408
        %v3319 = vunpack.c.0.s8 %v3318
        %v3320 = vlaneseq
        %v3321 = vshrl.u32 %v3320, 7
        %v3322 = vsub.s32 %v3319, %v3321
        %v3323 = vrot.slane %v3309, %v3322
        %v3324 = vcombine.high %v3300, 0.0
        %v3325 = vcombine.high %v3307, 0.0
        %v3326 = vcombine.high %v3316, 0.0
        %v3327 = vcombine.high %v3323, 0.0
        %v3328 = vcombine.low %v3300, %v3307
        %v3330 = vunpack.c.l.s4 1983009808
        %v3331 = vunpack.c.0.s8 %v3330
        %v3332 = vlaneseq
        %v3333 = vshrl.u32 %v3332, 7
        %v3334 = vsub.s32 %v3331, %v3333
        %v3335 = vrot.slane %v3328, %v3334
        %v3336 = vcombine.low %v3324, %v3325
        %v3338 = vunpack.c.l.s4 1983009808
        %v3339 = vunpack.c.0.s8 %v3338
        %v3340 = vlaneseq
        %v3341 = vshrl.u32 %v3340, 7
        %v3342 = vsub.s32 %v3339, %v3341
        %v3343 = vrot.slane %v3336, %v3342
        %v3344 = vcombine.low %v3316, %v3323
        %v3346 = vunpack.c.l.s4 1983009808
        %v3347 = vunpack.c.0.s8 %v3346
        %v3348 = vlaneseq
        %v3349 = vshrl.u32 %v3348, 7
        %v3350 = vsub.s32 %v3347, %v3349
        %v3351 = vrot.slane %v3344, %v3350
        %v3352 = vcombine.low %v3326, %v3327
        %v3354 = vunpack.c.l.s4 1983009808
        %v3355 = vunpack.c.0.s8 %v3354
        %v3356 = vlaneseq
        %v3357 = vshrl.u32 %v3356, 7
        %v3358 = vsub.s32 %v3355, %v3357
        %v3359 = vrot.slane %v3352, %v3358
        %v3360 = vcombine.low %v3335, %v3343
        %v3361 = vcombine.high %v3335, %v3343
        %v3363 = vunpack.c.l.s4 1934713408
        %v3364 = vunpack.c.0.s8 %v3363
        %v3365 = vlaneseq
        %v3366 = vshrl.u32 %v3365, 7
        %v3367 = vsub.s32 %v3364, %v3366
        %v3368 = vrot.slane %v3360, %v3367
        %v3370 = vunpack.c.l.s4 1934713408
        %v3371 = vunpack.c.0.s8 %v3370
        %v3372 = vlaneseq
        %v3373 = vshrl.u32 %v3372, 7
        %v3374 = vsub.s32 %v3371, %v3373
        %v3375 = vrot.slane %v3361, %v3374
        %v3376 = vcombine.low %v3351, %v3359
        %v3377 = vcombine.high %v3351, %v3359
        %v3379 = vunpack.c.l.s4 1934713408
        %v3380 = vunpack.c.0.s8 %v3379
        %v3381 = vlaneseq
        %v3382 = vshrl.u32 %v3381, 7
        %v3383 = vsub.s32 %v3380, %v3382
        %v3384 = vrot.slane %v3376, %v3383
        %v3386 = vunpack.c.l.s4 1934713408
        %v3387 = vunpack.c.0.s8 %v3386
        %v3388 = vlaneseq
        %v3389 = vshrl.u32 %v3388, 7
        %v3390 = vsub.s32 %v3387, %v3389
        %v3391 = vrot.slane %v3377, %v3390
        %v3392 = vcombine.low %v3368, %v3384
        %v3393 = vcombine.high %v3368, %v3384
        %v3394 = vcombine.low %v3375, %v3391
        %v3395 = vcombine.high %v3375, %v3391
        %v3397 = vsel %vm1317, %v3100, 0
        %v3400 = vsel %vm1317, %v3246, 0
        %3402 = vmatprep.subr.mxu0 0.0
        %3403 = vmatpush1.xpose.msra.mxu0 %v3400
        %3404 = vmatprep.subr.mxu0 0.0
        %3405 = vmatpush1.xpose.msra.mxu0 0.0
        %3406 = vmatprep.subr.mxu0 0.0
        %3407 = vmatpush1.xpose.msra.mxu0 0.0
        %3408 = vmatprep.subr.mxu0 0.0
        %3409 = vmatpush1.xpose.msra.mxu0 0.0
        %3410 = vmatprep.subr.mxu0 0.0
        %3411 = vmatpush1.xpose.msra.mxu0 0.0
        %3412 = vmatprep.subr.mxu0 0.0
        %3413 = vmatpush1.xpose.msra.mxu0 0.0
        %3414 = vmatprep.subr.mxu0 0.0
        %3415 = vmatpush1.xpose.msra.mxu0 0.0
        %3416 = vmatprep.subr.mxu0 0.0
        %3417 = vmatpush1.xpose.msra.mxu0 0.0
        %3418 = vmatprep.subr.mxu0 0.0
        %3419 = vmatpush1.xpose.msra.mxu0 0.0
        %3420 = vmatprep.subr.mxu0 0.0
        %3421 = vmatpush1.xpose.msra.mxu0 0.0
        %3422 = vmatprep.subr.mxu0 0.0
        %3423 = vmatpush1.xpose.msra.mxu0 0.0
        %3424 = vmatprep.subr.mxu0 0.0
        %3425 = vmatpush1.xpose.msra.mxu0 0.0
        %3426 = vmatprep.subr.mxu0 0.0
        %3427 = vmatpush1.xpose.msra.mxu0 0.0
        %3428 = vmatprep.subr.mxu0 0.0
        %3429 = vmatpush1.xpose.msra.mxu0 0.0
        %3430 = vmatprep.subr.mxu0 0.0
        %3431 = vmatpush1.xpose.msra.mxu0 0.0
        %3432 = vmatprep.subr.mxu0 0.0
        %3433 = vmatpush1.xpose.msra.mxu0 0.0
        %3434 = vmatprep.subr.mxu0 0.0
        %3435 = vmatpush1.xpose.msra.mxu0 0.0
        %3436 = vmatprep.subr.mxu0 0.0
        %3437 = vmatpush1.xpose.msra.mxu0 0.0
        %3438 = vmatprep.subr.mxu0 0.0
        %3439 = vmatpush1.xpose.msra.mxu0 0.0
        %3440 = vmatprep.subr.mxu0 0.0
        %3441 = vmatpush1.xpose.msra.mxu0 0.0
        %3442 = vmatprep.subr.mxu0 0.0
        %3443 = vmatpush1.xpose.msra.mxu0 0.0
        %3444 = vmatprep.subr.mxu0 0.0
        %3445 = vmatpush1.xpose.msra.mxu0 0.0
        %3446 = vmatprep.subr.mxu0 0.0
        %3447 = vmatpush1.xpose.msra.mxu0 0.0
        %3448 = vmatprep.subr.mxu0 0.0
        %3449 = vmatpush1.xpose.msra.mxu0 0.0
        %3450 = vmatprep.subr.mxu0 0.0
        %3451 = vmatpush1.xpose.msra.mxu0 0.0
        %3452 = vmatprep.subr.mxu0 0.0
        %3453 = vmatpush1.xpose.msra.mxu0 0.0
        %3454 = vmatprep.subr.mxu0 0.0
        %3455 = vmatpush1.xpose.msra.mxu0 0.0
        %3456 = vmatprep.subr.mxu0 0.0
        %3457 = vmatpush1.xpose.msra.mxu0 0.0
        %3458 = vmatprep.subr.mxu0 0.0
        %3459 = vmatpush1.xpose.msra.mxu0 0.0
        %3460 = vmatprep.subr.mxu0 0.0
        %3461 = vmatpush1.xpose.msra.mxu0 0.0
        %3462 = vmatprep.subr.mxu0 0.0
        %3463 = vmatpush1.xpose.msra.mxu0 0.0
        %3464 = vmatprep.subr.mxu0 0.0
        %3465 = vmatpush1.xpose.msra.mxu0 0.0
        %3466 = vmatprep.mubr.f32.mxu0 0.0
        %3467 = vmatmul.mubr.f32.gmra.mrb[0].mxu0 %v3397
        %v3468 = vpop.f32.mrb[0].mxu0
        %v3469 = vadd.f32 0.0, %v3468
        %v3470 = vpop.f32.mrb[0].mxu0
        %3471 = vdwg.mxu0
        %v3473 = vsel %vm1317, %v3101, 0
        %v3476 = vsel %vm1317, %v3247, 0
        %3478 = vmatprep.subr.mxu0 0.0
        %3479 = vmatpush1.xpose.msra.mxu0 %v3476
        %3480 = vmatprep.subr.mxu0 0.0
        %3481 = vmatpush1.xpose.msra.mxu0 0.0
        %3482 = vmatprep.subr.mxu0 0.0
        %3483 = vmatpush1.xpose.msra.mxu0 0.0
        %3484 = vmatprep.subr.mxu0 0.0
        %3485 = vmatpush1.xpose.msra.mxu0 0.0
        %3486 = vmatprep.subr.mxu0 0.0
        %3487 = vmatpush1.xpose.msra.mxu0 0.0
        %3488 = vmatprep.subr.mxu0 0.0
        %3489 = vmatpush1.xpose.msra.mxu0 0.0
        %3490 = vmatprep.subr.mxu0 0.0
        %3491 = vmatpush1.xpose.msra.mxu0 0.0
        %3492 = vmatprep.subr.mxu0 0.0
        %3493 = vmatpush1.xpose.msra.mxu0 0.0
        %3494 = vmatprep.subr.mxu0 0.0
        %3495 = vmatpush1.xpose.msra.mxu0 0.0
        %3496 = vmatprep.subr.mxu0 0.0
        %3497 = vmatpush1.xpose.msra.mxu0 0.0
        %3498 = vmatprep.subr.mxu0 0.0
        %3499 = vmatpush1.xpose.msra.mxu0 0.0
        %3500 = vmatprep.subr.mxu0 0.0
        %3501 = vmatpush1.xpose.msra.mxu0 0.0
        %3502 = vmatprep.subr.mxu0 0.0
        %3503 = vmatpush1.xpose.msra.mxu0 0.0
        %3504 = vmatprep.subr.mxu0 0.0
        %3505 = vmatpush1.xpose.msra.mxu0 0.0
        %3506 = vmatprep.subr.mxu0 0.0
        %3507 = vmatpush1.xpose.msra.mxu0 0.0
        %3508 = vmatprep.subr.mxu0 0.0
        %3509 = vmatpush1.xpose.msra.mxu0 0.0
        %3510 = vmatprep.subr.mxu0 0.0
        %3511 = vmatpush1.xpose.msra.mxu0 0.0
        %3512 = vmatprep.subr.mxu0 0.0
        %3513 = vmatpush1.xpose.msra.mxu0 0.0
        %3514 = vmatprep.subr.mxu0 0.0
        %3515 = vmatpush1.xpose.msra.mxu0 0.0
        %3516 = vmatprep.subr.mxu0 0.0
        %3517 = vmatpush1.xpose.msra.mxu0 0.0
        %3518 = vmatprep.subr.mxu0 0.0
        %3519 = vmatpush1.xpose.msra.mxu0 0.0
        %3520 = vmatprep.subr.mxu0 0.0
        %3521 = vmatpush1.xpose.msra.mxu0 0.0
        %3522 = vmatprep.subr.mxu0 0.0
        %3523 = vmatpush1.xpose.msra.mxu0 0.0
        %3524 = vmatprep.subr.mxu0 0.0
        %3525 = vmatpush1.xpose.msra.mxu0 0.0
        %3526 = vmatprep.subr.mxu0 0.0
        %3527 = vmatpush1.xpose.msra.mxu0 0.0
        %3528 = vmatprep.subr.mxu0 0.0
        %3529 = vmatpush1.xpose.msra.mxu0 0.0
        %3530 = vmatprep.subr.mxu0 0.0
        %3531 = vmatpush1.xpose.msra.mxu0 0.0
        %3532 = vmatprep.subr.mxu0 0.0
        %3533 = vmatpush1.xpose.msra.mxu0 0.0
        %3534 = vmatprep.subr.mxu0 0.0
        %3535 = vmatpush1.xpose.msra.mxu0 0.0
        %3536 = vmatprep.subr.mxu0 0.0
        %3537 = vmatpush1.xpose.msra.mxu0 0.0
        %3538 = vmatprep.subr.mxu0 0.0
        %3539 = vmatpush1.xpose.msra.mxu0 0.0
        %3540 = vmatprep.subr.mxu0 0.0
        %3541 = vmatpush1.xpose.msra.mxu0 0.0
        %3542 = vmatprep.mubr.f32.mxu0 0.0
        %3543 = vmatmul.mubr.f32.gmra.mrb[0].mxu0 %v3473
        %v3544 = vpop.f32.mrb[0].mxu0
        %v3545 = vadd.f32 0.0, %v3544
        %v3546 = vpop.f32.mrb[0].mxu0
        %3547 = vdwg.mxu0
        %v3549 = vsel %vm1317, %v3102, 0
        %v3552 = vsel %vm1317, %v3248, 0
        %3554 = vmatprep.subr.mxu0 0.0
        %3555 = vmatpush1.xpose.msra.mxu0 %v3552
        %3556 = vmatprep.subr.mxu0 0.0
        %3557 = vmatpush1.xpose.msra.mxu0 0.0
        %3558 = vmatprep.subr.mxu0 0.0
        %3559 = vmatpush1.xpose.msra.mxu0 0.0
        %3560 = vmatprep.subr.mxu0 0.0
        %3561 = vmatpush1.xpose.msra.mxu0 0.0
        %3562 = vmatprep.subr.mxu0 0.0
        %3563 = vmatpush1.xpose.msra.mxu0 0.0
        %3564 = vmatprep.subr.mxu0 0.0
        %3565 = vmatpush1.xpose.msra.mxu0 0.0
        %3566 = vmatprep.subr.mxu0 0.0
        %3567 = vmatpush1.xpose.msra.mxu0 0.0
        %3568 = vmatprep.subr.mxu0 0.0
        %3569 = vmatpush1.xpose.msra.mxu0 0.0
        %3570 = vmatprep.subr.mxu0 0.0
        %3571 = vmatpush1.xpose.msra.mxu0 0.0
        %3572 = vmatprep.subr.mxu0 0.0
        %3573 = vmatpush1.xpose.msra.mxu0 0.0
        %3574 = vmatprep.subr.mxu0 0.0
        %3575 = vmatpush1.xpose.msra.mxu0 0.0
        %3576 = vmatprep.subr.mxu0 0.0
        %3577 = vmatpush1.xpose.msra.mxu0 0.0
        %3578 = vmatprep.subr.mxu0 0.0
        %3579 = vmatpush1.xpose.msra.mxu0 0.0
        %3580 = vmatprep.subr.mxu0 0.0
        %3581 = vmatpush1.xpose.msra.mxu0 0.0
        %3582 = vmatprep.subr.mxu0 0.0
        %3583 = vmatpush1.xpose.msra.mxu0 0.0
        %3584 = vmatprep.subr.mxu0 0.0
        %3585 = vmatpush1.xpose.msra.mxu0 0.0
        %3586 = vmatprep.subr.mxu0 0.0
        %3587 = vmatpush1.xpose.msra.mxu0 0.0
        %3588 = vmatprep.subr.mxu0 0.0
        %3589 = vmatpush1.xpose.msra.mxu0 0.0
        %3590 = vmatprep.subr.mxu0 0.0
        %3591 = vmatpush1.xpose.msra.mxu0 0.0
        %3592 = vmatprep.subr.mxu0 0.0
        %3593 = vmatpush1.xpose.msra.mxu0 0.0
        %3594 = vmatprep.subr.mxu0 0.0
        %3595 = vmatpush1.xpose.msra.mxu0 0.0
        %3596 = vmatprep.subr.mxu0 0.0
        %3597 = vmatpush1.xpose.msra.mxu0 0.0
        %3598 = vmatprep.subr.mxu0 0.0
        %3599 = vmatpush1.xpose.msra.mxu0 0.0
        %3600 = vmatprep.subr.mxu0 0.0
        %3601 = vmatpush1.xpose.msra.mxu0 0.0
        %3602 = vmatprep.subr.mxu0 0.0
        %3603 = vmatpush1.xpose.msra.mxu0 0.0
        %3604 = vmatprep.subr.mxu0 0.0
        %3605 = vmatpush1.xpose.msra.mxu0 0.0
        %3606 = vmatprep.subr.mxu0 0.0
        %3607 = vmatpush1.xpose.msra.mxu0 0.0
        %3608 = vmatprep.subr.mxu0 0.0
        %3609 = vmatpush1.xpose.msra.mxu0 0.0
        %3610 = vmatprep.subr.mxu0 0.0
        %3611 = vmatpush1.xpose.msra.mxu0 0.0
        %3612 = vmatprep.subr.mxu0 0.0
        %3613 = vmatpush1.xpose.msra.mxu0 0.0
        %3614 = vmatprep.subr.mxu0 0.0
        %3615 = vmatpush1.xpose.msra.mxu0 0.0
        %3616 = vmatprep.subr.mxu0 0.0
        %3617 = vmatpush1.xpose.msra.mxu0 0.0
        %3618 = vmatprep.mubr.f32.mxu0 0.0
        %3619 = vmatmul.mubr.f32.gmra.mrb[0].mxu0 %v3549
        %v3620 = vpop.f32.mrb[0].mxu0
        %v3621 = vadd.f32 0.0, %v3620
        %v3622 = vpop.f32.mrb[0].mxu0
        %3623 = vdwg.mxu0
        %v3625 = vsel %vm1317, %v3103, 0
        %v3628 = vsel %vm1317, %v3249, 0
        %3630 = vmatprep.subr.mxu0 0.0
        %3631 = vmatpush1.xpose.msra.mxu0 %v3628
        %3632 = vmatprep.subr.mxu0 0.0
        %3633 = vmatpush1.xpose.msra.mxu0 0.0
        %3634 = vmatprep.subr.mxu0 0.0
        %3635 = vmatpush1.xpose.msra.mxu0 0.0
        %3636 = vmatprep.subr.mxu0 0.0
        %3637 = vmatpush1.xpose.msra.mxu0 0.0
        %3638 = vmatprep.subr.mxu0 0.0
        %3639 = vmatpush1.xpose.msra.mxu0 0.0
        %3640 = vmatprep.subr.mxu0 0.0
        %3641 = vmatpush1.xpose.msra.mxu0 0.0
        %3642 = vmatprep.subr.mxu0 0.0
        %3643 = vmatpush1.xpose.msra.mxu0 0.0
        %3644 = vmatprep.subr.mxu0 0.0
        %3645 = vmatpush1.xpose.msra.mxu0 0.0
        %3646 = vmatprep.subr.mxu0 0.0
        %3647 = vmatpush1.xpose.msra.mxu0 0.0
        %3648 = vmatprep.subr.mxu0 0.0
        %3649 = vmatpush1.xpose.msra.mxu0 0.0
        %3650 = vmatprep.subr.mxu0 0.0
        %3651 = vmatpush1.xpose.msra.mxu0 0.0
        %3652 = vmatprep.subr.mxu0 0.0
        %3653 = vmatpush1.xpose.msra.mxu0 0.0
        %3654 = vmatprep.subr.mxu0 0.0
        %3655 = vmatpush1.xpose.msra.mxu0 0.0
        %3656 = vmatprep.subr.mxu0 0.0
        %3657 = vmatpush1.xpose.msra.mxu0 0.0
        %3658 = vmatprep.subr.mxu0 0.0
        %3659 = vmatpush1.xpose.msra.mxu0 0.0
        %3660 = vmatprep.subr.mxu0 0.0
        %3661 = vmatpush1.xpose.msra.mxu0 0.0
        %3662 = vmatprep.subr.mxu0 0.0
        %3663 = vmatpush1.xpose.msra.mxu0 0.0
        %3664 = vmatprep.subr.mxu0 0.0
        %3665 = vmatpush1.xpose.msra.mxu0 0.0
        %3666 = vmatprep.subr.mxu0 0.0
        %3667 = vmatpush1.xpose.msra.mxu0 0.0
        %3668 = vmatprep.subr.mxu0 0.0
        %3669 = vmatpush1.xpose.msra.mxu0 0.0
        %3670 = vmatprep.subr.mxu0 0.0
        %3671 = vmatpush1.xpose.msra.mxu0 0.0
        %3672 = vmatprep.subr.mxu0 0.0
        %3673 = vmatpush1.xpose.msra.mxu0 0.0
        %3674 = vmatprep.subr.mxu0 0.0
        %3675 = vmatpush1.xpose.msra.mxu0 0.0
        %3676 = vmatprep.subr.mxu0 0.0
        %3677 = vmatpush1.xpose.msra.mxu0 0.0
        %3678 = vmatprep.subr.mxu0 0.0
        %3679 = vmatpush1.xpose.msra.mxu0 0.0
        %3680 = vmatprep.subr.mxu0 0.0
        %3681 = vmatpush1.xpose.msra.mxu0 0.0
        %3682 = vmatprep.subr.mxu0 0.0
        %3683 = vmatpush1.xpose.msra.mxu0 0.0
        %3684 = vmatprep.subr.mxu0 0.0
        %3685 = vmatpush1.xpose.msra.mxu0 0.0
        %3686 = vmatprep.subr.mxu0 0.0
        %3687 = vmatpush1.xpose.msra.mxu0 0.0
        %3688 = vmatprep.subr.mxu0 0.0
        %3689 = vmatpush1.xpose.msra.mxu0 0.0
        %3690 = vmatprep.subr.mxu0 0.0
        %3691 = vmatpush1.xpose.msra.mxu0 0.0
        %3692 = vmatprep.subr.mxu0 0.0
        %3693 = vmatpush1.xpose.msra.mxu0 0.0
        %3694 = vmatprep.mubr.f32.mxu0 0.0
        %3695 = vmatmul.mubr.f32.gmra.mrb[0].mxu0 %v3625
        %v3696 = vpop.f32.mrb[0].mxu0
        %v3697 = vadd.f32 0.0, %v3696
        %v3698 = vpop.f32.mrb[0].mxu0
        %3699 = vdwg.mxu0
        %v3700 = vmul.f32 %v3469, 0.17677669
        %v3701 = vmul.f32 %v3545, 0.17677669
        %v3702 = vmul.f32 %v3621, 0.17677669
        %v3703 = vmul.f32 %v3697, 0.17677669
        %v3704 = vsel %vm1627, %v3700, -3.4028235e+38
        %v3705 = vsel %vm1627, %v3701, -3.4028235e+38
        %v3706 = vsel %vm1627, %v3702, -3.4028235e+38
        %v3707 = vsel %vm1627, %v3703, -3.4028235e+38
        %v3708 = vsel %vm1632, %v3704, -inf
        %3709 = vmax.xlane.f32.xlu0 %v3708
        %v3710 = vpop.xlane.xlu0 %3709
        %v3711 = vsel %vm1632, %v3705, -inf
        %3712 = vmax.xlane.f32.xlu0 %v3711
        %v3713 = vpop.xlane.xlu0 %3712
        %v3714 = vsel %vm1632, %v3706, -inf
        %3715 = vmax.xlane.f32.xlu0 %v3714
        %v3716 = vpop.xlane.xlu0 %3715
        %v3717 = vsel %vm1632, %v3707, -inf
        %3718 = vmax.xlane.f32.xlu0 %v3717
        %v3719 = vpop.xlane.xlu0 %3718
        %v3720 = vsub.f32 %v3704, %v3710
        %v3721 = vsub.f32 %v3705, %v3713
        %v3722 = vsub.f32 %v3706, %v3716
        %v3723 = vsub.f32 %v3707, %v3719
        %v3724 = vmul.f32 %v3720, 1.442695
        %v3725 = vpow.pop %v3724
        %v3726 = vmul.f32 %v3721, 1.442695
        %v3727 = vpow.pop %v3726
        %v3728 = vmul.f32 %v3722, 1.442695
        %v3729 = vpow.pop %v3728
        %v3730 = vmul.f32 %v3723, 1.442695
        %v3731 = vpow.pop %v3730
        %v3732 = vsel %vm1632, %v3725, 0.0
        %3733 = vadd.xlane.f32.xlu0 %v3732
        %v3734 = vpop.xlane.xlu0 %3733
        %v3735 = vsel %vm1632, %v3727, 0.0
        %3736 = vadd.xlane.f32.xlu0 %v3735
        %v3737 = vpop.xlane.xlu0 %3736
        %v3738 = vsel %vm1632, %v3729, 0.0
        %3739 = vadd.xlane.f32.xlu0 %v3738
        %v3740 = vpop.xlane.xlu0 %3739
        %v3741 = vsel %vm1632, %v3731, 0.0
        %3742 = vadd.xlane.f32.xlu0 %v3741
        %v3743 = vpop.xlane.xlu0 %3742
        %v3744 = vrcp.pop %v3734
        %v3745 = vmul.f32 %v3725, %v3744
        %v3746 = vrcp.pop %v3737
        %v3747 = vmul.f32 %v3727, %v3746
        %v3748 = vrcp.pop %v3740
        %v3749 = vmul.f32 %v3729, %v3748
        %v3750 = vrcp.pop %v3743
        %v3751 = vmul.f32 %v3731, %v3750
        %v3753 = vsel %vm1632, %v3745, 0
        %3755 = vmatprep.subr.mxu0 0.0
        %3756 = vmatpush1.msra.mxu0 %v3392
        %3757 = vmatprep.subr.mxu0 0.0
        %3758 = vmatpush1.msra.mxu0 0.0
        %3759 = vmatprep.subr.mxu0 0.0
        %3760 = vmatpush1.msra.mxu0 0.0
        %3761 = vmatprep.subr.mxu0 0.0
        %3762 = vmatpush1.msra.mxu0 0.0
        %3763 = vmatprep.subr.mxu0 0.0
        %3764 = vmatpush1.msra.mxu0 0.0
        %3765 = vmatprep.subr.mxu0 0.0
        %3766 = vmatpush1.msra.mxu0 0.0
        %3767 = vmatprep.subr.mxu0 0.0
        %3768 = vmatpush1.msra.mxu0 0.0
        %3769 = vmatprep.subr.mxu0 0.0
        %3770 = vmatpush1.msra.mxu0 0.0
        %3771 = vmatprep.subr.mxu0 0.0
        %3772 = vmatpush1.msra.mxu0 0.0
        %3773 = vmatprep.subr.mxu0 0.0
        %3774 = vmatpush1.msra.mxu0 0.0
        %3775 = vmatprep.subr.mxu0 0.0
        %3776 = vmatpush1.msra.mxu0 0.0
        %3777 = vmatprep.subr.mxu0 0.0
        %3778 = vmatpush1.msra.mxu0 0.0
        %3779 = vmatprep.subr.mxu0 0.0
        %3780 = vmatpush1.msra.mxu0 0.0
        %3781 = vmatprep.subr.mxu0 0.0
        %3782 = vmatpush1.msra.mxu0 0.0
        %3783 = vmatprep.subr.mxu0 0.0
        %3784 = vmatpush1.msra.mxu0 0.0
        %3785 = vmatprep.subr.mxu0 0.0
        %3786 = vmatpush1.msra.mxu0 0.0
        %3787 = vmatprep.subr.mxu0 0.0
        %3788 = vmatpush1.msra.mxu0 0.0
        %3789 = vmatprep.subr.mxu0 0.0
        %3790 = vmatpush1.msra.mxu0 0.0
        %3791 = vmatprep.subr.mxu0 0.0
        %3792 = vmatpush1.msra.mxu0 0.0
        %3793 = vmatprep.subr.mxu0 0.0
        %3794 = vmatpush1.msra.mxu0 0.0
        %3795 = vmatprep.subr.mxu0 0.0
        %3796 = vmatpush1.msra.mxu0 0.0
        %3797 = vmatprep.subr.mxu0 0.0
        %3798 = vmatpush1.msra.mxu0 0.0
        %3799 = vmatprep.subr.mxu0 0.0
        %3800 = vmatpush1.msra.mxu0 0.0
        %3801 = vmatprep.subr.mxu0 0.0
        %3802 = vmatpush1.msra.mxu0 0.0
        %3803 = vmatprep.subr.mxu0 0.0
        %3804 = vmatpush1.msra.mxu0 0.0
        %3805 = vmatprep.subr.mxu0 0.0
        %3806 = vmatpush1.msra.mxu0 0.0
        %3807 = vmatprep.subr.mxu0 0.0
        %3808 = vmatpush1.msra.mxu0 0.0
        %3809 = vmatprep.subr.mxu0 0.0
        %3810 = vmatpush1.msra.mxu0 0.0
        %3811 = vmatprep.subr.mxu0 0.0
        %3812 = vmatpush1.msra.mxu0 0.0
        %3813 = vmatprep.subr.mxu0 0.0
        %3814 = vmatpush1.msra.mxu0 0.0
        %3815 = vmatprep.subr.mxu0 0.0
        %3816 = vmatpush1.msra.mxu0 0.0
        %3817 = vmatprep.subr.mxu0 0.0
        %3818 = vmatpush1.msra.mxu0 0.0
        %3819 = vmatprep.mubr.f32.mxu0 0.0
        %3820 = vmatmul.mubr.f32.gmra.mrb[0].mxu0 %v3753
        %v3821 = vpop.f32.mrb[0].mxu0
        %v3822 = vadd.f32 0.0, %v3821
        %v3823 = vpop.f32.mrb[0].mxu0
        %3824 = vdwg.mxu0
        %v3826 = vsel %vm1632, %v3747, 0
        %3828 = vmatprep.subr.mxu0 0.0
        %3829 = vmatpush1.msra.mxu0 %v3393
        %3830 = vmatprep.subr.mxu0 0.0
        %3831 = vmatpush1.msra.mxu0 0.0
        %3832 = vmatprep.subr.mxu0 0.0
        %3833 = vmatpush1.msra.mxu0 0.0
        %3834 = vmatprep.subr.mxu0 0.0
        %3835 = vmatpush1.msra.mxu0 0.0
        %3836 = vmatprep.subr.mxu0 0.0
        %3837 = vmatpush1.msra.mxu0 0.0
        %3838 = vmatprep.subr.mxu0 0.0
        %3839 = vmatpush1.msra.mxu0 0.0
        %3840 = vmatprep.subr.mxu0 0.0
        %3841 = vmatpush1.msra.mxu0 0.0
        %3842 = vmatprep.subr.mxu0 0.0
        %3843 = vmatpush1.msra.mxu0 0.0
        %3844 = vmatprep.subr.mxu0 0.0
        %3845 = vmatpush1.msra.mxu0 0.0
        %3846 = vmatprep.subr.mxu0 0.0
        %3847 = vmatpush1.msra.mxu0 0.0
        %3848 = vmatprep.subr.mxu0 0.0
        %3849 = vmatpush1.msra.mxu0 0.0
        %3850 = vmatprep.subr.mxu0 0.0
        %3851 = vmatpush1.msra.mxu0 0.0
        %3852 = vmatprep.subr.mxu0 0.0
        %3853 = vmatpush1.msra.mxu0 0.0
        %3854 = vmatprep.subr.mxu0 0.0
        %3855 = vmatpush1.msra.mxu0 0.0
        %3856 = vmatprep.subr.mxu0 0.0
        %3857 = vmatpush1.msra.mxu0 0.0
        %3858 = vmatprep.subr.mxu0 0.0
        %3859 = vmatpush1.msra.mxu0 0.0
        %3860 = vmatprep.subr.mxu0 0.0
        %3861 = vmatpush1.msra.mxu0 0.0
        %3862 = vmatprep.subr.mxu0 0.0
        %3863 = vmatpush1.msra.mxu0 0.0
        %3864 = vmatprep.subr.mxu0 0.0
        %3865 = vmatpush1.msra.mxu0 0.0
        %3866 = vmatprep.subr.mxu0 0.0
        %3867 = vmatpush1.msra.mxu0 0.0
        %3868 = vmatprep.subr.mxu0 0.0
        %3869 = vmatpush1.msra.mxu0 0.0
        %3870 = vmatprep.subr.mxu0 0.0
        %3871 = vmatpush1.msra.mxu0 0.0
        %3872 = vmatprep.subr.mxu0 0.0
        %3873 = vmatpush1.msra.mxu0 0.0
        %3874 = vmatprep.subr.mxu0 0.0
        %3875 = vmatpush1.msra.mxu0 0.0
        %3876 = vmatprep.subr.mxu0 0.0
        %3877 = vmatpush1.msra.mxu0 0.0
        %3878 = vmatprep.subr.mxu0 0.0
        %3879 = vmatpush1.msra.mxu0 0.0
        %3880 = vmatprep.subr.mxu0 0.0
        %3881 = vmatpush1.msra.mxu0 0.0
        %3882 = vmatprep.subr.mxu0 0.0
        %3883 = vmatpush1.msra.mxu0 0.0
        %3884 = vmatprep.subr.mxu0 0.0
        %3885 = vmatpush1.msra.mxu0 0.0
        %3886 = vmatprep.subr.mxu0 0.0
        %3887 = vmatpush1.msra.mxu0 0.0
        %3888 = vmatprep.subr.mxu0 0.0
        %3889 = vmatpush1.msra.mxu0 0.0
        %3890 = vmatprep.subr.mxu0 0.0
        %3891 = vmatpush1.msra.mxu0 0.0
        %3892 = vmatprep.mubr.f32.mxu0 0.0
        %3893 = vmatmul.mubr.f32.gmra.mrb[0].mxu0 %v3826
        %v3894 = vpop.f32.mrb[0].mxu0
        %v3895 = vadd.f32 0.0, %v3894
        %v3896 = vpop.f32.mrb[0].mxu0
        %3897 = vdwg.mxu0
        %v3899 = vsel %vm1632, %v3749, 0
        %3901 = vmatprep.subr.mxu0 0.0
        %3902 = vmatpush1.msra.mxu0 %v3394
        %3903 = vmatprep.subr.mxu0 0.0
        %3904 = vmatpush1.msra.mxu0 0.0
        %3905 = vmatprep.subr.mxu0 0.0
        %3906 = vmatpush1.msra.mxu0 0.0
        %3907 = vmatprep.subr.mxu0 0.0
        %3908 = vmatpush1.msra.mxu0 0.0
        %3909 = vmatprep.subr.mxu0 0.0
        %3910 = vmatpush1.msra.mxu0 0.0
        %3911 = vmatprep.subr.mxu0 0.0
        %3912 = vmatpush1.msra.mxu0 0.0
        %3913 = vmatprep.subr.mxu0 0.0
        %3914 = vmatpush1.msra.mxu0 0.0
        %3915 = vmatprep.subr.mxu0 0.0
        %3916 = vmatpush1.msra.mxu0 0.0
        %3917 = vmatprep.subr.mxu0 0.0
        %3918 = vmatpush1.msra.mxu0 0.0
        %3919 = vmatprep.subr.mxu0 0.0
        %3920 = vmatpush1.msra.mxu0 0.0
        %3921 = vmatprep.subr.mxu0 0.0
        %3922 = vmatpush1.msra.mxu0 0.0
        %3923 = vmatprep.subr.mxu0 0.0
        %3924 = vmatpush1.msra.mxu0 0.0
        %3925 = vmatprep.subr.mxu0 0.0
        %3926 = vmatpush1.msra.mxu0 0.0
        %3927 = vmatprep.subr.mxu0 0.0
        %3928 = vmatpush1.msra.mxu0 0.0
        %3929 = vmatprep.subr.mxu0 0.0
        %3930 = vmatpush1.msra.mxu0 0.0
        %3931 = vmatprep.subr.mxu0 0.0
        %3932 = vmatpush1.msra.mxu0 0.0
        %3933 = vmatprep.subr.mxu0 0.0
        %3934 = vmatpush1.msra.mxu0 0.0
        %3935 = vmatprep.subr.mxu0 0.0
        %3936 = vmatpush1.msra.mxu0 0.0
        %3937 = vmatprep.subr.mxu0 0.0
        %3938 = vmatpush1.msra.mxu0 0.0
        %3939 = vmatprep.subr.mxu0 0.0
        %3940 = vmatpush1.msra.mxu0 0.0
        %3941 = vmatprep.subr.mxu0 0.0
        %3942 = vmatpush1.msra.mxu0 0.0
        %3943 = vmatprep.subr.mxu0 0.0
        %3944 = vmatpush1.msra.mxu0 0.0
        %3945 = vmatprep.subr.mxu0 0.0
        %3946 = vmatpush1.msra.mxu0 0.0
        %3947 = vmatprep.subr.mxu0 0.0
        %3948 = vmatpush1.msra.mxu0 0.0
        %3949 = vmatprep.subr.mxu0 0.0
        %3950 = vmatpush1.msra.mxu0 0.0
        %3951 = vmatprep.subr.mxu0 0.0
        %3952 = vmatpush1.msra.mxu0 0.0
        %3953 = vmatprep.subr.mxu0 0.0
        %3954 = vmatpush1.msra.mxu0 0.0
        %3955 = vmatprep.subr.mxu0 0.0
        %3956 = vmatpush1.msra.mxu0 0.0
        %3957 = vmatprep.subr.mxu0 0.0
        %3958 = vmatpush1.msra.mxu0 0.0
        %3959 = vmatprep.subr.mxu0 0.0
        %3960 = vmatpush1.msra.mxu0 0.0
        %3961 = vmatprep.subr.mxu0 0.0
        %3962 = vmatpush1.msra.mxu0 0.0
        %3963 = vmatprep.subr.mxu0 0.0
        %3964 = vmatpush1.msra.mxu0 0.0
        %3965 = vmatprep.mubr.f32.mxu0 0.0
        %3966 = vmatmul.mubr.f32.gmra.mrb[0].mxu0 %v3899
        %v3967 = vpop.f32.mrb[0].mxu0
        %v3968 = vadd.f32 0.0, %v3967
        %v3969 = vpop.f32.mrb[0].mxu0
        %3970 = vdwg.mxu0
        %v3972 = vsel %vm1632, %v3751, 0
        %3974 = vmatprep.subr.mxu0 0.0
        %3975 = vmatpush1.msra.mxu0 %v3395
        %3976 = vmatprep.subr.mxu0 0.0
        %3977 = vmatpush1.msra.mxu0 0.0
        %3978 = vmatprep.subr.mxu0 0.0
        %3979 = vmatpush1.msra.mxu0 0.0
        %3980 = vmatprep.subr.mxu0 0.0
        %3981 = vmatpush1.msra.mxu0 0.0
        %3982 = vmatprep.subr.mxu0 0.0
        %3983 = vmatpush1.msra.mxu0 0.0
        %3984 = vmatprep.subr.mxu0 0.0
        %3985 = vmatpush1.msra.mxu0 0.0
        %3986 = vmatprep.subr.mxu0 0.0
        %3987 = vmatpush1.msra.mxu0 0.0
        %3988 = vmatprep.subr.mxu0 0.0
        %3989 = vmatpush1.msra.mxu0 0.0
        %3990 = vmatprep.subr.mxu0 0.0
        %3991 = vmatpush1.msra.mxu0 0.0
        %3992 = vmatprep.subr.mxu0 0.0
        %3993 = vmatpush1.msra.mxu0 0.0
        %3994 = vmatprep.subr.mxu0 0.0
        %3995 = vmatpush1.msra.mxu0 0.0
        %3996 = vmatprep.subr.mxu0 0.0
        %3997 = vmatpush1.msra.mxu0 0.0
        %3998 = vmatprep.subr.mxu0 0.0
        %3999 = vmatpush1.msra.mxu0 0.0
        %4000 = vmatprep.subr.mxu0 0.0
        %4001 = vmatpush1.msra.mxu0 0.0
        %4002 = vmatprep.subr.mxu0 0.0
        %4003 = vmatpush1.msra.mxu0 0.0
        %4004 = vmatprep.subr.mxu0 0.0
        %4005 = vmatpush1.msra.mxu0 0.0
        %4006 = vmatprep.subr.mxu0 0.0
        %4007 = vmatpush1.msra.mxu0 0.0
        %4008 = vmatprep.subr.mxu0 0.0
        %4009 = vmatpush1.msra.mxu0 0.0
        %4010 = vmatprep.subr.mxu0 0.0
        %4011 = vmatpush1.msra.mxu0 0.0
        %4012 = vmatprep.subr.mxu0 0.0
        %4013 = vmatpush1.msra.mxu0 0.0
        %4014 = vmatprep.subr.mxu0 0.0
        %4015 = vmatpush1.msra.mxu0 0.0
        %4016 = vmatprep.subr.mxu0 0.0
        %4017 = vmatpush1.msra.mxu0 0.0
        %4018 = vmatprep.subr.mxu0 0.0
        %4019 = vmatpush1.msra.mxu0 0.0
        %4020 = vmatprep.subr.mxu0 0.0
        %4021 = vmatpush1.msra.mxu0 0.0
        %4022 = vmatprep.subr.mxu0 0.0
        %4023 = vmatpush1.msra.mxu0 0.0
        %4024 = vmatprep.subr.mxu0 0.0
        %4025 = vmatpush1.msra.mxu0 0.0
        %4026 = vmatprep.subr.mxu0 0.0
        %4027 = vmatpush1.msra.mxu0 0.0
        %4028 = vmatprep.subr.mxu0 0.0
        %4029 = vmatpush1.msra.mxu0 0.0
        %4030 = vmatprep.subr.mxu0 0.0
        %4031 = vmatpush1.msra.mxu0 0.0
        %4032 = vmatprep.subr.mxu0 0.0
        %4033 = vmatpush1.msra.mxu0 0.0
        %4034 = vmatprep.subr.mxu0 0.0
        %4035 = vmatpush1.msra.mxu0 0.0
        %4036 = vmatprep.subr.mxu0 0.0
        %4037 = vmatpush1.msra.mxu0 0.0
        %4038 = vmatprep.mubr.f32.mxu0 0.0
        %4039 = vmatmul.mubr.f32.gmra.mrb[0].mxu0 %v3972
        %v4040 = vpop.f32.mrb[0].mxu0
        %v4041 = vadd.f32 0.0, %v4040
        %v4042 = vpop.f32.mrb[0].mxu0
        %4043 = vdwg.mxu0
        %v4044 = vcombine.low %v3822, %v3968
        %v4045 = vcombine.high %v3822, %v3968
        %v4047 = vunpack.c.l.s4 1983009808
        %v4048 = vunpack.c.0.s8 %v4047
        %v4049 = vlaneseq
        %v4050 = vshrl.u32 %v4049, 7
        %v4051 = vsub.s32 %v4048, %v4050
        %v4052 = vrot.slane %v4044, %v4051
        %v4054 = vunpack.c.l.s4 1983009808
        %v4055 = vunpack.c.0.s8 %v4054
        %v4056 = vlaneseq
        %v4057 = vshrl.u32 %v4056, 7
        %v4058 = vsub.s32 %v4055, %v4057
        %v4059 = vrot.slane %v4045, %v4058
        %v4060 = vcombine.low %v3895, %v4041
        %v4061 = vcombine.high %v3895, %v4041
        %v4063 = vunpack.c.l.s4 1983009808
        %v4064 = vunpack.c.0.s8 %v4063
        %v4065 = vlaneseq
        %v4066 = vshrl.u32 %v4065, 7
        %v4067 = vsub.s32 %v4064, %v4066
        %v4068 = vrot.slane %v4060, %v4067
        %v4070 = vunpack.c.l.s4 1983009808
        %v4071 = vunpack.c.0.s8 %v4070
        %v4072 = vlaneseq
        %v4073 = vshrl.u32 %v4072, 7
        %v4074 = vsub.s32 %v4071, %v4073
        %v4075 = vrot.slane %v4061, %v4074
        %v4076 = vcombine.low %v4052, %v4068
        %v4077 = vcombine.high %v4052, %v4068
        %v4079 = vunpack.c.l.s4 1934713408
        %v4080 = vunpack.c.0.s8 %v4079
        %v4081 = vlaneseq
        %v4082 = vshrl.u32 %v4081, 7
        %v4083 = vsub.s32 %v4080, %v4082
        %v4084 = vrot.slane %v4076, %v4083
        %v4086 = vunpack.c.l.s4 1934713408
        %v4087 = vunpack.c.0.s8 %v4086
        %v4088 = vlaneseq
        %v4089 = vshrl.u32 %v4088, 7
        %v4090 = vsub.s32 %v4087, %v4089
        %v4091 = vrot.slane %v4077, %v4090
        %v4092 = vcombine.low %v4059, %v4075
        %v4093 = vcombine.high %v4059, %v4075
        %v4095 = vunpack.c.l.s4 1934713408
        %v4096 = vunpack.c.0.s8 %v4095
        %v4097 = vlaneseq
        %v4098 = vshrl.u32 %v4097, 7
        %v4099 = vsub.s32 %v4096, %v4098
        %v4100 = vrot.slane %v4092, %v4099
        %v4102 = vunpack.c.l.s4 1934713408
        %v4103 = vunpack.c.0.s8 %v4102
        %v4104 = vlaneseq
        %v4105 = vshrl.u32 %v4104, 7
        %v4106 = vsub.s32 %v4103, %v4105
        %v4107 = vrot.slane %v4093, %v4106
        %v4108 = vcombine.high %v4084, 0.0
        %v4109 = vcombine.high %v4091, 0.0
        %v4110 = vcombine.high %v4100, 0.0
        %v4111 = vcombine.high %v4107, 0.0
        %v4112 = vcombine.low %v4084, %v4091
        %v4114 = vunpack.c.l.s4 1983009808
        %v4115 = vunpack.c.0.s8 %v4114
        %v4116 = vlaneseq
        %v4117 = vshrl.u32 %v4116, 7
        %v4118 = vsub.s32 %v4115, %v4117
        %v4119 = vrot.slane %v4112, %v4118
        %v4120 = vcombine.low %v4108, %v4109
        %v4122 = vunpack.c.l.s4 1983009808
        %v4123 = vunpack.c.0.s8 %v4122
        %v4124 = vlaneseq
        %v4125 = vshrl.u32 %v4124, 7
        %v4126 = vsub.s32 %v4123, %v4125
        %v4127 = vrot.slane %v4120, %v4126
        %v4128 = vcombine.low %v4100, %v4107
        %v4130 = vunpack.c.l.s4 1983009808
        %v4131 = vunpack.c.0.s8 %v4130
        %v4132 = vlaneseq
        %v4133 = vshrl.u32 %v4132, 7
        %v4134 = vsub.s32 %v4131, %v4133
        %v4135 = vrot.slane %v4128, %v4134
        %v4136 = vcombine.low %v4110, %v4111
        %v4138 = vunpack.c.l.s4 1983009808
        %v4139 = vunpack.c.0.s8 %v4138
        %v4140 = vlaneseq
        %v4141 = vshrl.u32 %v4140, 7
        %v4142 = vsub.s32 %v4139, %v4141
        %v4143 = vrot.slane %v4136, %v4142
        %v4144 = vcombine.low %v4119, %v4127
        %v4145 = vcombine.high %v4119, %v4127
        %v4147 = vunpack.c.l.s4 1934713408
        %v4148 = vunpack.c.0.s8 %v4147
        %v4149 = vlaneseq
        %v4150 = vshrl.u32 %v4149, 7
        %v4151 = vsub.s32 %v4148, %v4150
        %v4152 = vrot.slane %v4144, %v4151
        %v4154 = vunpack.c.l.s4 1934713408
        %v4155 = vunpack.c.0.s8 %v4154
        %v4156 = vlaneseq
        %v4157 = vshrl.u32 %v4156, 7
        %v4158 = vsub.s32 %v4155, %v4157
        %v4159 = vrot.slane %v4145, %v4158
        %v4160 = vcombine.low %v4135, %v4143
        %v4161 = vcombine.high %v4135, %v4143
        %v4163 = vunpack.c.l.s4 1934713408
        %v4164 = vunpack.c.0.s8 %v4163
        %v4165 = vlaneseq
        %v4166 = vshrl.u32 %v4165, 7
        %v4167 = vsub.s32 %v4164, %v4166
        %v4168 = vrot.slane %v4160, %v4167
        %v4170 = vunpack.c.l.s4 1934713408
        %v4171 = vunpack.c.0.s8 %v4170
        %v4172 = vlaneseq
        %v4173 = vshrl.u32 %v4172, 7
        %v4174 = vsub.s32 %v4171, %v4173
        %v4175 = vrot.slane %v4161, %v4174
        %v4176 = vcombine.low %v4152, %v4168
        %v4177 = vcombine.high %v4152, %v4168
        %v4178 = vcombine.low %v4159, %v4175
        %v4179 = vcombine.high %v4159, %v4175
        %4181 = vrot.lane.b32.xlu0 %v4177, 32
        %v4182 = vpop.permute.xlu0 %4181
        %4185 = vrot.lane.b32.xlu0 %v4178, 64
        %v4186 = vpop.permute.xlu0 %4185
        %4189 = vrot.lane.b32.xlu0 %v4179, 96
        %v4190 = vpop.permute.xlu0 %4189
        %v4192 = vsel %vm1317, %v4176, %v4182
        %v4193 = vsel %vm2118, %v4192, %v4186
        %v4194 = vsel %vm2120, %v4193, %v4190
        %s4195 = scalar_lea.vmem [#allocation10], 128
        %v4196 = vld [vmem:[%s4195] sm:$0xff]
        %v4197 = vld [vmem:[%s4195 + $0x8] sm:$0xff]
        %v4198 = vld [vmem:[%s4195 + $0x10] sm:$0xff]
        %v4199 = vld [vmem:[%s4195 + $0x18] sm:$0xff]
        %v4200 = vld [vmem:[%s4195 + $0x20] sm:$0xff]
        %v4201 = vld [vmem:[%s4195 + $0x28] sm:$0xff]
        %v4202 = vld [vmem:[%s4195 + $0x30] sm:$0xff]
        %v4203 = vld [vmem:[%s4195 + $0x38] sm:$0xff]
        %v4204 = vld [vmem:[%s4195 + $0x40] sm:$0xff]
        %v4205 = vld [vmem:[%s4195 + $0x48] sm:$0xff]
        %v4206 = vld [vmem:[%s4195 + $0x50] sm:$0xff]
        %v4207 = vld [vmem:[%s4195 + $0x58] sm:$0xff]
        %v4208 = vld [vmem:[%s4195 + $0x60] sm:$0xff]
        %v4209 = vld [vmem:[%s4195 + $0x68] sm:$0xff]
        %v4210 = vld [vmem:[%s4195 + $0x70] sm:$0xff]
        %v4211 = vld [vmem:[%s4195 + $0x78] sm:$0xff]
        %4212 = vmatprep.subr.mxu0 0.0
        %4213 = vmatpush1.msra.mxu0 %v4196
        %4214 = vmatprep.subr.mxu0 0.0
        %4215 = vmatpush1.msra.mxu0 %v4197
        %4216 = vmatprep.subr.mxu0 0.0
        %4217 = vmatpush1.msra.mxu0 %v4198
        %4218 = vmatprep.subr.mxu0 0.0
        %4219 = vmatpush1.msra.mxu0 %v4199
        %4220 = vmatprep.subr.mxu0 0.0
        %4221 = vmatpush1.msra.mxu0 %v4200
        %4222 = vmatprep.subr.mxu0 0.0
        %4223 = vmatpush1.msra.mxu0 %v4201
        %4224 = vmatprep.subr.mxu0 0.0
        %4225 = vmatpush1.msra.mxu0 %v4202
        %4226 = vmatprep.subr.mxu0 0.0
        %4227 = vmatpush1.msra.mxu0 %v4203
        %4228 = vmatprep.subr.mxu0 0.0
        %4229 = vmatpush1.msra.mxu0 %v4204
        %4230 = vmatprep.subr.mxu0 0.0
        %4231 = vmatpush1.msra.mxu0 %v4205
        %4232 = vmatprep.subr.mxu0 0.0
        %4233 = vmatpush1.msra.mxu0 %v4206
        %4234 = vmatprep.subr.mxu0 0.0
        %4235 = vmatpush1.msra.mxu0 %v4207
        %4236 = vmatprep.subr.mxu0 0.0
        %4237 = vmatpush1.msra.mxu0 %v4208
        %4238 = vmatprep.subr.mxu0 0.0
        %4239 = vmatpush1.msra.mxu0 %v4209
        %4240 = vmatprep.subr.mxu0 0.0
        %4241 = vmatpush1.msra.mxu0 %v4210
        %4242 = vmatprep.subr.mxu0 0.0
        %4243 = vmatpush1.msra.mxu0 %v4211
        %4244 = vmatprep.subr.mxu0 0.0
        %4245 = vmatpush1.msra.mxu0 0.0
        %4246 = vmatprep.subr.mxu0 0.0
        %4247 = vmatpush1.msra.mxu0 0.0
        %4248 = vmatprep.subr.mxu0 0.0
        %4249 = vmatpush1.msra.mxu0 0.0
        %4250 = vmatprep.subr.mxu0 0.0
        %4251 = vmatpush1.msra.mxu0 0.0
        %4252 = vmatprep.subr.mxu0 0.0
        %4253 = vmatpush1.msra.mxu0 0.0
        %4254 = vmatprep.subr.mxu0 0.0
        %4255 = vmatpush1.msra.mxu0 0.0
        %4256 = vmatprep.subr.mxu0 0.0
        %4257 = vmatpush1.msra.mxu0 0.0
        %4258 = vmatprep.subr.mxu0 0.0
        %4259 = vmatpush1.msra.mxu0 0.0
        %4260 = vmatprep.subr.mxu0 0.0
        %4261 = vmatpush1.msra.mxu0 0.0
        %4262 = vmatprep.subr.mxu0 0.0
        %4263 = vmatpush1.msra.mxu0 0.0
        %4264 = vmatprep.subr.mxu0 0.0
        %4265 = vmatpush1.msra.mxu0 0.0
        %4266 = vmatprep.subr.mxu0 0.0
        %4267 = vmatpush1.msra.mxu0 0.0
        %4268 = vmatprep.subr.mxu0 0.0
        %4269 = vmatpush1.msra.mxu0 0.0
        %4270 = vmatprep.subr.mxu0 0.0
        %4271 = vmatpush1.msra.mxu0 0.0
        %4272 = vmatprep.subr.mxu0 0.0
        %4273 = vmatpush1.msra.mxu0 0.0
        %4274 = vmatprep.subr.mxu0 0.0
        %4275 = vmatpush1.msra.mxu0 0.0
        %4276 = vmatprep.mubr.f32.mxu0 0.0
        %4277 = vmatmul.mubr.f32.gmra.mrb[0].mxu0 %v4194
        %v4278 = vpop.f32.mrb[0].mxu0
        %v4279 = vadd.f32 0.0, %v4278
        %v4280 = vpop.f32.mrb[0].mxu0
        %4281 = vdwg.mxu0
        %v4282 = vadd.f32 %v2720, %v4279
        %s4283 = scalar_lea.vmem %s6, 1
        %v4284 = vld [vmem:[%s4283] sm:$0x1]
        %v4286 = vlaneseq
        %v4287 = vshrl.u32 %v4286, 7
        %v4288 = vsub.s32 0, %v4287
        %v4289 = vrot.slane %v4284, %v4288
        %v4291 = vadd.f32 %v4282, %v4289
        %s4292 = scalar_lea.vmem %s7, 1
        %v4293 = vld [vmem:[%s4292] sm:$0x1]
        %s4294 = scalar_lea.vmem %s8, 1
        %v4295 = vld [vmem:[%s4294] sm:$0x1]
        %4296 = vadd.xlane.f32.xlu0 %v4291
        %v4297 = vpop.xlane.xlu0 %4296
        %v4298 = vmul.f32 %v4297, %v649
        %v4299 = vsub.f32 %v4291, %v4298
        %v4300 = vmul.f32 %v4299, %v4299
        %4301 = vadd.xlane.f32.xlu0 %v4300
        %v4302 = vpop.xlane.xlu0 %4301
        %v4303 = vmul.f32 %v4302, %v649
        %v4304 = vadd.f32 %v4303, 1e-05
        %v4305 = vrsqrt.pop %v4304
        %v4306 = vmul.f32 %v4299, %v4305
        %v4308 = vlaneseq
        %v4309 = vshrl.u32 %v4308, 7
        %v4310 = vsub.s32 0, %v4309
        %v4311 = vrot.slane %v4293, %v4310
        %v4313 = vmul.f32 %v4306, %v4311
        %v4315 = vlaneseq
        %v4316 = vshrl.u32 %v4315, 7
        %v4317 = vsub.s32 0, %v4316
        %v4318 = vrot.slane %v4295, %v4317
        %v4320 = vadd.f32 %v4313, %v4318
        %s4321 = scalar_lea.vmem [#allocation11], 512
        %v4322 = vld [vmem:[%s4321] sm:$0xff]
        %v4323 = vld [vmem:[%s4321 + $0x8] sm:$0xff]
        %v4324 = vld [vmem:[%s4321 + $0x10] sm:$0xff]
        %v4325 = vld [vmem:[%s4321 + $0x18] sm:$0xff]
        %v4326 = vld [vmem:[%s4321 + $0x20] sm:$0xff]
        %v4327 = vld [vmem:[%s4321 + $0x28] sm:$0xff]
        %v4328 = vld [vmem:[%s4321 + $0x30] sm:$0xff]
        %v4329 = vld [vmem:[%s4321 + $0x38] sm:$0xff]
        %v4330 = vld [vmem:[%s4321 + $0x40] sm:$0xff]
        %v4331 = vld [vmem:[%s4321 + $0x48] sm:$0xff]
        %v4332 = vld [vmem:[%s4321 + $0x50] sm:$0xff]
        %v4333 = vld [vmem:[%s4321 + $0x58] sm:$0xff]
        %v4334 = vld [vmem:[%s4321 + $0x60] sm:$0xff]
        %v4335 = vld [vmem:[%s4321 + $0x68] sm:$0xff]
        %v4336 = vld [vmem:[%s4321 + $0x70] sm:$0xff]
        %v4337 = vld [vmem:[%s4321 + $0x78] sm:$0xff]
        %v4338 = vld [vmem:[%s4321 + $0x80] sm:$0xff]
        %v4339 = vld [vmem:[%s4321 + $0x88] sm:$0xff]
        %v4340 = vld [vmem:[%s4321 + $0x90] sm:$0xff]
        %v4341 = vld [vmem:[%s4321 + $0x98] sm:$0xff]
        %v4342 = vld [vmem:[%s4321 + $0xa0] sm:$0xff]
        %v4343 = vld [vmem:[%s4321 + $0xa8] sm:$0xff]
        %v4344 = vld [vmem:[%s4321 + $0xb0] sm:$0xff]
        %v4345 = vld [vmem:[%s4321 + $0xb8] sm:$0xff]
        %v4346 = vld [vmem:[%s4321 + $0xc0] sm:$0xff]
        %v4347 = vld [vmem:[%s4321 + $0xc8] sm:$0xff]
        %v4348 = vld [vmem:[%s4321 + $0xd0] sm:$0xff]
        %v4349 = vld [vmem:[%s4321 + $0xd8] sm:$0xff]
        %v4350 = vld [vmem:[%s4321 + $0xe0] sm:$0xff]
        %v4351 = vld [vmem:[%s4321 + $0xe8] sm:$0xff]
        %v4352 = vld [vmem:[%s4321 + $0xf0] sm:$0xff]
        %v4353 = vld [vmem:[%s4321 + $0xf8] sm:$0xff]
        %v4354 = vld [vmem:[%s4321 + $0x100] sm:$0xff]
        %v4355 = vld [vmem:[%s4321 + $0x108] sm:$0xff]
        %v4356 = vld [vmem:[%s4321 + $0x110] sm:$0xff]
        %v4357 = vld [vmem:[%s4321 + $0x118] sm:$0xff]
        %v4358 = vld [vmem:[%s4321 + $0x120] sm:$0xff]
        %v4359 = vld [vmem:[%s4321 + $0x128] sm:$0xff]
        %v4360 = vld [vmem:[%s4321 + $0x130] sm:$0xff]
        %v4361 = vld [vmem:[%s4321 + $0x138] sm:$0xff]
        %v4362 = vld [vmem:[%s4321 + $0x140] sm:$0xff]
        %v4363 = vld [vmem:[%s4321 + $0x148] sm:$0xff]
        %v4364 = vld [vmem:[%s4321 + $0x150] sm:$0xff]
        %v4365 = vld [vmem:[%s4321 + $0x158] sm:$0xff]
        %v4366 = vld [vmem:[%s4321 + $0x160] sm:$0xff]
        %v4367 = vld [vmem:[%s4321 + $0x168] sm:$0xff]
        %v4368 = vld [vmem:[%s4321 + $0x170] sm:$0xff]
        %v4369 = vld [vmem:[%s4321 + $0x178] sm:$0xff]
        %v4370 = vld [vmem:[%s4321 + $0x180] sm:$0xff]
        %v4371 = vld [vmem:[%s4321 + $0x188] sm:$0xff]
        %v4372 = vld [vmem:[%s4321 + $0x190] sm:$0xff]
        %v4373 = vld [vmem:[%s4321 + $0x198] sm:$0xff]
        %v4374 = vld [vmem:[%s4321 + $0x1a0] sm:$0xff]
        %v4375 = vld [vmem:[%s4321 + $0x1a8] sm:$0xff]
        %v4376 = vld [vmem:[%s4321 + $0x1b0] sm:$0xff]
        %v4377 = vld [vmem:[%s4321 + $0x1b8] sm:$0xff]
        %v4378 = vld [vmem:[%s4321 + $0x1c0] sm:$0xff]
        %v4379 = vld [vmem:[%s4321 + $0x1c8] sm:$0xff]
        %v4380 = vld [vmem:[%s4321 + $0x1d0] sm:$0xff]
        %v4381 = vld [vmem:[%s4321 + $0x1d8] sm:$0xff]
        %v4382 = vld [vmem:[%s4321 + $0x1e0] sm:$0xff]
        %v4383 = vld [vmem:[%s4321 + $0x1e8] sm:$0xff]
        %v4384 = vld [vmem:[%s4321 + $0x1f0] sm:$0xff]
        %v4385 = vld [vmem:[%s4321 + $0x1f8] sm:$0xff]
        %s4386 = scalar_lea.vmem %s10, 4
        %v4387 = vld [vmem:[%s4386] sm:$0xf]
        %v4389 = vlaneseq
        %v4390 = vshrl.u32 %v4389, 7
        %v4391 = vsub.s32 0, %v4390
        %v4392 = vrot.slane %v4387, %v4391
        %v4393 = vlaneseq
        %v4394 = vshrl.u32 %v4393, 7
        %v4395 = vsub.s32 1, %v4394
        %v4396 = vrot.slane %v4387, %v4395
        %v4397 = vlaneseq
        %v4398 = vshrl.u32 %v4397, 7
        %v4399 = vsub.s32 2, %v4398
        %v4400 = vrot.slane %v4387, %v4399
        %v4401 = vlaneseq
        %v4402 = vshrl.u32 %v4401, 7
        %v4403 = vsub.s32 3, %v4402
        %v4404 = vrot.slane %v4387, %v4403
        %4409 = vmatprep.subr.mxu0 %v4323
        %4410 = vmatpush1.msra.mxu0 %v4322
        %4411 = vmatprep.subr.mxu0 %v4327
        %4412 = vmatpush1.msra.mxu0 %v4326
        %4413 = vmatprep.subr.mxu0 %v4331
        %4414 = vmatpush1.msra.mxu0 %v4330
        %4415 = vmatprep.subr.mxu0 %v4335
        %4416 = vmatpush1.msra.mxu0 %v4334
        %4417 = vmatprep.subr.mxu0 %v4339
        %4418 = vmatpush1.msra.mxu0 %v4338
        %4419 = vmatprep.subr.mxu0 %v4343
        %4420 = vmatpush1.msra.mxu0 %v4342
        %4421 = vmatprep.subr.mxu0 %v4347
        %4422 = vmatpush1.msra.mxu0 %v4346
        %4423 = vmatprep.subr.mxu0 %v4351
        %4424 = vmatpush1.msra.mxu0 %v4350
        %4425 = vmatprep.subr.mxu0 %v4355
        %4426 = vmatpush1.msra.mxu0 %v4354
        %4427 = vmatprep.subr.mxu0 %v4359
        %4428 = vmatpush1.msra.mxu0 %v4358
        %4429 = vmatprep.subr.mxu0 %v4363
        %4430 = vmatpush1.msra.mxu0 %v4362
        %4431 = vmatprep.subr.mxu0 %v4367
        %4432 = vmatpush1.msra.mxu0 %v4366
        %4433 = vmatprep.subr.mxu0 %v4371
        %4434 = vmatpush1.msra.mxu0 %v4370
        %4435 = vmatprep.subr.mxu0 %v4375
        %4436 = vmatpush1.msra.mxu0 %v4374
        %4437 = vmatprep.subr.mxu0 %v4379
        %4438 = vmatpush1.msra.mxu0 %v4378
        %4439 = vmatprep.subr.mxu0 %v4383
        %4440 = vmatpush1.msra.mxu0 %v4382
        %4441 = vmatprep.subr.mxu0 0.0
        %4442 = vmatpush1.msra.mxu0 0.0
        %4443 = vmatprep.subr.mxu0 0.0
        %4444 = vmatpush1.msra.mxu0 0.0
        %4445 = vmatprep.subr.mxu0 0.0
        %4446 = vmatpush1.msra.mxu0 0.0
        %4447 = vmatprep.subr.mxu0 0.0
        %4448 = vmatpush1.msra.mxu0 0.0
        %4449 = vmatprep.subr.mxu0 0.0
        %4450 = vmatpush1.msra.mxu0 0.0
        %4451 = vmatprep.subr.mxu0 0.0
        %4452 = vmatpush1.msra.mxu0 0.0
        %4453 = vmatprep.subr.mxu0 0.0
        %4454 = vmatpush1.msra.mxu0 0.0
        %4455 = vmatprep.subr.mxu0 0.0
        %4456 = vmatpush1.msra.mxu0 0.0
        %4457 = vmatprep.subr.mxu0 0.0
        %4458 = vmatpush1.msra.mxu0 0.0
        %4459 = vmatprep.subr.mxu0 0.0
        %4460 = vmatpush1.msra.mxu0 0.0
        %4461 = vmatprep.subr.mxu0 0.0
        %4462 = vmatpush1.msra.mxu0 0.0
        %4463 = vmatprep.subr.mxu0 0.0
        %4464 = vmatpush1.msra.mxu0 0.0
        %4465 = vmatprep.subr.mxu0 0.0
        %4466 = vmatpush1.msra.mxu0 0.0
        %4467 = vmatprep.subr.mxu0 0.0
        %4468 = vmatpush1.msra.mxu0 0.0
        %4469 = vmatprep.subr.mxu0 0.0
        %4470 = vmatpush1.msra.mxu0 0.0
        %4471 = vmatprep.subr.mxu0 0.0
        %4472 = vmatpush1.msra.mxu0 0.0
        %4473 = vmatprep.mubr.f32.mxu0 0.0
        %4474 = vmatmul.mubr.f32.gmra.mrb[0].mxu0 %v4320
        %v4475 = vpop.f32.mrb[0].mxu0
        %v4476 = vadd.f32 %v4392, %v4475
        %v4477 = vpop.f32.mrb[0].mxu0
        %v4478 = vadd.f32 %v4396, %v4477
        %4479 = vdwg.mxu0
        %4480 = vmatprep.subr.mxu0 %v4325
        %4481 = vmatpush1.msra.mxu0 %v4324
        %4482 = vmatprep.subr.mxu0 %v4329
        %4483 = vmatpush1.msra.mxu0 %v4328
        %4484 = vmatprep.subr.mxu0 %v4333
        %4485 = vmatpush1.msra.mxu0 %v4332
        %4486 = vmatprep.subr.mxu0 %v4337
        %4487 = vmatpush1.msra.mxu0 %v4336
        %4488 = vmatprep.subr.mxu0 %v4341
        %4489 = vmatpush1.msra.mxu0 %v4340
        %4490 = vmatprep.subr.mxu0 %v4345
        %4491 = vmatpush1.msra.mxu0 %v4344
        %4492 = vmatprep.subr.mxu0 %v4349
        %4493 = vmatpush1.msra.mxu0 %v4348
        %4494 = vmatprep.subr.mxu0 %v4353
        %4495 = vmatpush1.msra.mxu0 %v4352
        %4496 = vmatprep.subr.mxu0 %v4357
        %4497 = vmatpush1.msra.mxu0 %v4356
        %4498 = vmatprep.subr.mxu0 %v4361
        %4499 = vmatpush1.msra.mxu0 %v4360
        %4500 = vmatprep.subr.mxu0 %v4365
        %4501 = vmatpush1.msra.mxu0 %v4364
        %4502 = vmatprep.subr.mxu0 %v4369
        %4503 = vmatpush1.msra.mxu0 %v4368
        %4504 = vmatprep.subr.mxu0 %v4373
        %4505 = vmatpush1.msra.mxu0 %v4372
        %4506 = vmatprep.subr.mxu0 %v4377
        %4507 = vmatpush1.msra.mxu0 %v4376
        %4508 = vmatprep.subr.mxu0 %v4381
        %4509 = vmatpush1.msra.mxu0 %v4380
        %4510 = vmatprep.subr.mxu0 %v4385
        %4511 = vmatpush1.msra.mxu0 %v4384
        %4512 = vmatprep.subr.mxu0 0.0
        %4513 = vmatpush1.msra.mxu0 0.0
        %4514 = vmatprep.subr.mxu0 0.0
        %4515 = vmatpush1.msra.mxu0 0.0
        %4516 = vmatprep.subr.mxu0 0.0
        %4517 = vmatpush1.msra.mxu0 0.0
        %4518 = vmatprep.subr.mxu0 0.0
        %4519 = vmatpush1.msra.mxu0 0.0
        %4520 = vmatprep.subr.mxu0 0.0
        %4521 = vmatpush1.msra.mxu0 0.0
        %4522 = vmatprep.subr.mxu0 0.0
        %4523 = vmatpush1.msra.mxu0 0.0
        %4524 = vmatprep.subr.mxu0 0.0
        %4525 = vmatpush1.msra.mxu0 0.0
        %4526 = vmatprep.subr.mxu0 0.0
        %4527 = vmatpush1.msra.mxu0 0.0
        %4528 = vmatprep.subr.mxu0 0.0
        %4529 = vmatpush1.msra.mxu0 0.0
        %4530 = vmatprep.subr.mxu0 0.0
        %4531 = vmatpush1.msra.mxu0 0.0
        %4532 = vmatprep.subr.mxu0 0.0
        %4533 = vmatpush1.msra.mxu0 0.0
        %4534 = vmatprep.subr.mxu0 0.0
        %4535 = vmatpush1.msra.mxu0 0.0
        %4536 = vmatprep.subr.mxu0 0.0
        %4537 = vmatpush1.msra.mxu0 0.0
        %4538 = vmatprep.subr.mxu0 0.0
        %4539 = vmatpush1.msra.mxu0 0.0
        %4540 = vmatprep.subr.mxu0 0.0
        %4541 = vmatpush1.msra.mxu0 0.0
        %4542 = vmatprep.subr.mxu0 0.0
        %4543 = vmatpush1.msra.mxu0 0.0
        %4544 = vmatprep.mubr.f32.mxu0 0.0
        %4545 = vmatmul.mubr.f32.gmra.mrb[0].mxu0 %v4320
        %v4546 = vpop.f32.mrb[0].mxu0
        %v4547 = vadd.f32 %v4400, %v4546
        %v4548 = vpop.f32.mrb[0].mxu0
        %v4549 = vadd.f32 %v4404, %v4548
        %4550 = vdwg.mxu0
        %v4551 = vmul.f32 %v4476, 0.5
        %v4552 = vmul.f32 %v4478, 0.5
        %v4553 = vmul.f32 %v4547, 0.5
        %v4554 = vmul.f32 %v4549, 0.5
        %v4555 = vmul.f32 %v4476, 0.044715
        %v4556 = vmul.f32 %v4478, 0.044715
        %v4557 = vmul.f32 %v4547, 0.044715
        %v4558 = vmul.f32 %v4549, 0.044715
        %v4559 = vmul.f32 %v4555, %v4476
        %v4560 = vmul.f32 %v4556, %v4478
        %v4561 = vmul.f32 %v4557, %v4547
        %v4562 = vmul.f32 %v4558, %v4549
        %v4563 = vmul.f32 %v4559, %v4476
        %v4564 = vmul.f32 %v4560, %v4478
        %v4565 = vmul.f32 %v4561, %v4547
        %v4566 = vmul.f32 %v4562, %v4549
        %v4567 = vadd.f32 %v4476, %v4563
        %v4568 = vadd.f32 %v4478, %v4564
        %v4569 = vadd.f32 %v4547, %v4565
        %v4570 = vadd.f32 %v4549, %v4566
        %v4571 = vmul.f32 %v4567, 0.7978846
        %v4572 = vmul.f32 %v4568, 0.7978846
        %v4573 = vmul.f32 %v4569, 0.7978846
        %v4574 = vmul.f32 %v4570, 0.7978846
        %v4575 = vtanh.pop %v4571
        %v4576 = vtanh.pop %v4572
        %v4577 = vtanh.pop %v4573
        %v4578 = vtanh.pop %v4574
        %v4579 = vadd.f32 %v4575, 1.0
        %v4580 = vadd.f32 %v4576, 1.0
        %v4581 = vadd.f32 %v4577, 1.0
        %v4582 = vadd.f32 %v4578, 1.0
        %v4583 = vmul.f32 %v4551, %v4579
        %v4584 = vmul.f32 %v4552, %v4580
        %v4585 = vmul.f32 %v4553, %v4581
        %v4586 = vmul.f32 %v4554, %v4582
        %s4587 = scalar_lea.vmem [#allocation13], 512
        %v4588 = vld [vmem:[%s4587] sm:$0xff]
        %v4589 = vld [vmem:[%s4587 + $0x8] sm:$0xff]
        %v4590 = vld [vmem:[%s4587 + $0x10] sm:$0xff]
        %v4591 = vld [vmem:[%s4587 + $0x18] sm:$0xff]
        %v4592 = vld [vmem:[%s4587 + $0x20] sm:$0xff]
        %v4593 = vld [vmem:[%s4587 + $0x28] sm:$0xff]
        %v4594 = vld [vmem:[%s4587 + $0x30] sm:$0xff]
        %v4595 = vld [vmem:[%s4587 + $0x38] sm:$0xff]
        %v4596 = vld [vmem:[%s4587 + $0x40] sm:$0xff]
        %v4597 = vld [vmem:[%s4587 + $0x48] sm:$0xff]
        %v4598 = vld [vmem:[%s4587 + $0x50] sm:$0xff]
        %v4599 = vld [vmem:[%s4587 + $0x58] sm:$0xff]
        %v4600 = vld [vmem:[%s4587 + $0x60] sm:$0xff]
        %v4601 = vld [vmem:[%s4587 + $0x68] sm:$0xff]
        %v4602 = vld [vmem:[%s4587 + $0x70] sm:$0xff]
        %v4603 = vld [vmem:[%s4587 + $0x78] sm:$0xff]
        %v4604 = vld [vmem:[%s4587 + $0x80] sm:$0xff]
        %v4605 = vld [vmem:[%s4587 + $0x88] sm:$0xff]
        %v4606 = vld [vmem:[%s4587 + $0x90] sm:$0xff]
        %v4607 = vld [vmem:[%s4587 + $0x98] sm:$0xff]
        %v4608 = vld [vmem:[%s4587 + $0xa0] sm:$0xff]
        %v4609 = vld [vmem:[%s4587 + $0xa8] sm:$0xff]
        %v4610 = vld [vmem:[%s4587 + $0xb0] sm:$0xff]
        %v4611 = vld [vmem:[%s4587 + $0xb8] sm:$0xff]
        %v4612 = vld [vmem:[%s4587 + $0xc0] sm:$0xff]
        %v4613 = vld [vmem:[%s4587 + $0xc8] sm:$0xff]
        %v4614 = vld [vmem:[%s4587 + $0xd0] sm:$0xff]
        %v4615 = vld [vmem:[%s4587 + $0xd8] sm:$0xff]
        %v4616 = vld [vmem:[%s4587 + $0xe0] sm:$0xff]
        %v4617 = vld [vmem:[%s4587 + $0xe8] sm:$0xff]
        %v4618 = vld [vmem:[%s4587 + $0xf0] sm:$0xff]
        %v4619 = vld [vmem:[%s4587 + $0xf8] sm:$0xff]
        %v4620 = vld [vmem:[%s4587 + $0x100] sm:$0xff]
        %v4621 = vld [vmem:[%s4587 + $0x108] sm:$0xff]
        %v4622 = vld [vmem:[%s4587 + $0x110] sm:$0xff]
        %v4623 = vld [vmem:[%s4587 + $0x118] sm:$0xff]
        %v4624 = vld [vmem:[%s4587 + $0x120] sm:$0xff]
        %v4625 = vld [vmem:[%s4587 + $0x128] sm:$0xff]
        %v4626 = vld [vmem:[%s4587 + $0x130] sm:$0xff]
        %v4627 = vld [vmem:[%s4587 + $0x138] sm:$0xff]
        %v4628 = vld [vmem:[%s4587 + $0x140] sm:$0xff]
        %v4629 = vld [vmem:[%s4587 + $0x148] sm:$0xff]
        %v4630 = vld [vmem:[%s4587 + $0x150] sm:$0xff]
        %v4631 = vld [vmem:[%s4587 + $0x158] sm:$0xff]
        %v4632 = vld [vmem:[%s4587 + $0x160] sm:$0xff]
        %v4633 = vld [vmem:[%s4587 + $0x168] sm:$0xff]
        %v4634 = vld [vmem:[%s4587 + $0x170] sm:$0xff]
        %v4635 = vld [vmem:[%s4587 + $0x178] sm:$0xff]
        %v4636 = vld [vmem:[%s4587 + $0x180] sm:$0xff]
        %v4637 = vld [vmem:[%s4587 + $0x188] sm:$0xff]
        %v4638 = vld [vmem:[%s4587 + $0x190] sm:$0xff]
        %v4639 = vld [vmem:[%s4587 + $0x198] sm:$0xff]
        %v4640 = vld [vmem:[%s4587 + $0x1a0] sm:$0xff]
        %v4641 = vld [vmem:[%s4587 + $0x1a8] sm:$0xff]
        %v4642 = vld [vmem:[%s4587 + $0x1b0] sm:$0xff]
        %v4643 = vld [vmem:[%s4587 + $0x1b8] sm:$0xff]
        %v4644 = vld [vmem:[%s4587 + $0x1c0] sm:$0xff]
        %v4645 = vld [vmem:[%s4587 + $0x1c8] sm:$0xff]
        %v4646 = vld [vmem:[%s4587 + $0x1d0] sm:$0xff]
        %v4647 = vld [vmem:[%s4587 + $0x1d8] sm:$0xff]
        %v4648 = vld [vmem:[%s4587 + $0x1e0] sm:$0xff]
        %v4649 = vld [vmem:[%s4587 + $0x1e8] sm:$0xff]
        %v4650 = vld [vmem:[%s4587 + $0x1f0] sm:$0xff]
        %v4651 = vld [vmem:[%s4587 + $0x1f8] sm:$0xff]
        %4652 = vmatprep.subr.mxu0 0.0
        %4653 = vmatpush1.msra.mxu0 %v4588
        %4654 = vmatprep.subr.mxu0 0.0
        %4655 = vmatpush1.msra.mxu0 %v4589
        %4656 = vmatprep.subr.mxu0 0.0
        %4657 = vmatpush1.msra.mxu0 %v4590
        %4658 = vmatprep.subr.mxu0 0.0
        %4659 = vmatpush1.msra.mxu0 %v4591
        %4660 = vmatprep.subr.mxu0 0.0
        %4661 = vmatpush1.msra.mxu0 %v4592
        %4662 = vmatprep.subr.mxu0 0.0
        %4663 = vmatpush1.msra.mxu0 %v4593
        %4664 = vmatprep.subr.mxu0 0.0
        %4665 = vmatpush1.msra.mxu0 %v4594
        %4666 = vmatprep.subr.mxu0 0.0
        %4667 = vmatpush1.msra.mxu0 %v4595
        %4668 = vmatprep.subr.mxu0 0.0
        %4669 = vmatpush1.msra.mxu0 %v4596
        %4670 = vmatprep.subr.mxu0 0.0
        %4671 = vmatpush1.msra.mxu0 %v4597
        %4672 = vmatprep.subr.mxu0 0.0
        %4673 = vmatpush1.msra.mxu0 %v4598
        %4674 = vmatprep.subr.mxu0 0.0
        %4675 = vmatpush1.msra.mxu0 %v4599
        %4676 = vmatprep.subr.mxu0 0.0
        %4677 = vmatpush1.msra.mxu0 %v4600
        %4678 = vmatprep.subr.mxu0 0.0
        %4679 = vmatpush1.msra.mxu0 %v4601
        %4680 = vmatprep.subr.mxu0 0.0
        %4681 = vmatpush1.msra.mxu0 %v4602
        %4682 = vmatprep.subr.mxu0 0.0
        %4683 = vmatpush1.msra.mxu0 %v4603
        %4684 = vmatprep.subr.mxu0 0.0
        %4685 = vmatpush1.msra.mxu0 %v4604
        %4686 = vmatprep.subr.mxu0 0.0
        %4687 = vmatpush1.msra.mxu0 %v4605
        %4688 = vmatprep.subr.mxu0 0.0
        %4689 = vmatpush1.msra.mxu0 %v4606
        %4690 = vmatprep.subr.mxu0 0.0
        %4691 = vmatpush1.msra.mxu0 %v4607
        %4692 = vmatprep.subr.mxu0 0.0
        %4693 = vmatpush1.msra.mxu0 %v4608
        %4694 = vmatprep.subr.mxu0 0.0
        %4695 = vmatpush1.msra.mxu0 %v4609
        %4696 = vmatprep.subr.mxu0 0.0
        %4697 = vmatpush1.msra.mxu0 %v4610
        %4698 = vmatprep.subr.mxu0 0.0
        %4699 = vmatpush1.msra.mxu0 %v4611
        %4700 = vmatprep.subr.mxu0 0.0
        %4701 = vmatpush1.msra.mxu0 %v4612
        %4702 = vmatprep.subr.mxu0 0.0
        %4703 = vmatpush1.msra.mxu0 %v4613
        %4704 = vmatprep.subr.mxu0 0.0
        %4705 = vmatpush1.msra.mxu0 %v4614
        %4706 = vmatprep.subr.mxu0 0.0
        %4707 = vmatpush1.msra.mxu0 %v4615
        %4708 = vmatprep.subr.mxu0 0.0
        %4709 = vmatpush1.msra.mxu0 %v4616
        %4710 = vmatprep.subr.mxu0 0.0
        %4711 = vmatpush1.msra.mxu0 %v4617
        %4712 = vmatprep.subr.mxu0 0.0
        %4713 = vmatpush1.msra.mxu0 %v4618
        %4714 = vmatprep.subr.mxu0 0.0
        %4715 = vmatpush1.msra.mxu0 %v4619
        %4716 = vmatprep.mubr.f32.mxu0 %v4584
        %4717 = vmatmul.mubr.f32.gmra.mrb[0].mxu0 %v4583
        %v4718 = vpop.f32.mrb[0].mxu0
        %v4719 = vadd.f32 0.0, %v4718
        %v4720 = vpop.f32.mrb[0].mxu0
        %4721 = vdwg.mxu0
        %4722 = vmatprep.subr.mxu0 0.0
        %4723 = vmatpush1.msra.mxu0 %v4620
        %4724 = vmatprep.subr.mxu0 0.0
        %4725 = vmatpush1.msra.mxu0 %v4621
        %4726 = vmatprep.subr.mxu0 0.0
        %4727 = vmatpush1.msra.mxu0 %v4622
        %4728 = vmatprep.subr.mxu0 0.0
        %4729 = vmatpush1.msra.mxu0 %v4623
        %4730 = vmatprep.subr.mxu0 0.0
        %4731 = vmatpush1.msra.mxu0 %v4624
        %4732 = vmatprep.subr.mxu0 0.0
        %4733 = vmatpush1.msra.mxu0 %v4625
        %4734 = vmatprep.subr.mxu0 0.0
        %4735 = vmatpush1.msra.mxu0 %v4626
        %4736 = vmatprep.subr.mxu0 0.0
        %4737 = vmatpush1.msra.mxu0 %v4627
        %4738 = vmatprep.subr.mxu0 0.0
        %4739 = vmatpush1.msra.mxu0 %v4628
        %4740 = vmatprep.subr.mxu0 0.0
        %4741 = vmatpush1.msra.mxu0 %v4629
        %4742 = vmatprep.subr.mxu0 0.0
        %4743 = vmatpush1.msra.mxu0 %v4630
        %4744 = vmatprep.subr.mxu0 0.0
        %4745 = vmatpush1.msra.mxu0 %v4631
        %4746 = vmatprep.subr.mxu0 0.0
        %4747 = vmatpush1.msra.mxu0 %v4632
        %4748 = vmatprep.subr.mxu0 0.0
        %4749 = vmatpush1.msra.mxu0 %v4633
        %4750 = vmatprep.subr.mxu0 0.0
        %4751 = vmatpush1.msra.mxu0 %v4634
        %4752 = vmatprep.subr.mxu0 0.0
        %4753 = vmatpush1.msra.mxu0 %v4635
        %4754 = vmatprep.subr.mxu0 0.0
        %4755 = vmatpush1.msra.mxu0 %v4636
        %4756 = vmatprep.subr.mxu0 0.0
        %4757 = vmatpush1.msra.mxu0 %v4637
        %4758 = vmatprep.subr.mxu0 0.0
        %4759 = vmatpush1.msra.mxu0 %v4638
        %4760 = vmatprep.subr.mxu0 0.0
        %4761 = vmatpush1.msra.mxu0 %v4639
        %4762 = vmatprep.subr.mxu0 0.0
        %4763 = vmatpush1.msra.mxu0 %v4640
        %4764 = vmatprep.subr.mxu0 0.0
        %4765 = vmatpush1.msra.mxu0 %v4641
        %4766 = vmatprep.subr.mxu0 0.0
        %4767 = vmatpush1.msra.mxu0 %v4642
        %4768 = vmatprep.subr.mxu0 0.0
        %4769 = vmatpush1.msra.mxu0 %v4643
        %4770 = vmatprep.subr.mxu0 0.0
        %4771 = vmatpush1.msra.mxu0 %v4644
        %4772 = vmatprep.subr.mxu0 0.0
        %4773 = vmatpush1.msra.mxu0 %v4645
        %4774 = vmatprep.subr.mxu0 0.0
        %4775 = vmatpush1.msra.mxu0 %v4646
        %4776 = vmatprep.subr.mxu0 0.0
        %4777 = vmatpush1.msra.mxu0 %v4647
        %4778 = vmatprep.subr.mxu0 0.0
        %4779 = vmatpush1.msra.mxu0 %v4648
        %4780 = vmatprep.subr.mxu0 0.0
        %4781 = vmatpush1.msra.mxu0 %v4649
        %4782 = vmatprep.subr.mxu0 0.0
        %4783 = vmatpush1.msra.mxu0 %v4650
        %4784 = vmatprep.subr.mxu0 0.0
        %4785 = vmatpush1.msra.mxu0 %v4651
        %4786 = vmatprep.mubr.f32.mxu0 %v4586
        %4787 = vmatmul.mubr.f32.gmra.mrb[0].mxu0 %v4585
        %v4788 = vpop.f32.mrb[0].mxu0
        %v4789 = vadd.f32 %v4719, %v4788
        %v4790 = vpop.f32.mrb[0].mxu0
        %4791 = vdwg.mxu0
        %v4792 = vadd.f32 %v4291, %v4789
        %s4793 = scalar_lea.vmem %s12, 1
        %v4794 = vld [vmem:[%s4793] sm:$0x1]
        %v4796 = vlaneseq
        %v4797 = vshrl.u32 %v4796, 7
        %v4798 = vsub.s32 0, %v4797
        %v4799 = vrot.slane %v4794, %v4798
        %v4801 = vadd.f32 %v4792, %v4799
        %v4802 = vld [vmem:[%s13] sm:$0x1]
        %v4803 = vld [vmem:[%s14] sm:$0x1]
        %4804 = vadd.xlane.f32.xlu0 %v4801
        %v4805 = vpop.xlane.xlu0 %4804
        %v4806 = vmul.f32 %v4805, %v649
        %v4807 = vsub.f32 %v4801, %v4806
        %v4808 = vmul.f32 %v4807, %v4807
        %4809 = vadd.xlane.f32.xlu0 %v4808
        %v4810 = vpop.xlane.xlu0 %4809
        %v4811 = vmul.f32 %v4810, %v649
        %v4812 = vadd.f32 %v4811, 1e-05
        %v4813 = vrsqrt.pop %v4812
        %v4814 = vmul.f32 %v4807, %v4813
        %v4816 = vlaneseq
        %v4817 = vshrl.u32 %v4816, 7
        %v4818 = vsub.s32 0, %v4817
        %v4819 = vrot.slane %v4802, %v4818
        %v4821 = vmul.f32 %v4814, %v4819
        %v4823 = vlaneseq
        %v4824 = vshrl.u32 %v4823, 7
        %v4825 = vsub.s32 0, %v4824
        %v4826 = vrot.slane %v4803, %v4825
        %v4828 = vadd.f32 %v4821, %v4826
        %v4829 = vld [vmem:[#allocation14] sm:$0xff]
        %v4830 = vld [vmem:[#allocation14 + $0x8] sm:$0xff]
        %v4831 = vld [vmem:[#allocation14 + $0x10] sm:$0xff]
        %v4832 = vld [vmem:[#allocation14 + $0x18] sm:$0xff]
        %v4833 = vld [vmem:[#allocation14 + $0x20] sm:$0xff]
        %v4834 = vld [vmem:[#allocation14 + $0x28] sm:$0xff]
        %v4835 = vld [vmem:[#allocation14 + $0x30] sm:$0xff]
        %v4836 = vld [vmem:[#allocation14 + $0x38] sm:$0xff]
        %v4837 = vld [vmem:[#allocation14 + $0x40] sm:$0xff]
        %v4838 = vld [vmem:[#allocation14 + $0x48] sm:$0xff]
        %v4839 = vld [vmem:[#allocation14 + $0x50] sm:$0xff]
        %v4840 = vld [vmem:[#allocation14 + $0x58] sm:$0xff]
        %v4841 = vld [vmem:[#allocation14 + $0x60] sm:$0xff]
        %v4842 = vld [vmem:[#allocation14 + $0x68] sm:$0xff]
        %v4843 = vld [vmem:[#allocation14 + $0x70] sm:$0xff]
        %v4844 = vld [vmem:[#allocation14 + $0x78] sm:$0xff]
        %4845 = vmatprep.subr.mxu0 0.0
        %4846 = vmatpush1.msra.mxu0 %v4829
        %4847 = vmatprep.subr.mxu0 0.0
        %4848 = vmatpush1.msra.mxu0 %v4830
        %4849 = vmatprep.subr.mxu0 0.0
        %4850 = vmatpush1.msra.mxu0 %v4831
        %4851 = vmatprep.subr.mxu0 0.0
        %4852 = vmatpush1.msra.mxu0 %v4832
        %4853 = vmatprep.subr.mxu0 0.0
        %4854 = vmatpush1.msra.mxu0 %v4833
        %4855 = vmatprep.subr.mxu0 0.0
        %4856 = vmatpush1.msra.mxu0 %v4834
        %4857 = vmatprep.subr.mxu0 0.0
        %4858 = vmatpush1.msra.mxu0 %v4835
        %4859 = vmatprep.subr.mxu0 0.0
        %4860 = vmatpush1.msra.mxu0 %v4836
        %4861 = vmatprep.subr.mxu0 0.0
        %4862 = vmatpush1.msra.mxu0 %v4837
        %4863 = vmatprep.subr.mxu0 0.0
        %4864 = vmatpush1.msra.mxu0 %v4838
        %4865 = vmatprep.subr.mxu0 0.0
        %4866 = vmatpush1.msra.mxu0 %v4839
        %4867 = vmatprep.subr.mxu0 0.0
        %4868 = vmatpush1.msra.mxu0 %v4840
        %4869 = vmatprep.subr.mxu0 0.0
        %4870 = vmatpush1.msra.mxu0 %v4841
        %4871 = vmatprep.subr.mxu0 0.0
        %4872 = vmatpush1.msra.mxu0 %v4842
        %4873 = vmatprep.subr.mxu0 0.0
        %4874 = vmatpush1.msra.mxu0 %v4843
        %4875 = vmatprep.subr.mxu0 0.0
        %4876 = vmatpush1.msra.mxu0 %v4844
        %4877 = vmatprep.subr.mxu0 0.0
        %4878 = vmatpush1.msra.mxu0 0.0
        %4879 = vmatprep.subr.mxu0 0.0
        %4880 = vmatpush1.msra.mxu0 0.0
        %4881 = vmatprep.subr.mxu0 0.0
        %4882 = vmatpush1.msra.mxu0 0.0
        %4883 = vmatprep.subr.mxu0 0.0
        %4884 = vmatpush1.msra.mxu0 0.0
        %4885 = vmatprep.subr.mxu0 0.0
        %4886 = vmatpush1.msra.mxu0 0.0
        %4887 = vmatprep.subr.mxu0 0.0
        %4888 = vmatpush1.msra.mxu0 0.0
        %4889 = vmatprep.subr.mxu0 0.0
        %4890 = vmatpush1.msra.mxu0 0.0
        %4891 = vmatprep.subr.mxu0 0.0
        %4892 = vmatpush1.msra.mxu0 0.0
        %4893 = vmatprep.subr.mxu0 0.0
        %4894 = vmatpush1.msra.mxu0 0.0
        %4895 = vmatprep.subr.mxu0 0.0
        %4896 = vmatpush1.msra.mxu0 0.0
        %4897 = vmatprep.subr.mxu0 0.0
        %4898 = vmatpush1.msra.mxu0 0.0
        %4899 = vmatprep.subr.mxu0 0.0
        %4900 = vmatpush1.msra.mxu0 0.0
        %4901 = vmatprep.subr.mxu0 0.0
        %4902 = vmatpush1.msra.mxu0 0.0
        %4903 = vmatprep.subr.mxu0 0.0
        %4904 = vmatpush1.msra.mxu0 0.0
        %4905 = vmatprep.subr.mxu0 0.0
        %4906 = vmatpush1.msra.mxu0 0.0
        %4907 = vmatprep.subr.mxu0 0.0
        %4908 = vmatpush1.msra.mxu0 0.0
        %4909 = vmatprep.mubr.f32.mxu0 0.0
        %4910 = vmatmul.mubr.f32.gmra.mrb[0].mxu0 %v4828
        %v4911 = vpop.f32.mrb[0].mxu0
        %v4912 = vadd.f32 0.0, %v4911
        %v4913 = vpop.f32.mrb[0].mxu0
        %4914 = vdwg.mxu0
        %4915 = vst [vmem:[%s638] sm:$0xff] %v4912
        %s4916 = sand.u32 %s386, 1
        %s4917 = scalar_lea.sflag [#allocation4], %s4916
        %s4918 = sand.u32 %s386, 1
        %s4919 = smul.addr %s4918, 8
        %s4920 = scalar_lea.vmem [#allocation16], %s4919
        // Predicated region
        $region117: #{tpu_custom_call.1} parent=83 // pred_check
          %p4921 = pneg %p396
        $region118: #{tpu_custom_call.1} parent=83 // pred_check_branch
          %4923 = sbr.rel (%p4921) target = $region120
        $region119: #{tpu_custom_call.1} parent=83 // pred_region
          %s4925 = ssub.s32 128, 128
          %4926 = vsyncadd %s4917, %s4925
          %s4927 = smul.addr %s37, 128
          %s4928 = scalar_lea.hbm %s16, %s4927
          %s4930 = sshll.u32 %s4920, 4
          %s4931 = int_to_ptr.vmem [resolvable:$true] %s4930
          %4933 = dma.vmem_to_hbm [thread:$0]  %s4931, 128, %s4928, %s4917
        $region120: #{tpu_custom_call.1} parent=83 // pred_fallthru
          _
      $region84: #{tpu_custom_call.1} parent=5 // pred_fallthru
        _
      %p4934 = scmp.le.s32.totalorder 2, %s32
      // Predicated region
      $region121: #{tpu_custom_call.1} parent=5 // pred_check
        %p4935 = pneg %p4934
      $region122: #{tpu_custom_call.1} parent=5 // pred_check_branch
        %4937 = sbr.rel (%p4935) target = $region124
      $region123: #{tpu_custom_call.1} parent=5 // pred_region
        %s4938 = ssub.s32 %s32, 2
        // Predicated region
        $region125: #{tpu_custom_call.1} parent=123 // pred_check
          %p4939 = pneg %p402
        $region126: #{tpu_custom_call.1} parent=123 // pred_check_branch
          %4941 = sbr.rel (%p4939) target = $region128
        $region127: #{tpu_custom_call.1} parent=123 // pred_region
          %s4942 = sand.u32 %s387, 1
          %s4943 = scalar_lea.sflag [#allocation4], %s4942
          %s4944 = sand.u32 %s387, 1
          %s4945 = smul.addr %s4944, 8
          %s4946 = scalar_lea.vmem [#allocation16], %s4945
          %4947 = dma.done %s4943, 128
        $region128: #{tpu_custom_call.1} parent=123 // pred_fallthru
          _
      $region124: #{tpu_custom_call.1} parent=5 // pred_fallthru
        _
    $region6: #{tpu_custom_call.1} parent=1 // loop_footer
      %s36 = sadd.s32 1, %s32
    $region7: #{tpu_custom_call.1} parent=1 // loop_footer_branch
      %31 = sbr.rel target = $region3
    $region8: #{tpu_custom_call.1} parent=1 // loop_exit
      _
    %4948 = vsyncpa [#allocation3], 1
    %s4949 = scalar_lea.sflag [#allocation3], 1
    %4950 = vsyncpa %s4949, 1
    %4951 = vsyncpa [#allocation6], 1
    %4952 = vsyncpa [#allocation9], 1
    %4953 = vsyncpa [#allocation12], 1
    %4954 = vsyncpa [#allocation15], 1
    %4955 = vsyncpa [#allocation4], 1
    %s4956 = scalar_lea.sflag [#allocation4], 1
    %4957 = vsyncpa %s4956, 1

</llo_original>
